<compile_context>
chip_gen: v7x
topology: tpu7x:2x2x1
jax: 0.10.0
libtpu: 0.0.40
codegen_flags: <defaults>
</compile_context>

<pallas_src>
import jax
import jax.numpy as jnp
from jax.experimental import pallas as pl
from jax.experimental.pallas import tpu as pltpu

BIGNET_DIM = 128          # small stand-in for the homework's BIGNET_DIM (=1024)
LORA_DIM = 32
N_BLOCKS = 6
LAYERS_PER_BLOCK = 3
N_LAYERS = N_BLOCKS * LAYERS_PER_BLOCK
N_LN = N_BLOCKS - 1       # LayerNorms sit between blocks
LN_EPS = 1e-5


def _round_up(n, m):
    return ((n + m - 1) // m) * m


def _layernorm(h, gamma, beta):
    mean = jnp.mean(h, axis=-1, keepdims=True)
    var = jnp.mean(jnp.square(h - mean), axis=-1, keepdims=True)
    return (h - mean) * jax.lax.rsqrt(var + LN_EPS) * gamma + beta


def lora_bignet_kernel(x_ref, wb_ref, bb_ref, la_ref, lb_ref, g_ref, be_ref, o_ref):
    # x_ref: (TN, C) f32 tile of the batch
    # wb_ref: (18, C, C) bf16 base weights, bb_ref: (18, C) bf16 base biases
    # la_ref: (18, C, r) f32 lora_a (transposed), lb_ref: (18, r, C) f32 lora_b
    # g_ref / be_ref: (5, C) f32 LayerNorm gamma / beta

    # Hoisted once — the fully-unrolled 18-layer loop would otherwise re-emit
    # 18 casts (JAX does not CSE them).
    bb_f32 = bb_ref[...].astype(jnp.float32)        # (18, C)
    la_bf16 = la_ref[...].astype(jnp.bfloat16)      # (18, C, r)
    lb_bf16 = lb_ref[...].astype(jnp.bfloat16)      # (18, r, C)
    gamma = g_ref[...]                              # (5, C) already f32
    beta = be_ref[...]                              # (5, C) already f32

    h = x_ref[...]                                  # (TN, C) f32
    for blk in range(N_BLOCKS):
        res = h
        for j in range(LAYERS_PER_BLOCK):
            idx = blk * LAYERS_PER_BLOCK + j
            xb = h.astype(jnp.bfloat16)
            # --- base path (frozen HalfLinear): bf16 MXU matmul, f32 accumulate,
            #     add bias, round to half precision (layer output dtype), back to f32.
            base = jnp.dot(xb, wb_ref[idx], preferred_element_type=jnp.float32)
            base = (base + bb_f32[idx]).astype(jnp.bfloat16).astype(jnp.float32)
            # --- LoRA path: bf16 operands / f32 accumulation (single MXU pass;
            #     deviates from torch's f32 adapters by <~1e-2 relative).
            la = jnp.dot(xb, la_bf16[idx], preferred_element_type=jnp.float32)
            lora = jnp.dot(la.astype(jnp.bfloat16), lb_bf16[idx],
                           preferred_element_type=jnp.float32)
            out = base + lora
            h = jnp.maximum(out, 0.0) if j < LAYERS_PER_BLOCK - 1 else out
        h = h + res  # residual
        if blk < N_BLOCKS - 1:
            h = _layernorm(h, gamma[blk], beta[blk])
    o_ref[...] = h


def lora_bignet(x, params, *, tile_n=None):
    N, C = x.shape
    wb, bb, la, lb, g, be = params

    if tile_n is None:
        # One large batch tile: multiple of 16 for bf16 sublane packing,
        # capped at 256 so activations stay comfortably in VMEM.
        tile_n = min(_round_up(N, 16), 256)
    assert tile_n % 8 == 0, "tile_n must be a multiple of 8 (prefer 16+)"
    n_pad = _round_up(N, tile_n)
    x_p = jnp.pad(x, ((0, n_pad - N), (0, 0))) if n_pad != N else x

    def full_spec(arr):
        nd = arr.ndim
        return pl.BlockSpec(arr.shape, lambda i, _nd=nd: (0,) * _nd)

    cost = pl.CostEstimate(
        flops=int(2 * n_pad * N_LAYERS * (C * C + 2 * C * LORA_DIM)),
        transcendentals=int(n_pad * N_LN),  # one rsqrt per row per LayerNorm
        bytes_accessed=int(2 * n_pad * C * 4 + wb.size * 2 + bb.size * 2
                           + la.size * 4 + lb.size * 4 + g.size * 4 + be.size * 4),
    )

    out = pl.pallas_call(
        lora_bignet_kernel,
        out_shape=jax.ShapeDtypeStruct((n_pad, C), jnp.float32),
        grid_spec=pltpu.PrefetchScalarGridSpec(
            num_scalar_prefetch=0,
            grid=(n_pad // tile_n,),
            in_specs=[
                pl.BlockSpec((tile_n, C), lambda i: (i, 0)),
                full_spec(wb), full_spec(bb),
                full_spec(la), full_spec(lb),
                full_spec(g), full_spec(be),
            ],
            out_specs=pl.BlockSpec((tile_n, C), lambda i: (i, 0)),
        ),
        compiler_params=pltpu.CompilerParams(
            # batch tiles are independent -> shard across TCs on v7x
            dimension_semantics=("parallel",),
        ),
        cost_estimate=cost,
    )(x_p, wb, bb, la, lb, g, be)
    return out[:N]


def reference(x, params):
    """Pure-JAX reference using the same math as the kernel (bf16 base path,
    bf16-operand / f32-accumulate LoRA path)."""
    wb, bb, la, lb, g, be = params
    h = x
    for blk in range(N_BLOCKS):
        res = h
        for j in range(LAYERS_PER_BLOCK):
            idx = blk * LAYERS_PER_BLOCK + j
            xb = h.astype(jnp.bfloat16)
            base = jnp.dot(xb, wb[idx], preferred_element_type=jnp.float32)
            base = (base + bb[idx].astype(jnp.float32)
                    ).astype(jnp.bfloat16).astype(jnp.float32)
            la_ = jnp.dot(xb, la[idx].astype(jnp.bfloat16),
                          preferred_element_type=jnp.float32)
            lora = jnp.dot(la_.astype(jnp.bfloat16), lb[idx].astype(jnp.bfloat16),
                           preferred_element_type=jnp.float32)
            out = base + lora
            h = jnp.maximum(out, 0.0) if j < LAYERS_PER_BLOCK - 1 else out
        h = h + res
        if blk < N_BLOCKS - 1:
            h = _layernorm(h, g[blk], be[blk])
    return h


def init_params(key, C=BIGNET_DIM, r=LORA_DIM):
    k_w, k_b, k_a = jax.random.split(key, 3)
    # Base (frozen) half-precision linears.
    wb = (jax.random.normal(k_w, (N_LAYERS, C, C), jnp.float32)
          * (1.0 / jnp.sqrt(C))).astype(jnp.bfloat16)
    bb = (jax.random.normal(k_b, (N_LAYERS, C), jnp.float32) * 0.02).astype(jnp.bfloat16)
    # LoRA: a ~ Normal(std=1/lora_dim), b = zeros (per torch init in the module).
    la = jax.random.normal(k_a, (N_LAYERS, C, r), jnp.float32) * (1.0 / r)
    lb = jnp.zeros((N_LAYERS, r, C), jnp.float32)
    # LayerNorm affine params (f32).
    g = jnp.ones((N_LN, C), jnp.float32)
    be = jnp.zeros((N_LN, C), jnp.float32)
    return wb, bb, la, lb, g, be


if __name__ == "__main__":
    key = jax.random.PRNGKey(0)
    k_param, k_x, k_lb = jax.random.split(key, 3)
    wb, bb, la, lb, g, be = init_params(k_param)
    # torch inits lora_b to zeros; use a nonzero lora_b in the self-test so the
    # (x @ A) @ B path actually contributes to the output.
    lb = 0.02 * jax.random.normal(k_lb, lb.shape, jnp.float32)
    params = (wb, bb, la, lb, g, be)

    batch = 16
    x = jax.random.normal(k_x, (batch, BIGNET_DIM), jnp.float32)

    out = jax.block_until_ready(lora_bignet(x, params))
    ref = reference(x, params)

    assert out.shape == (batch, BIGNET_DIM)
    assert out.dtype == jnp.float32
    assert jnp.allclose(out, ref, atol=3e-2, rtol=3e-2), "mismatch vs. JAX reference"

    print("KERNEL_OK")
</pallas_src>

<mosaic_0001>
module attributes {stable_mosaic.version = 11 : i64} {
  func.func @lora_bignet_kernel(%arg0: i32, %arg1: memref<16x128xf32, #tpu.memory_space<vmem>>, %arg2: memref<18x128x128xbf16, #tpu.memory_space<vmem>>, %arg3: memref<18x128xbf16, #tpu.memory_space<vmem>>, %arg4: memref<18x128x32xf32, #tpu.memory_space<vmem>>, %arg5: memref<18x32x128xf32, #tpu.memory_space<vmem>>, %arg6: memref<5x128xf32, #tpu.memory_space<vmem>>, %arg7: memref<5x128xf32, #tpu.memory_space<vmem>>, %arg8: memref<16x128xf32, #tpu.memory_space<vmem>>) attributes {dimension_semantics = [#tpu.dimension_semantics<parallel>], iteration_bounds = array<i64: 1>, scalar_prefetch = 0 : i64, scratch_operands = 0 : i64, tpu.core_type = #tpu.core_type<tc>, window_params = [{transform_indices = @transform_0, window_bounds = array<i64: 16, 128>}, {pipeline_mode = #tpu.pipeline_mode<synchronous>, transform_indices = @transform_1, window_bounds = array<i64: 18, 128, 128>}, {pipeline_mode = #tpu.pipeline_mode<synchronous>, transform_indices = @transform_2, window_bounds = array<i64: 18, 128>}, {pipeline_mode = #tpu.pipeline_mode<synchronous>, transform_indices = @transform_3, window_bounds = array<i64: 18, 128, 32>}, {pipeline_mode = #tpu.pipeline_mode<synchronous>, transform_indices = @transform_4, window_bounds = array<i64: 18, 32, 128>}, {pipeline_mode = #tpu.pipeline_mode<synchronous>, transform_indices = @transform_5, window_bounds = array<i64: 5, 128>}, {pipeline_mode = #tpu.pipeline_mode<synchronous>, transform_indices = @transform_6, window_bounds = array<i64: 5, 128>}, {transform_indices = @transform_7, window_bounds = array<i64: 16, 128>}]} {
    %c0 = arith.constant 0 : index
    %c0_0 = arith.constant 0 : index
    %0 = vector.load %arg3[%c0, %c0_0] : memref<18x128xbf16, #tpu.memory_space<vmem>>, vector<18x128xbf16>
    %1 = arith.extf %0 : vector<18x128xbf16> to vector<18x128xf32>
    %c0_1 = arith.constant 0 : index
    %c0_2 = arith.constant 0 : index
    %c0_3 = arith.constant 0 : index
    %2 = vector.load %arg4[%c0_1, %c0_2, %c0_3] : memref<18x128x32xf32, #tpu.memory_space<vmem>>, vector<18x128x32xf32>
    %3 = arith.truncf %2 : vector<18x128x32xf32> to vector<18x128x32xbf16>
    %c0_4 = arith.constant 0 : index
    %c0_5 = arith.constant 0 : index
    %c0_6 = arith.constant 0 : index
    %4 = vector.load %arg5[%c0_4, %c0_5, %c0_6] : memref<18x32x128xf32, #tpu.memory_space<vmem>>, vector<18x32x128xf32>
    %5 = arith.truncf %4 : vector<18x32x128xf32> to vector<18x32x128xbf16>
    %c0_7 = arith.constant 0 : index
    %c0_8 = arith.constant 0 : index
    %6 = vector.load %arg6[%c0_7, %c0_8] : memref<5x128xf32, #tpu.memory_space<vmem>>, vector<5x128xf32>
    %c0_9 = arith.constant 0 : index
    %c0_10 = arith.constant 0 : index
    %7 = vector.load %arg7[%c0_9, %c0_10] : memref<5x128xf32, #tpu.memory_space<vmem>>, vector<5x128xf32>
    %c0_11 = arith.constant 0 : index
    %c0_12 = arith.constant 0 : index
    %8 = vector.load %arg1[%c0_11, %c0_12] : memref<16x128xf32, #tpu.memory_space<vmem>>, vector<16x128xf32>
    %9 = arith.truncf %8 : vector<16x128xf32> to vector<16x128xbf16>
    %c0_13 = arith.constant 0 : index
    %c0_14 = arith.constant 0 : index
    %c0_15 = arith.constant 0 : index
    %10 = vector.load %arg2[%c0_13, %c0_14, %c0_15] : memref<18x128x128xbf16, #tpu.memory_space<vmem>>, vector<1x128x128xbf16>
    %11 = vector.shape_cast %10 : vector<1x128x128xbf16> to vector<128x128xbf16>
    %cst = arith.constant dense<0.000000e+00> : vector<16x128xf32>
    %12 = tpu.matmul %9, %11, %cst {dimension_numbers = #tpu.dot_dimension_numbers<[1], [0], [0], [1], [0, 0, 1, 1], [], []>} : vector<16x128xbf16>, vector<128x128xbf16>, vector<16x128xf32> -> vector<16x128xf32>
    %13 = vector.extract_strided_slice %1 {offsets = [0, 0], sizes = [1, 128], strides = [1, 1]} : vector<18x128xf32> to vector<1x128xf32>
    %14 = vector.shape_cast %13 : vector<1x128xf32> to vector<128xf32>
    %15 = vector.shape_cast %14 : vector<128xf32> to vector<1x128xf32>
    %16 = vector.broadcast %15 : vector<1x128xf32> to vector<16x128xf32>
    %17 = arith.addf %12, %16 : vector<16x128xf32>
    %18 = arith.truncf %17 : vector<16x128xf32> to vector<16x128xbf16>
    %19 = arith.extf %18 : vector<16x128xbf16> to vector<16x128xf32>
    %20 = vector.extract_strided_slice %3 {offsets = [0, 0, 0], sizes = [1, 128, 32], strides = [1, 1, 1]} : vector<18x128x32xbf16> to vector<1x128x32xbf16>
    %21 = vector.shape_cast %20 : vector<1x128x32xbf16> to vector<128x32xbf16>
    %cst_16 = arith.constant dense<0.000000e+00> : vector<16x32xf32>
    %22 = tpu.matmul %9, %21, %cst_16 {dimension_numbers = #tpu.dot_dimension_numbers<[1], [0], [0], [1], [0, 0, 1, 1], [], []>} : vector<16x128xbf16>, vector<128x32xbf16>, vector<16x32xf32> -> vector<16x32xf32>
    %23 = arith.truncf %22 : vector<16x32xf32> to vector<16x32xbf16>
    %24 = vector.extract_strided_slice %5 {offsets = [0, 0, 0], sizes = [1, 32, 128], strides = [1, 1, 1]} : vector<18x32x128xbf16> to vector<1x32x128xbf16>
    %25 = vector.shape_cast %24 : vector<1x32x128xbf16> to vector<32x128xbf16>
    %cst_17 = arith.constant dense<0.000000e+00> : vector<16x128xf32>
    %26 = tpu.matmul %23, %25, %cst_17 {dimension_numbers = #tpu.dot_dimension_numbers<[1], [0], [0], [1], [0, 0, 1, 1], [], []>} : vector<16x32xbf16>, vector<32x128xbf16>, vector<16x128xf32> -> vector<16x128xf32>
    %27 = arith.addf %19, %26 : vector<16x128xf32>
    %cst_18 = arith.constant 0.000000e+00 : f32
    %28 = vector.broadcast %cst_18 : f32 to vector<16x128xf32>
    %29 = arith.maximumf %27, %28 : vector<16x128xf32>
    %30 = arith.truncf %29 : vector<16x128xf32> to vector<16x128xbf16>
    %c1 = arith.constant 1 : index
    %c0_19 = arith.constant 0 : index
    %c0_20 = arith.constant 0 : index
    %31 = vector.load %arg2[%c1, %c0_19, %c0_20] : memref<18x128x128xbf16, #tpu.memory_space<vmem>>, vector<1x128x128xbf16>
    %32 = vector.shape_cast %31 : vector<1x128x128xbf16> to vector<128x128xbf16>
    %cst_21 = arith.constant dense<0.000000e+00> : vector<16x128xf32>
    %33 = tpu.matmul %30, %32, %cst_21 {dimension_numbers = #tpu.dot_dimension_numbers<[1], [0], [0], [1], [0, 0, 1, 1], [], []>} : vector<16x128xbf16>, vector<128x128xbf16>, vector<16x128xf32> -> vector<16x128xf32>
    %34 = vector.extract_strided_slice %1 {offsets = [1, 0], sizes = [1, 128], strides = [1, 1]} : vector<18x128xf32> to vector<1x128xf32>
    %35 = vector.shape_cast %34 : vector<1x128xf32> to vector<128xf32>
    %36 = vector.shape_cast %35 : vector<128xf32> to vector<1x128xf32>
    %37 = vector.broadcast %36 : vector<1x128xf32> to vector<16x128xf32>
    %38 = arith.addf %33, %37 : vector<16x128xf32>
    %39 = arith.truncf %38 : vector<16x128xf32> to vector<16x128xbf16>
    %40 = arith.extf %39 : vector<16x128xbf16> to vector<16x128xf32>
    %41 = vector.extract_strided_slice %3 {offsets = [1, 0, 0], sizes = [1, 128, 32], strides = [1, 1, 1]} : vector<18x128x32xbf16> to vector<1x128x32xbf16>
    %42 = vector.shape_cast %41 : vector<1x128x32xbf16> to vector<128x32xbf16>
    %cst_22 = arith.constant dense<0.000000e+00> : vector<16x32xf32>
    %43 = tpu.matmul %30, %42, %cst_22 {dimension_numbers = #tpu.dot_dimension_numbers<[1], [0], [0], [1], [0, 0, 1, 1], [], []>} : vector<16x128xbf16>, vector<128x32xbf16>, vector<16x32xf32> -> vector<16x32xf32>
    %44 = arith.truncf %43 : vector<16x32xf32> to vector<16x32xbf16>
    %45 = vector.extract_strided_slice %5 {offsets = [1, 0, 0], sizes = [1, 32, 128], strides = [1, 1, 1]} : vector<18x32x128xbf16> to vector<1x32x128xbf16>
    %46 = vector.shape_cast %45 : vector<1x32x128xbf16> to vector<32x128xbf16>
    %cst_23 = arith.constant dense<0.000000e+00> : vector<16x128xf32>
    %47 = tpu.matmul %44, %46, %cst_23 {dimension_numbers = #tpu.dot_dimension_numbers<[1], [0], [0], [1], [0, 0, 1, 1], [], []>} : vector<16x32xbf16>, vector<32x128xbf16>, vector<16x128xf32> -> vector<16x128xf32>
    %48 = arith.addf %40, %47 : vector<16x128xf32>
    %cst_24 = arith.constant 0.000000e+00 : f32
    %49 = vector.broadcast %cst_24 : f32 to vector<16x128xf32>
    %50 = arith.maximumf %48, %49 : vector<16x128xf32>
    %51 = arith.truncf %50 : vector<16x128xf32> to vector<16x128xbf16>
    %c2 = arith.constant 2 : index
    %c0_25 = arith.constant 0 : index
    %c0_26 = arith.constant 0 : index
    %52 = vector.load %arg2[%c2, %c0_25, %c0_26] : memref<18x128x128xbf16, #tpu.memory_space<vmem>>, vector<1x128x128xbf16>
    %53 = vector.shape_cast %52 : vector<1x128x128xbf16> to vector<128x128xbf16>
    %cst_27 = arith.constant dense<0.000000e+00> : vector<16x128xf32>
    %54 = tpu.matmul %51, %53, %cst_27 {dimension_numbers = #tpu.dot_dimension_numbers<[1], [0], [0], [1], [0, 0, 1, 1], [], []>} : vector<16x128xbf16>, vector<128x128xbf16>, vector<16x128xf32> -> vector<16x128xf32>
    %55 = vector.extract_strided_slice %1 {offsets = [2, 0], sizes = [1, 128], strides = [1, 1]} : vector<18x128xf32> to vector<1x128xf32>
    %56 = vector.shape_cast %55 : vector<1x128xf32> to vector<128xf32>
    %57 = vector.shape_cast %56 : vector<128xf32> to vector<1x128xf32>
    %58 = vector.broadcast %57 : vector<1x128xf32> to vector<16x128xf32>
    %59 = arith.addf %54, %58 : vector<16x128xf32>
    %60 = arith.truncf %59 : vector<16x128xf32> to vector<16x128xbf16>
    %61 = arith.extf %60 : vector<16x128xbf16> to vector<16x128xf32>
    %62 = vector.extract_strided_slice %3 {offsets = [2, 0, 0], sizes = [1, 128, 32], strides = [1, 1, 1]} : vector<18x128x32xbf16> to vector<1x128x32xbf16>
    %63 = vector.shape_cast %62 : vector<1x128x32xbf16> to vector<128x32xbf16>
    %cst_28 = arith.constant dense<0.000000e+00> : vector<16x32xf32>
    %64 = tpu.matmul %51, %63, %cst_28 {dimension_numbers = #tpu.dot_dimension_numbers<[1], [0], [0], [1], [0, 0, 1, 1], [], []>} : vector<16x128xbf16>, vector<128x32xbf16>, vector<16x32xf32> -> vector<16x32xf32>
    %65 = arith.truncf %64 : vector<16x32xf32> to vector<16x32xbf16>
    %66 = vector.extract_strided_slice %5 {offsets = [2, 0, 0], sizes = [1, 32, 128], strides = [1, 1, 1]} : vector<18x32x128xbf16> to vector<1x32x128xbf16>
    %67 = vector.shape_cast %66 : vector<1x32x128xbf16> to vector<32x128xbf16>
    %cst_29 = arith.constant dense<0.000000e+00> : vector<16x128xf32>
    %68 = tpu.matmul %65, %67, %cst_29 {dimension_numbers = #tpu.dot_dimension_numbers<[1], [0], [0], [1], [0, 0, 1, 1], [], []>} : vector<16x32xbf16>, vector<32x128xbf16>, vector<16x128xf32> -> vector<16x128xf32>
    %69 = arith.addf %61, %68 : vector<16x128xf32>
    %70 = arith.addf %69, %8 : vector<16x128xf32>
    %71 = vector.extract_strided_slice %6 {offsets = [0, 0], sizes = [1, 128], strides = [1, 1]} : vector<5x128xf32> to vector<1x128xf32>
    %72 = vector.shape_cast %71 : vector<1x128xf32> to vector<128xf32>
    %73 = vector.extract_strided_slice %7 {offsets = [0, 0], sizes = [1, 128], strides = [1, 1]} : vector<5x128xf32> to vector<1x128xf32>
    %74 = vector.shape_cast %73 : vector<1x128xf32> to vector<128xf32>
    %cst_30 = arith.constant dense<0.000000e+00> : vector<16xf32>
    %75 = vector.multi_reduction <add>, %70, %cst_30 [1] : vector<16x128xf32> to vector<16xf32>
    %76 = vector.shape_cast %75 : vector<16xf32> to vector<16x1xf32>
    %cst_31 = arith.constant 1.280000e+02 : f32
    %77 = vector.broadcast %cst_31 : f32 to vector<16x1xf32>
    %78 = arith.divf %76, %77 : vector<16x1xf32>
    %79 = vector.broadcast %78 : vector<16x1xf32> to vector<16x128xf32>
    %80 = arith.subf %70, %79 : vector<16x128xf32>
    %81 = arith.mulf %80, %80 : vector<16x128xf32>
    %cst_32 = arith.constant dense<0.000000e+00> : vector<16xf32>
    %82 = vector.multi_reduction <add>, %81, %cst_32 [1] : vector<16x128xf32> to vector<16xf32>
    %83 = vector.shape_cast %82 : vector<16xf32> to vector<16x1xf32>
    %cst_33 = arith.constant 1.280000e+02 : f32
    %84 = vector.broadcast %cst_33 : f32 to vector<16x1xf32>
    %85 = arith.divf %83, %84 : vector<16x1xf32>
    %86 = vector.broadcast %78 : vector<16x1xf32> to vector<16x128xf32>
    %87 = arith.subf %70, %86 : vector<16x128xf32>
    %cst_34 = arith.constant 9.99999974E-6 : f32
    %88 = vector.broadcast %cst_34 : f32 to vector<16x1xf32>
    %89 = arith.addf %85, %88 : vector<16x1xf32>
    %90 = math.rsqrt %89 : vector<16x1xf32>
    %91 = vector.broadcast %90 : vector<16x1xf32> to vector<16x128xf32>
    %92 = arith.mulf %87, %91 : vector<16x128xf32>
    %93 = vector.shape_cast %72 : vector<128xf32> to vector<1x128xf32>
    %94 = vector.broadcast %93 : vector<1x128xf32> to vector<16x128xf32>
    %95 = arith.mulf %92, %94 : vector<16x128xf32>
    %96 = vector.shape_cast %74 : vector<128xf32> to vector<1x128xf32>
    %97 = vector.broadcast %96 : vector<1x128xf32> to vector<16x128xf32>
    %98 = arith.addf %95, %97 : vector<16x128xf32>
    %99 = arith.truncf %98 : vector<16x128xf32> to vector<16x128xbf16>
    %c3 = arith.constant 3 : index
    %c0_35 = arith.constant 0 : index
    %c0_36 = arith.constant 0 : index
    %100 = vector.load %arg2[%c3, %c0_35, %c0_36] : memref<18x128x128xbf16, #tpu.memory_space<vmem>>, vector<1x128x128xbf16>
    %101 = vector.shape_cast %100 : vector<1x128x128xbf16> to vector<128x128xbf16>
    %cst_37 = arith.constant dense<0.000000e+00> : vector<16x128xf32>
    %102 = tpu.matmul %99, %101, %cst_37 {dimension_numbers = #tpu.dot_dimension_numbers<[1], [0], [0], [1], [0, 0, 1, 1], [], []>} : vector<16x128xbf16>, vector<128x128xbf16>, vector<16x128xf32> -> vector<16x128xf32>
    %103 = vector.extract_strided_slice %1 {offsets = [3, 0], sizes = [1, 128], strides = [1, 1]} : vector<18x128xf32> to vector<1x128xf32>
    %104 = vector.shape_cast %103 : vector<1x128xf32> to vector<128xf32>
    %105 = vector.shape_cast %104 : vector<128xf32> to vector<1x128xf32>
    %106 = vector.broadcast %105 : vector<1x128xf32> to vector<16x128xf32>
    %107 = arith.addf %102, %106 : vector<16x128xf32>
    %108 = arith.truncf %107 : vector<16x128xf32> to vector<16x128xbf16>
    %109 = arith.extf %108 : vector<16x128xbf16> to vector<16x128xf32>
    %110 = vector.extract_strided_slice %3 {offsets = [3, 0, 0], sizes = [1, 128, 32], strides = [1, 1, 1]} : vector<18x128x32xbf16> to vector<1x128x32xbf16>
    %111 = vector.shape_cast %110 : vector<1x128x32xbf16> to vector<128x32xbf16>
    %cst_38 = arith.constant dense<0.000000e+00> : vector<16x32xf32>
    %112 = tpu.matmul %99, %111, %cst_38 {dimension_numbers = #tpu.dot_dimension_numbers<[1], [0], [0], [1], [0, 0, 1, 1], [], []>} : vector<16x128xbf16>, vector<128x32xbf16>, vector<16x32xf32> -> vector<16x32xf32>
    %113 = arith.truncf %112 : vector<16x32xf32> to vector<16x32xbf16>
    %114 = vector.extract_strided_slice %5 {offsets = [3, 0, 0], sizes = [1, 32, 128], strides = [1, 1, 1]} : vector<18x32x128xbf16> to vector<1x32x128xbf16>
    %115 = vector.shape_cast %114 : vector<1x32x128xbf16> to vector<32x128xbf16>
    %cst_39 = arith.constant dense<0.000000e+00> : vector<16x128xf32>
    %116 = tpu.matmul %113, %115, %cst_39 {dimension_numbers = #tpu.dot_dimension_numbers<[1], [0], [0], [1], [0, 0, 1, 1], [], []>} : vector<16x32xbf16>, vector<32x128xbf16>, vector<16x128xf32> -> vector<16x128xf32>
    %117 = arith.addf %109, %116 : vector<16x128xf32>
    %cst_40 = arith.constant 0.000000e+00 : f32
    %118 = vector.broadcast %cst_40 : f32 to vector<16x128xf32>
    %119 = arith.maximumf %117, %118 : vector<16x128xf32>
    %120 = arith.truncf %119 : vector<16x128xf32> to vector<16x128xbf16>
    %c4 = arith.constant 4 : index
    %c0_41 = arith.constant 0 : index
    %c0_42 = arith.constant 0 : index
    %121 = vector.load %arg2[%c4, %c0_41, %c0_42] : memref<18x128x128xbf16, #tpu.memory_space<vmem>>, vector<1x128x128xbf16>
    %122 = vector.shape_cast %121 : vector<1x128x128xbf16> to vector<128x128xbf16>
    %cst_43 = arith.constant dense<0.000000e+00> : vector<16x128xf32>
    %123 = tpu.matmul %120, %122, %cst_43 {dimension_numbers = #tpu.dot_dimension_numbers<[1], [0], [0], [1], [0, 0, 1, 1], [], []>} : vector<16x128xbf16>, vector<128x128xbf16>, vector<16x128xf32> -> vector<16x128xf32>
    %124 = vector.extract_strided_slice %1 {offsets = [4, 0], sizes = [1, 128], strides = [1, 1]} : vector<18x128xf32> to vector<1x128xf32>
    %125 = vector.shape_cast %124 : vector<1x128xf32> to vector<128xf32>
    %126 = vector.shape_cast %125 : vector<128xf32> to vector<1x128xf32>
    %127 = vector.broadcast %126 : vector<1x128xf32> to vector<16x128xf32>
    %128 = arith.addf %123, %127 : vector<16x128xf32>
    %129 = arith.truncf %128 : vector<16x128xf32> to vector<16x128xbf16>
    %130 = arith.extf %129 : vector<16x128xbf16> to vector<16x128xf32>
    %131 = vector.extract_strided_slice %3 {offsets = [4, 0, 0], sizes = [1, 128, 32], strides = [1, 1, 1]} : vector<18x128x32xbf16> to vector<1x128x32xbf16>
    %132 = vector.shape_cast %131 : vector<1x128x32xbf16> to vector<128x32xbf16>
    %cst_44 = arith.constant dense<0.000000e+00> : vector<16x32xf32>
    %133 = tpu.matmul %120, %132, %cst_44 {dimension_numbers = #tpu.dot_dimension_numbers<[1], [0], [0], [1], [0, 0, 1, 1], [], []>} : vector<16x128xbf16>, vector<128x32xbf16>, vector<16x32xf32> -> vector<16x32xf32>
    %134 = arith.truncf %133 : vector<16x32xf32> to vector<16x32xbf16>
    %135 = vector.extract_strided_slice %5 {offsets = [4, 0, 0], sizes = [1, 32, 128], strides = [1, 1, 1]} : vector<18x32x128xbf16> to vector<1x32x128xbf16>
    %136 = vector.shape_cast %135 : vector<1x32x128xbf16> to vector<32x128xbf16>
    %cst_45 = arith.constant dense<0.000000e+00> : vector<16x128xf32>
    %137 = tpu.matmul %134, %136, %cst_45 {dimension_numbers = #tpu.dot_dimension_numbers<[1], [0], [0], [1], [0, 0, 1, 1], [], []>} : vector<16x32xbf16>, vector<32x128xbf16>, vector<16x128xf32> -> vector<16x128xf32>
    %138 = arith.addf %130, %137 : vector<16x128xf32>
    %cst_46 = arith.constant 0.000000e+00 : f32
    %139 = vector.broadcast %cst_46 : f32 to vector<16x128xf32>
    %140 = arith.maximumf %138, %139 : vector<16x128xf32>
    %141 = arith.truncf %140 : vector<16x128xf32> to vector<16x128xbf16>
    %c5 = arith.constant 5 : index
    %c0_47 = arith.constant 0 : index
    %c0_48 = arith.constant 0 : index
    %142 = vector.load %arg2[%c5, %c0_47, %c0_48] : memref<18x128x128xbf16, #tpu.memory_space<vmem>>, vector<1x128x128xbf16>
    %143 = vector.shape_cast %142 : vector<1x128x128xbf16> to vector<128x128xbf16>
    %cst_49 = arith.constant dense<0.000000e+00> : vector<16x128xf32>
    %144 = tpu.matmul %141, %143, %cst_49 {dimension_numbers = #tpu.dot_dimension_numbers<[1], [0], [0], [1], [0, 0, 1, 1], [], []>} : vector<16x128xbf16>, vector<128x128xbf16>, vector<16x128xf32> -> vector<16x128xf32>
    %145 = vector.extract_strided_slice %1 {offsets = [5, 0], sizes = [1, 128], strides = [1, 1]} : vector<18x128xf32> to vector<1x128xf32>
    %146 = vector.shape_cast %145 : vector<1x128xf32> to vector<128xf32>
    %147 = vector.shape_cast %146 : vector<128xf32> to vector<1x128xf32>
    %148 = vector.broadcast %147 : vector<1x128xf32> to vector<16x128xf32>
    %149 = arith.addf %144, %148 : vector<16x128xf32>
    %150 = arith.truncf %149 : vector<16x128xf32> to vector<16x128xbf16>
    %151 = arith.extf %150 : vector<16x128xbf16> to vector<16x128xf32>
    %152 = vector.extract_strided_slice %3 {offsets = [5, 0, 0], sizes = [1, 128, 32], strides = [1, 1, 1]} : vector<18x128x32xbf16> to vector<1x128x32xbf16>
    %153 = vector.shape_cast %152 : vector<1x128x32xbf16> to vector<128x32xbf16>
    %cst_50 = arith.constant dense<0.000000e+00> : vector<16x32xf32>
    %154 = tpu.matmul %141, %153, %cst_50 {dimension_numbers = #tpu.dot_dimension_numbers<[1], [0], [0], [1], [0, 0, 1, 1], [], []>} : vector<16x128xbf16>, vector<128x32xbf16>, vector<16x32xf32> -> vector<16x32xf32>
    %155 = arith.truncf %154 : vector<16x32xf32> to vector<16x32xbf16>
    %156 = vector.extract_strided_slice %5 {offsets = [5, 0, 0], sizes = [1, 32, 128], strides = [1, 1, 1]} : vector<18x32x128xbf16> to vector<1x32x128xbf16>
    %157 = vector.shape_cast %156 : vector<1x32x128xbf16> to vector<32x128xbf16>
    %cst_51 = arith.constant dense<0.000000e+00> : vector<16x128xf32>
    %158 = tpu.matmul %155, %157, %cst_51 {dimension_numbers = #tpu.dot_dimension_numbers<[1], [0], [0], [1], [0, 0, 1, 1], [], []>} : vector<16x32xbf16>, vector<32x128xbf16>, vector<16x128xf32> -> vector<16x128xf32>
    %159 = arith.addf %151, %158 : vector<16x128xf32>
    %160 = arith.addf %159, %98 : vector<16x128xf32>
    %161 = vector.extract_strided_slice %6 {offsets = [1, 0], sizes = [1, 128], strides = [1, 1]} : vector<5x128xf32> to vector<1x128xf32>
    %162 = vector.shape_cast %161 : vector<1x128xf32> to vector<128xf32>
    %163 = vector.extract_strided_slice %7 {offsets = [1, 0], sizes = [1, 128], strides = [1, 1]} : vector<5x128xf32> to vector<1x128xf32>
    %164 = vector.shape_cast %163 : vector<1x128xf32> to vector<128xf32>
    %cst_52 = arith.constant dense<0.000000e+00> : vector<16xf32>
    %165 = vector.multi_reduction <add>, %160, %cst_52 [1] : vector<16x128xf32> to vector<16xf32>
    %166 = vector.shape_cast %165 : vector<16xf32> to vector<16x1xf32>
    %cst_53 = arith.constant 1.280000e+02 : f32
    %167 = vector.broadcast %cst_53 : f32 to vector<16x1xf32>
    %168 = arith.divf %166, %167 : vector<16x1xf32>
    %169 = vector.broadcast %168 : vector<16x1xf32> to vector<16x128xf32>
    %170 = arith.subf %160, %169 : vector<16x128xf32>
    %171 = arith.mulf %170, %170 : vector<16x128xf32>
    %cst_54 = arith.constant dense<0.000000e+00> : vector<16xf32>
    %172 = vector.multi_reduction <add>, %171, %cst_54 [1] : vector<16x128xf32> to vector<16xf32>
    %173 = vector.shape_cast %172 : vector<16xf32> to vector<16x1xf32>
    %cst_55 = arith.constant 1.280000e+02 : f32
    %174 = vector.broadcast %cst_55 : f32 to vector<16x1xf32>
    %175 = arith.divf %173, %174 : vector<16x1xf32>
    %176 = vector.broadcast %168 : vector<16x1xf32> to vector<16x128xf32>
    %177 = arith.subf %160, %176 : vector<16x128xf32>
    %cst_56 = arith.constant 9.99999974E-6 : f32
    %178 = vector.broadcast %cst_56 : f32 to vector<16x1xf32>
    %179 = arith.addf %175, %178 : vector<16x1xf32>
    %180 = math.rsqrt %179 : vector<16x1xf32>
    %181 = vector.broadcast %180 : vector<16x1xf32> to vector<16x128xf32>
    %182 = arith.mulf %177, %181 : vector<16x128xf32>
    %183 = vector.shape_cast %162 : vector<128xf32> to vector<1x128xf32>
    %184 = vector.broadcast %183 : vector<1x128xf32> to vector<16x128xf32>
    %185 = arith.mulf %182, %184 : vector<16x128xf32>
    %186 = vector.shape_cast %164 : vector<128xf32> to vector<1x128xf32>
    %187 = vector.broadcast %186 : vector<1x128xf32> to vector<16x128xf32>
    %188 = arith.addf %185, %187 : vector<16x128xf32>
    %189 = arith.truncf %188 : vector<16x128xf32> to vector<16x128xbf16>
    %c6 = arith.constant 6 : index
    %c0_57 = arith.constant 0 : index
    %c0_58 = arith.constant 0 : index
    %190 = vector.load %arg2[%c6, %c0_57, %c0_58] : memref<18x128x128xbf16, #tpu.memory_space<vmem>>, vector<1x128x128xbf16>
    %191 = vector.shape_cast %190 : vector<1x128x128xbf16> to vector<128x128xbf16>
    %cst_59 = arith.constant dense<0.000000e+00> : vector<16x128xf32>
    %192 = tpu.matmul %189, %191, %cst_59 {dimension_numbers = #tpu.dot_dimension_numbers<[1], [0], [0], [1], [0, 0, 1, 1], [], []>} : vector<16x128xbf16>, vector<128x128xbf16>, vector<16x128xf32> -> vector<16x128xf32>
    %193 = vector.extract_strided_slice %1 {offsets = [6, 0], sizes = [1, 128], strides = [1, 1]} : vector<18x128xf32> to vector<1x128xf32>
    %194 = vector.shape_cast %193 : vector<1x128xf32> to vector<128xf32>
    %195 = vector.shape_cast %194 : vector<128xf32> to vector<1x128xf32>
    %196 = vector.broadcast %195 : vector<1x128xf32> to vector<16x128xf32>
    %197 = arith.addf %192, %196 : vector<16x128xf32>
    %198 = arith.truncf %197 : vector<16x128xf32> to vector<16x128xbf16>
    %199 = arith.extf %198 : vector<16x128xbf16> to vector<16x128xf32>
    %200 = vector.extract_strided_slice %3 {offsets = [6, 0, 0], sizes = [1, 128, 32], strides = [1, 1, 1]} : vector<18x128x32xbf16> to vector<1x128x32xbf16>
    %201 = vector.shape_cast %200 : vector<1x128x32xbf16> to vector<128x32xbf16>
    %cst_60 = arith.constant dense<0.000000e+00> : vector<16x32xf32>
    %202 = tpu.matmul %189, %201, %cst_60 {dimension_numbers = #tpu.dot_dimension_numbers<[1], [0], [0], [1], [0, 0, 1, 1], [], []>} : vector<16x128xbf16>, vector<128x32xbf16>, vector<16x32xf32> -> vector<16x32xf32>
    %203 = arith.truncf %202 : vector<16x32xf32> to vector<16x32xbf16>
    %204 = vector.extract_strided_slice %5 {offsets = [6, 0, 0], sizes = [1, 32, 128], strides = [1, 1, 1]} : vector<18x32x128xbf16> to vector<1x32x128xbf16>
    %205 = vector.shape_cast %204 : vector<1x32x128xbf16> to vector<32x128xbf16>
    %cst_61 = arith.constant dense<0.000000e+00> : vector<16x128xf32>
    %206 = tpu.matmul %203, %205, %cst_61 {dimension_numbers = #tpu.dot_dimension_numbers<[1], [0], [0], [1], [0, 0, 1, 1], [], []>} : vector<16x32xbf16>, vector<32x128xbf16>, vector<16x128xf32> -> vector<16x128xf32>
    %207 = arith.addf %199, %206 : vector<16x128xf32>
    %cst_62 = arith.constant 0.000000e+00 : f32
    %208 = vector.broadcast %cst_62 : f32 to vector<16x128xf32>
    %209 = arith.maximumf %207, %208 : vector<16x128xf32>
    %210 = arith.truncf %209 : vector<16x128xf32> to vector<16x128xbf16>
    %c7 = arith.constant 7 : index
    %c0_63 = arith.constant 0 : index
    %c0_64 = arith.constant 0 : index
    %211 = vector.load %arg2[%c7, %c0_63, %c0_64] : memref<18x128x128xbf16, #tpu.memory_space<vmem>>, vector<1x128x128xbf16>
    %212 = vector.shape_cast %211 : vector<1x128x128xbf16> to vector<128x128xbf16>
    %cst_65 = arith.constant dense<0.000000e+00> : vector<16x128xf32>
    %213 = tpu.matmul %210, %212, %cst_65 {dimension_numbers = #tpu.dot_dimension_numbers<[1], [0], [0], [1], [0, 0, 1, 1], [], []>} : vector<16x128xbf16>, vector<128x128xbf16>, vector<16x128xf32> -> vector<16x128xf32>
    %214 = vector.extract_strided_slice %1 {offsets = [7, 0], sizes = [1, 128], strides = [1, 1]} : vector<18x128xf32> to vector<1x128xf32>
    %215 = vector.shape_cast %214 : vector<1x128xf32> to vector<128xf32>
    %216 = vector.shape_cast %215 : vector<128xf32> to vector<1x128xf32>
    %217 = vector.broadcast %216 : vector<1x128xf32> to vector<16x128xf32>
    %218 = arith.addf %213, %217 : vector<16x128xf32>
    %219 = arith.truncf %218 : vector<16x128xf32> to vector<16x128xbf16>
    %220 = arith.extf %219 : vector<16x128xbf16> to vector<16x128xf32>
    %221 = vector.extract_strided_slice %3 {offsets = [7, 0, 0], sizes = [1, 128, 32], strides = [1, 1, 1]} : vector<18x128x32xbf16> to vector<1x128x32xbf16>
    %222 = vector.shape_cast %221 : vector<1x128x32xbf16> to vector<128x32xbf16>
    %cst_66 = arith.constant dense<0.000000e+00> : vector<16x32xf32>
    %223 = tpu.matmul %210, %222, %cst_66 {dimension_numbers = #tpu.dot_dimension_numbers<[1], [0], [0], [1], [0, 0, 1, 1], [], []>} : vector<16x128xbf16>, vector<128x32xbf16>, vector<16x32xf32> -> vector<16x32xf32>
    %224 = arith.truncf %223 : vector<16x32xf32> to vector<16x32xbf16>
    %225 = vector.extract_strided_slice %5 {offsets = [7, 0, 0], sizes = [1, 32, 128], strides = [1, 1, 1]} : vector<18x32x128xbf16> to vector<1x32x128xbf16>
    %226 = vector.shape_cast %225 : vector<1x32x128xbf16> to vector<32x128xbf16>
    %cst_67 = arith.constant dense<0.000000e+00> : vector<16x128xf32>
    %227 = tpu.matmul %224, %226, %cst_67 {dimension_numbers = #tpu.dot_dimension_numbers<[1], [0], [0], [1], [0, 0, 1, 1], [], []>} : vector<16x32xbf16>, vector<32x128xbf16>, vector<16x128xf32> -> vector<16x128xf32>
    %228 = arith.addf %220, %227 : vector<16x128xf32>
    %cst_68 = arith.constant 0.000000e+00 : f32
    %229 = vector.broadcast %cst_68 : f32 to vector<16x128xf32>
    %230 = arith.maximumf %228, %229 : vector<16x128xf32>
    %231 = arith.truncf %230 : vector<16x128xf32> to vector<16x128xbf16>
    %c8 = arith.constant 8 : index
    %c0_69 = arith.constant 0 : index
    %c0_70 = arith.constant 0 : index
    %232 = vector.load %arg2[%c8, %c0_69, %c0_70] : memref<18x128x128xbf16, #tpu.memory_space<vmem>>, vector<1x128x128xbf16>
    %233 = vector.shape_cast %232 : vector<1x128x128xbf16> to vector<128x128xbf16>
    %cst_71 = arith.constant dense<0.000000e+00> : vector<16x128xf32>
    %234 = tpu.matmul %231, %233, %cst_71 {dimension_numbers = #tpu.dot_dimension_numbers<[1], [0], [0], [1], [0, 0, 1, 1], [], []>} : vector<16x128xbf16>, vector<128x128xbf16>, vector<16x128xf32> -> vector<16x128xf32>
    %235 = vector.extract_strided_slice %1 {offsets = [8, 0], sizes = [1, 128], strides = [1, 1]} : vector<18x128xf32> to vector<1x128xf32>
    %236 = vector.shape_cast %235 : vector<1x128xf32> to vector<128xf32>
    %237 = vector.shape_cast %236 : vector<128xf32> to vector<1x128xf32>
    %238 = vector.broadcast %237 : vector<1x128xf32> to vector<16x128xf32>
    %239 = arith.addf %234, %238 : vector<16x128xf32>
    %240 = arith.truncf %239 : vector<16x128xf32> to vector<16x128xbf16>
    %241 = arith.extf %240 : vector<16x128xbf16> to vector<16x128xf32>
    %242 = vector.extract_strided_slice %3 {offsets = [8, 0, 0], sizes = [1, 128, 32], strides = [1, 1, 1]} : vector<18x128x32xbf16> to vector<1x128x32xbf16>
    %243 = vector.shape_cast %242 : vector<1x128x32xbf16> to vector<128x32xbf16>
    %cst_72 = arith.constant dense<0.000000e+00> : vector<16x32xf32>
    %244 = tpu.matmul %231, %243, %cst_72 {dimension_numbers = #tpu.dot_dimension_numbers<[1], [0], [0], [1], [0, 0, 1, 1], [], []>} : vector<16x128xbf16>, vector<128x32xbf16>, vector<16x32xf32> -> vector<16x32xf32>
    %245 = arith.truncf %244 : vector<16x32xf32> to vector<16x32xbf16>
    %246 = vector.extract_strided_slice %5 {offsets = [8, 0, 0], sizes = [1, 32, 128], strides = [1, 1, 1]} : vector<18x32x128xbf16> to vector<1x32x128xbf16>
    %247 = vector.shape_cast %246 : vector<1x32x128xbf16> to vector<32x128xbf16>
    %cst_73 = arith.constant dense<0.000000e+00> : vector<16x128xf32>
    %248 = tpu.matmul %245, %247, %cst_73 {dimension_numbers = #tpu.dot_dimension_numbers<[1], [0], [0], [1], [0, 0, 1, 1], [], []>} : vector<16x32xbf16>, vector<32x128xbf16>, vector<16x128xf32> -> vector<16x128xf32>
    %249 = arith.addf %241, %248 : vector<16x128xf32>
    %250 = arith.addf %249, %188 : vector<16x128xf32>
    %251 = vector.extract_strided_slice %6 {offsets = [2, 0], sizes = [1, 128], strides = [1, 1]} : vector<5x128xf32> to vector<1x128xf32>
    %252 = vector.shape_cast %251 : vector<1x128xf32> to vector<128xf32>
    %253 = vector.extract_strided_slice %7 {offsets = [2, 0], sizes = [1, 128], strides = [1, 1]} : vector<5x128xf32> to vector<1x128xf32>
    %254 = vector.shape_cast %253 : vector<1x128xf32> to vector<128xf32>
    %cst_74 = arith.constant dense<0.000000e+00> : vector<16xf32>
    %255 = vector.multi_reduction <add>, %250, %cst_74 [1] : vector<16x128xf32> to vector<16xf32>
    %256 = vector.shape_cast %255 : vector<16xf32> to vector<16x1xf32>
    %cst_75 = arith.constant 1.280000e+02 : f32
    %257 = vector.broadcast %cst_75 : f32 to vector<16x1xf32>
    %258 = arith.divf %256, %257 : vector<16x1xf32>
    %259 = vector.broadcast %258 : vector<16x1xf32> to vector<16x128xf32>
    %260 = arith.subf %250, %259 : vector<16x128xf32>
    %261 = arith.mulf %260, %260 : vector<16x128xf32>
    %cst_76 = arith.constant dense<0.000000e+00> : vector<16xf32>
    %262 = vector.multi_reduction <add>, %261, %cst_76 [1] : vector<16x128xf32> to vector<16xf32>
    %263 = vector.shape_cast %262 : vector<16xf32> to vector<16x1xf32>
    %cst_77 = arith.constant 1.280000e+02 : f32
    %264 = vector.broadcast %cst_77 : f32 to vector<16x1xf32>
    %265 = arith.divf %263, %264 : vector<16x1xf32>
    %266 = vector.broadcast %258 : vector<16x1xf32> to vector<16x128xf32>
    %267 = arith.subf %250, %266 : vector<16x128xf32>
    %cst_78 = arith.constant 9.99999974E-6 : f32
    %268 = vector.broadcast %cst_78 : f32 to vector<16x1xf32>
    %269 = arith.addf %265, %268 : vector<16x1xf32>
    %270 = math.rsqrt %269 : vector<16x1xf32>
    %271 = vector.broadcast %270 : vector<16x1xf32> to vector<16x128xf32>
    %272 = arith.mulf %267, %271 : vector<16x128xf32>
    %273 = vector.shape_cast %252 : vector<128xf32> to vector<1x128xf32>
    %274 = vector.broadcast %273 : vector<1x128xf32> to vector<16x128xf32>
    %275 = arith.mulf %272, %274 : vector<16x128xf32>
    %276 = vector.shape_cast %254 : vector<128xf32> to vector<1x128xf32>
    %277 = vector.broadcast %276 : vector<1x128xf32> to vector<16x128xf32>
    %278 = arith.addf %275, %277 : vector<16x128xf32>
    %279 = arith.truncf %278 : vector<16x128xf32> to vector<16x128xbf16>
    %c9 = arith.constant 9 : index
    %c0_79 = arith.constant 0 : index
    %c0_80 = arith.constant 0 : index
    %280 = vector.load %arg2[%c9, %c0_79, %c0_80] : memref<18x128x128xbf16, #tpu.memory_space<vmem>>, vector<1x128x128xbf16>
    %281 = vector.shape_cast %280 : vector<1x128x128xbf16> to vector<128x128xbf16>
    %cst_81 = arith.constant dense<0.000000e+00> : vector<16x128xf32>
    %282 = tpu.matmul %279, %281, %cst_81 {dimension_numbers = #tpu.dot_dimension_numbers<[1], [0], [0], [1], [0, 0, 1, 1], [], []>} : vector<16x128xbf16>, vector<128x128xbf16>, vector<16x128xf32> -> vector<16x128xf32>
    %283 = vector.extract_strided_slice %1 {offsets = [9, 0], sizes = [1, 128], strides = [1, 1]} : vector<18x128xf32> to vector<1x128xf32>
    %284 = vector.shape_cast %283 : vector<1x128xf32> to vector<128xf32>
    %285 = vector.shape_cast %284 : vector<128xf32> to vector<1x128xf32>
    %286 = vector.broadcast %285 : vector<1x128xf32> to vector<16x128xf32>
    %287 = arith.addf %282, %286 : vector<16x128xf32>
    %288 = arith.truncf %287 : vector<16x128xf32> to vector<16x128xbf16>
    %289 = arith.extf %288 : vector<16x128xbf16> to vector<16x128xf32>
    %290 = vector.extract_strided_slice %3 {offsets = [9, 0, 0], sizes = [1, 128, 32], strides = [1, 1, 1]} : vector<18x128x32xbf16> to vector<1x128x32xbf16>
    %291 = vector.shape_cast %290 : vector<1x128x32xbf16> to vector<128x32xbf16>
    %cst_82 = arith.constant dense<0.000000e+00> : vector<16x32xf32>
    %292 = tpu.matmul %279, %291, %cst_82 {dimension_numbers = #tpu.dot_dimension_numbers<[1], [0], [0], [1], [0, 0, 1, 1], [], []>} : vector<16x128xbf16>, vector<128x32xbf16>, vector<16x32xf32> -> vector<16x32xf32>
    %293 = arith.truncf %292 : vector<16x32xf32> to vector<16x32xbf16>
    %294 = vector.extract_strided_slice %5 {offsets = [9, 0, 0], sizes = [1, 32, 128], strides = [1, 1, 1]} : vector<18x32x128xbf16> to vector<1x32x128xbf16>
    %295 = vector.shape_cast %294 : vector<1x32x128xbf16> to vector<32x128xbf16>
    %cst_83 = arith.constant dense<0.000000e+00> : vector<16x128xf32>
    %296 = tpu.matmul %293, %295, %cst_83 {dimension_numbers = #tpu.dot_dimension_numbers<[1], [0], [0], [1], [0, 0, 1, 1], [], []>} : vector<16x32xbf16>, vector<32x128xbf16>, vector<16x128xf32> -> vector<16x128xf32>
    %297 = arith.addf %289, %296 : vector<16x128xf32>
    %cst_84 = arith.constant 0.000000e+00 : f32
    %298 = vector.broadcast %cst_84 : f32 to vector<16x128xf32>
    %299 = arith.maximumf %297, %298 : vector<16x128xf32>
    %300 = arith.truncf %299 : vector<16x128xf32> to vector<16x128xbf16>
    %c10 = arith.constant 10 : index
    %c0_85 = arith.constant 0 : index
    %c0_86 = arith.constant 0 : index
    %301 = vector.load %arg2[%c10, %c0_85, %c0_86] : memref<18x128x128xbf16, #tpu.memory_space<vmem>>, vector<1x128x128xbf16>
    %302 = vector.shape_cast %301 : vector<1x128x128xbf16> to vector<128x128xbf16>
    %cst_87 = arith.constant dense<0.000000e+00> : vector<16x128xf32>
    %303 = tpu.matmul %300, %302, %cst_87 {dimension_numbers = #tpu.dot_dimension_numbers<[1], [0], [0], [1], [0, 0, 1, 1], [], []>} : vector<16x128xbf16>, vector<128x128xbf16>, vector<16x128xf32> -> vector<16x128xf32>
    %304 = vector.extract_strided_slice %1 {offsets = [10, 0], sizes = [1, 128], strides = [1, 1]} : vector<18x128xf32> to vector<1x128xf32>
    %305 = vector.shape_cast %304 : vector<1x128xf32> to vector<128xf32>
    %306 = vector.shape_cast %305 : vector<128xf32> to vector<1x128xf32>
    %307 = vector.broadcast %306 : vector<1x128xf32> to vector<16x128xf32>
    %308 = arith.addf %303, %307 : vector<16x128xf32>
    %309 = arith.truncf %308 : vector<16x128xf32> to vector<16x128xbf16>
    %310 = arith.extf %309 : vector<16x128xbf16> to vector<16x128xf32>
    %311 = vector.extract_strided_slice %3 {offsets = [10, 0, 0], sizes = [1, 128, 32], strides = [1, 1, 1]} : vector<18x128x32xbf16> to vector<1x128x32xbf16>
    %312 = vector.shape_cast %311 : vector<1x128x32xbf16> to vector<128x32xbf16>
    %cst_88 = arith.constant dense<0.000000e+00> : vector<16x32xf32>
    %313 = tpu.matmul %300, %312, %cst_88 {dimension_numbers = #tpu.dot_dimension_numbers<[1], [0], [0], [1], [0, 0, 1, 1], [], []>} : vector<16x128xbf16>, vector<128x32xbf16>, vector<16x32xf32> -> vector<16x32xf32>
    %314 = arith.truncf %313 : vector<16x32xf32> to vector<16x32xbf16>
    %315 = vector.extract_strided_slice %5 {offsets = [10, 0, 0], sizes = [1, 32, 128], strides = [1, 1, 1]} : vector<18x32x128xbf16> to vector<1x32x128xbf16>
    %316 = vector.shape_cast %315 : vector<1x32x128xbf16> to vector<32x128xbf16>
    %cst_89 = arith.constant dense<0.000000e+00> : vector<16x128xf32>
    %317 = tpu.matmul %314, %316, %cst_89 {dimension_numbers = #tpu.dot_dimension_numbers<[1], [0], [0], [1], [0, 0, 1, 1], [], []>} : vector<16x32xbf16>, vector<32x128xbf16>, vector<16x128xf32> -> vector<16x128xf32>
    %318 = arith.addf %310, %317 : vector<16x128xf32>
    %cst_90 = arith.constant 0.000000e+00 : f32
    %319 = vector.broadcast %cst_90 : f32 to vector<16x128xf32>
    %320 = arith.maximumf %318, %319 : vector<16x128xf32>
    %321 = arith.truncf %320 : vector<16x128xf32> to vector<16x128xbf16>
    %c11 = arith.constant 11 : index
    %c0_91 = arith.constant 0 : index
    %c0_92 = arith.constant 0 : index
    %322 = vector.load %arg2[%c11, %c0_91, %c0_92] : memref<18x128x128xbf16, #tpu.memory_space<vmem>>, vector<1x128x128xbf16>
    %323 = vector.shape_cast %322 : vector<1x128x128xbf16> to vector<128x128xbf16>
    %cst_93 = arith.constant dense<0.000000e+00> : vector<16x128xf32>
    %324 = tpu.matmul %321, %323, %cst_93 {dimension_numbers = #tpu.dot_dimension_numbers<[1], [0], [0], [1], [0, 0, 1, 1], [], []>} : vector<16x128xbf16>, vector<128x128xbf16>, vector<16x128xf32> -> vector<16x128xf32>
    %325 = vector.extract_strided_slice %1 {offsets = [11, 0], sizes = [1, 128], strides = [1, 1]} : vector<18x128xf32> to vector<1x128xf32>
    %326 = vector.shape_cast %325 : vector<1x128xf32> to vector<128xf32>
    %327 = vector.shape_cast %326 : vector<128xf32> to vector<1x128xf32>
    %328 = vector.broadcast %327 : vector<1x128xf32> to vector<16x128xf32>
    %329 = arith.addf %324, %328 : vector<16x128xf32>
    %330 = arith.truncf %329 : vector<16x128xf32> to vector<16x128xbf16>
    %331 = arith.extf %330 : vector<16x128xbf16> to vector<16x128xf32>
    %332 = vector.extract_strided_slice %3 {offsets = [11, 0, 0], sizes = [1, 128, 32], strides = [1, 1, 1]} : vector<18x128x32xbf16> to vector<1x128x32xbf16>
    %333 = vector.shape_cast %332 : vector<1x128x32xbf16> to vector<128x32xbf16>
    %cst_94 = arith.constant dense<0.000000e+00> : vector<16x32xf32>
    %334 = tpu.matmul %321, %333, %cst_94 {dimension_numbers = #tpu.dot_dimension_numbers<[1], [0], [0], [1], [0, 0, 1, 1], [], []>} : vector<16x128xbf16>, vector<128x32xbf16>, vector<16x32xf32> -> vector<16x32xf32>
    %335 = arith.truncf %334 : vector<16x32xf32> to vector<16x32xbf16>
    %336 = vector.extract_strided_slice %5 {offsets = [11, 0, 0], sizes = [1, 32, 128], strides = [1, 1, 1]} : vector<18x32x128xbf16> to vector<1x32x128xbf16>
    %337 = vector.shape_cast %336 : vector<1x32x128xbf16> to vector<32x128xbf16>
    %cst_95 = arith.constant dense<0.000000e+00> : vector<16x128xf32>
    %338 = tpu.matmul %335, %337, %cst_95 {dimension_numbers = #tpu.dot_dimension_numbers<[1], [0], [0], [1], [0, 0, 1, 1], [], []>} : vector<16x32xbf16>, vector<32x128xbf16>, vector<16x128xf32> -> vector<16x128xf32>
    %339 = arith.addf %331, %338 : vector<16x128xf32>
    %340 = arith.addf %339, %278 : vector<16x128xf32>
    %341 = vector.extract_strided_slice %6 {offsets = [3, 0], sizes = [1, 128], strides = [1, 1]} : vector<5x128xf32> to vector<1x128xf32>
    %342 = vector.shape_cast %341 : vector<1x128xf32> to vector<128xf32>
    %343 = vector.extract_strided_slice %7 {offsets = [3, 0], sizes = [1, 128], strides = [1, 1]} : vector<5x128xf32> to vector<1x128xf32>
    %344 = vector.shape_cast %343 : vector<1x128xf32> to vector<128xf32>
    %cst_96 = arith.constant dense<0.000000e+00> : vector<16xf32>
    %345 = vector.multi_reduction <add>, %340, %cst_96 [1] : vector<16x128xf32> to vector<16xf32>
    %346 = vector.shape_cast %345 : vector<16xf32> to vector<16x1xf32>
    %cst_97 = arith.constant 1.280000e+02 : f32
    %347 = vector.broadcast %cst_97 : f32 to vector<16x1xf32>
    %348 = arith.divf %346, %347 : vector<16x1xf32>
    %349 = vector.broadcast %348 : vector<16x1xf32> to vector<16x128xf32>
    %350 = arith.subf %340, %349 : vector<16x128xf32>
    %351 = arith.mulf %350, %350 : vector<16x128xf32>
    %cst_98 = arith.constant dense<0.000000e+00> : vector<16xf32>
    %352 = vector.multi_reduction <add>, %351, %cst_98 [1] : vector<16x128xf32> to vector<16xf32>
    %353 = vector.shape_cast %352 : vector<16xf32> to vector<16x1xf32>
    %cst_99 = arith.constant 1.280000e+02 : f32
    %354 = vector.broadcast %cst_99 : f32 to vector<16x1xf32>
    %355 = arith.divf %353, %354 : vector<16x1xf32>
    %356 = vector.broadcast %348 : vector<16x1xf32> to vector<16x128xf32>
    %357 = arith.subf %340, %356 : vector<16x128xf32>
    %cst_100 = arith.constant 9.99999974E-6 : f32
    %358 = vector.broadcast %cst_100 : f32 to vector<16x1xf32>
    %359 = arith.addf %355, %358 : vector<16x1xf32>
    %360 = math.rsqrt %359 : vector<16x1xf32>
    %361 = vector.broadcast %360 : vector<16x1xf32> to vector<16x128xf32>
    %362 = arith.mulf %357, %361 : vector<16x128xf32>
    %363 = vector.shape_cast %342 : vector<128xf32> to vector<1x128xf32>
    %364 = vector.broadcast %363 : vector<1x128xf32> to vector<16x128xf32>
    %365 = arith.mulf %362, %364 : vector<16x128xf32>
    %366 = vector.shape_cast %344 : vector<128xf32> to vector<1x128xf32>
    %367 = vector.broadcast %366 : vector<1x128xf32> to vector<16x128xf32>
    %368 = arith.addf %365, %367 : vector<16x128xf32>
    %369 = arith.truncf %368 : vector<16x128xf32> to vector<16x128xbf16>
    %c12 = arith.constant 12 : index
    %c0_101 = arith.constant 0 : index
    %c0_102 = arith.constant 0 : index
    %370 = vector.load %arg2[%c12, %c0_101, %c0_102] : memref<18x128x128xbf16, #tpu.memory_space<vmem>>, vector<1x128x128xbf16>
    %371 = vector.shape_cast %370 : vector<1x128x128xbf16> to vector<128x128xbf16>
    %cst_103 = arith.constant dense<0.000000e+00> : vector<16x128xf32>
    %372 = tpu.matmul %369, %371, %cst_103 {dimension_numbers = #tpu.dot_dimension_numbers<[1], [0], [0], [1], [0, 0, 1, 1], [], []>} : vector<16x128xbf16>, vector<128x128xbf16>, vector<16x128xf32> -> vector<16x128xf32>
    %373 = vector.extract_strided_slice %1 {offsets = [12, 0], sizes = [1, 128], strides = [1, 1]} : vector<18x128xf32> to vector<1x128xf32>
    %374 = vector.shape_cast %373 : vector<1x128xf32> to vector<128xf32>
    %375 = vector.shape_cast %374 : vector<128xf32> to vector<1x128xf32>
    %376 = vector.broadcast %375 : vector<1x128xf32> to vector<16x128xf32>
    %377 = arith.addf %372, %376 : vector<16x128xf32>
    %378 = arith.truncf %377 : vector<16x128xf32> to vector<16x128xbf16>
    %379 = arith.extf %378 : vector<16x128xbf16> to vector<16x128xf32>
    %380 = vector.extract_strided_slice %3 {offsets = [12, 0, 0], sizes = [1, 128, 32], strides = [1, 1, 1]} : vector<18x128x32xbf16> to vector<1x128x32xbf16>
    %381 = vector.shape_cast %380 : vector<1x128x32xbf16> to vector<128x32xbf16>
    %cst_104 = arith.constant dense<0.000000e+00> : vector<16x32xf32>
    %382 = tpu.matmul %369, %381, %cst_104 {dimension_numbers = #tpu.dot_dimension_numbers<[1], [0], [0], [1], [0, 0, 1, 1], [], []>} : vector<16x128xbf16>, vector<128x32xbf16>, vector<16x32xf32> -> vector<16x32xf32>
    %383 = arith.truncf %382 : vector<16x32xf32> to vector<16x32xbf16>
    %384 = vector.extract_strided_slice %5 {offsets = [12, 0, 0], sizes = [1, 32, 128], strides = [1, 1, 1]} : vector<18x32x128xbf16> to vector<1x32x128xbf16>
    %385 = vector.shape_cast %384 : vector<1x32x128xbf16> to vector<32x128xbf16>
    %cst_105 = arith.constant dense<0.000000e+00> : vector<16x128xf32>
    %386 = tpu.matmul %383, %385, %cst_105 {dimension_numbers = #tpu.dot_dimension_numbers<[1], [0], [0], [1], [0, 0, 1, 1], [], []>} : vector<16x32xbf16>, vector<32x128xbf16>, vector<16x128xf32> -> vector<16x128xf32>
    %387 = arith.addf %379, %386 : vector<16x128xf32>
    %cst_106 = arith.constant 0.000000e+00 : f32
    %388 = vector.broadcast %cst_106 : f32 to vector<16x128xf32>
    %389 = arith.maximumf %387, %388 : vector<16x128xf32>
    %390 = arith.truncf %389 : vector<16x128xf32> to vector<16x128xbf16>
    %c13 = arith.constant 13 : index
    %c0_107 = arith.constant 0 : index
    %c0_108 = arith.constant 0 : index
    %391 = vector.load %arg2[%c13, %c0_107, %c0_108] : memref<18x128x128xbf16, #tpu.memory_space<vmem>>, vector<1x128x128xbf16>
    %392 = vector.shape_cast %391 : vector<1x128x128xbf16> to vector<128x128xbf16>
    %cst_109 = arith.constant dense<0.000000e+00> : vector<16x128xf32>
    %393 = tpu.matmul %390, %392, %cst_109 {dimension_numbers = #tpu.dot_dimension_numbers<[1], [0], [0], [1], [0, 0, 1, 1], [], []>} : vector<16x128xbf16>, vector<128x128xbf16>, vector<16x128xf32> -> vector<16x128xf32>
    %394 = vector.extract_strided_slice %1 {offsets = [13, 0], sizes = [1, 128], strides = [1, 1]} : vector<18x128xf32> to vector<1x128xf32>
    %395 = vector.shape_cast %394 : vector<1x128xf32> to vector<128xf32>
    %396 = vector.shape_cast %395 : vector<128xf32> to vector<1x128xf32>
    %397 = vector.broadcast %396 : vector<1x128xf32> to vector<16x128xf32>
    %398 = arith.addf %393, %397 : vector<16x128xf32>
    %399 = arith.truncf %398 : vector<16x128xf32> to vector<16x128xbf16>
    %400 = arith.extf %399 : vector<16x128xbf16> to vector<16x128xf32>
    %401 = vector.extract_strided_slice %3 {offsets = [13, 0, 0], sizes = [1, 128, 32], strides = [1, 1, 1]} : vector<18x128x32xbf16> to vector<1x128x32xbf16>
    %402 = vector.shape_cast %401 : vector<1x128x32xbf16> to vector<128x32xbf16>
    %cst_110 = arith.constant dense<0.000000e+00> : vector<16x32xf32>
    %403 = tpu.matmul %390, %402, %cst_110 {dimension_numbers = #tpu.dot_dimension_numbers<[1], [0], [0], [1], [0, 0, 1, 1], [], []>} : vector<16x128xbf16>, vector<128x32xbf16>, vector<16x32xf32> -> vector<16x32xf32>
    %404 = arith.truncf %403 : vector<16x32xf32> to vector<16x32xbf16>
    %405 = vector.extract_strided_slice %5 {offsets = [13, 0, 0], sizes = [1, 32, 128], strides = [1, 1, 1]} : vector<18x32x128xbf16> to vector<1x32x128xbf16>
    %406 = vector.shape_cast %405 : vector<1x32x128xbf16> to vector<32x128xbf16>
    %cst_111 = arith.constant dense<0.000000e+00> : vector<16x128xf32>
    %407 = tpu.matmul %404, %406, %cst_111 {dimension_numbers = #tpu.dot_dimension_numbers<[1], [0], [0], [1], [0, 0, 1, 1], [], []>} : vector<16x32xbf16>, vector<32x128xbf16>, vector<16x128xf32> -> vector<16x128xf32>
    %408 = arith.addf %400, %407 : vector<16x128xf32>
    %cst_112 = arith.constant 0.000000e+00 : f32
    %409 = vector.broadcast %cst_112 : f32 to vector<16x128xf32>
    %410 = arith.maximumf %408, %409 : vector<16x128xf32>
    %411 = arith.truncf %410 : vector<16x128xf32> to vector<16x128xbf16>
    %c14 = arith.constant 14 : index
    %c0_113 = arith.constant 0 : index
    %c0_114 = arith.constant 0 : index
    %412 = vector.load %arg2[%c14, %c0_113, %c0_114] : memref<18x128x128xbf16, #tpu.memory_space<vmem>>, vector<1x128x128xbf16>
    %413 = vector.shape_cast %412 : vector<1x128x128xbf16> to vector<128x128xbf16>
    %cst_115 = arith.constant dense<0.000000e+00> : vector<16x128xf32>
    %414 = tpu.matmul %411, %413, %cst_115 {dimension_numbers = #tpu.dot_dimension_numbers<[1], [0], [0], [1], [0, 0, 1, 1], [], []>} : vector<16x128xbf16>, vector<128x128xbf16>, vector<16x128xf32> -> vector<16x128xf32>
    %415 = vector.extract_strided_slice %1 {offsets = [14, 0], sizes = [1, 128], strides = [1, 1]} : vector<18x128xf32> to vector<1x128xf32>
    %416 = vector.shape_cast %415 : vector<1x128xf32> to vector<128xf32>
    %417 = vector.shape_cast %416 : vector<128xf32> to vector<1x128xf32>
    %418 = vector.broadcast %417 : vector<1x128xf32> to vector<16x128xf32>
    %419 = arith.addf %414, %418 : vector<16x128xf32>
    %420 = arith.truncf %419 : vector<16x128xf32> to vector<16x128xbf16>
    %421 = arith.extf %420 : vector<16x128xbf16> to vector<16x128xf32>
    %422 = vector.extract_strided_slice %3 {offsets = [14, 0, 0], sizes = [1, 128, 32], strides = [1, 1, 1]} : vector<18x128x32xbf16> to vector<1x128x32xbf16>
    %423 = vector.shape_cast %422 : vector<1x128x32xbf16> to vector<128x32xbf16>
    %cst_116 = arith.constant dense<0.000000e+00> : vector<16x32xf32>
    %424 = tpu.matmul %411, %423, %cst_116 {dimension_numbers = #tpu.dot_dimension_numbers<[1], [0], [0], [1], [0, 0, 1, 1], [], []>} : vector<16x128xbf16>, vector<128x32xbf16>, vector<16x32xf32> -> vector<16x32xf32>
    %425 = arith.truncf %424 : vector<16x32xf32> to vector<16x32xbf16>
    %426 = vector.extract_strided_slice %5 {offsets = [14, 0, 0], sizes = [1, 32, 128], strides = [1, 1, 1]} : vector<18x32x128xbf16> to vector<1x32x128xbf16>
    %427 = vector.shape_cast %426 : vector<1x32x128xbf16> to vector<32x128xbf16>
    %cst_117 = arith.constant dense<0.000000e+00> : vector<16x128xf32>
    %428 = tpu.matmul %425, %427, %cst_117 {dimension_numbers = #tpu.dot_dimension_numbers<[1], [0], [0], [1], [0, 0, 1, 1], [], []>} : vector<16x32xbf16>, vector<32x128xbf16>, vector<16x128xf32> -> vector<16x128xf32>
    %429 = arith.addf %421, %428 : vector<16x128xf32>
    %430 = arith.addf %429, %368 : vector<16x128xf32>
    %431 = vector.extract_strided_slice %6 {offsets = [4, 0], sizes = [1, 128], strides = [1, 1]} : vector<5x128xf32> to vector<1x128xf32>
    %432 = vector.shape_cast %431 : vector<1x128xf32> to vector<128xf32>
    %433 = vector.extract_strided_slice %7 {offsets = [4, 0], sizes = [1, 128], strides = [1, 1]} : vector<5x128xf32> to vector<1x128xf32>
    %434 = vector.shape_cast %433 : vector<1x128xf32> to vector<128xf32>
    %cst_118 = arith.constant dense<0.000000e+00> : vector<16xf32>
    %435 = vector.multi_reduction <add>, %430, %cst_118 [1] : vector<16x128xf32> to vector<16xf32>
    %436 = vector.shape_cast %435 : vector<16xf32> to vector<16x1xf32>
    %cst_119 = arith.constant 1.280000e+02 : f32
    %437 = vector.broadcast %cst_119 : f32 to vector<16x1xf32>
    %438 = arith.divf %436, %437 : vector<16x1xf32>
    %439 = vector.broadcast %438 : vector<16x1xf32> to vector<16x128xf32>
    %440 = arith.subf %430, %439 : vector<16x128xf32>
    %441 = arith.mulf %440, %440 : vector<16x128xf32>
    %cst_120 = arith.constant dense<0.000000e+00> : vector<16xf32>
    %442 = vector.multi_reduction <add>, %441, %cst_120 [1] : vector<16x128xf32> to vector<16xf32>
    %443 = vector.shape_cast %442 : vector<16xf32> to vector<16x1xf32>
    %cst_121 = arith.constant 1.280000e+02 : f32
    %444 = vector.broadcast %cst_121 : f32 to vector<16x1xf32>
    %445 = arith.divf %443, %444 : vector<16x1xf32>
    %446 = vector.broadcast %438 : vector<16x1xf32> to vector<16x128xf32>
    %447 = arith.subf %430, %446 : vector<16x128xf32>
    %cst_122 = arith.constant 9.99999974E-6 : f32
    %448 = vector.broadcast %cst_122 : f32 to vector<16x1xf32>
    %449 = arith.addf %445, %448 : vector<16x1xf32>
    %450 = math.rsqrt %449 : vector<16x1xf32>
    %451 = vector.broadcast %450 : vector<16x1xf32> to vector<16x128xf32>
    %452 = arith.mulf %447, %451 : vector<16x128xf32>
    %453 = vector.shape_cast %432 : vector<128xf32> to vector<1x128xf32>
    %454 = vector.broadcast %453 : vector<1x128xf32> to vector<16x128xf32>
    %455 = arith.mulf %452, %454 : vector<16x128xf32>
    %456 = vector.shape_cast %434 : vector<128xf32> to vector<1x128xf32>
    %457 = vector.broadcast %456 : vector<1x128xf32> to vector<16x128xf32>
    %458 = arith.addf %455, %457 : vector<16x128xf32>
    %459 = arith.truncf %458 : vector<16x128xf32> to vector<16x128xbf16>
    %c15 = arith.constant 15 : index
    %c0_123 = arith.constant 0 : index
    %c0_124 = arith.constant 0 : index
    %460 = vector.load %arg2[%c15, %c0_123, %c0_124] : memref<18x128x128xbf16, #tpu.memory_space<vmem>>, vector<1x128x128xbf16>
    %461 = vector.shape_cast %460 : vector<1x128x128xbf16> to vector<128x128xbf16>
    %cst_125 = arith.constant dense<0.000000e+00> : vector<16x128xf32>
    %462 = tpu.matmul %459, %461, %cst_125 {dimension_numbers = #tpu.dot_dimension_numbers<[1], [0], [0], [1], [0, 0, 1, 1], [], []>} : vector<16x128xbf16>, vector<128x128xbf16>, vector<16x128xf32> -> vector<16x128xf32>
    %463 = vector.extract_strided_slice %1 {offsets = [15, 0], sizes = [1, 128], strides = [1, 1]} : vector<18x128xf32> to vector<1x128xf32>
    %464 = vector.shape_cast %463 : vector<1x128xf32> to vector<128xf32>
    %465 = vector.shape_cast %464 : vector<128xf32> to vector<1x128xf32>
    %466 = vector.broadcast %465 : vector<1x128xf32> to vector<16x128xf32>
    %467 = arith.addf %462, %466 : vector<16x128xf32>
    %468 = arith.truncf %467 : vector<16x128xf32> to vector<16x128xbf16>
    %469 = arith.extf %468 : vector<16x128xbf16> to vector<16x128xf32>
    %470 = vector.extract_strided_slice %3 {offsets = [15, 0, 0], sizes = [1, 128, 32], strides = [1, 1, 1]} : vector<18x128x32xbf16> to vector<1x128x32xbf16>
    %471 = vector.shape_cast %470 : vector<1x128x32xbf16> to vector<128x32xbf16>
    %cst_126 = arith.constant dense<0.000000e+00> : vector<16x32xf32>
    %472 = tpu.matmul %459, %471, %cst_126 {dimension_numbers = #tpu.dot_dimension_numbers<[1], [0], [0], [1], [0, 0, 1, 1], [], []>} : vector<16x128xbf16>, vector<128x32xbf16>, vector<16x32xf32> -> vector<16x32xf32>
    %473 = arith.truncf %472 : vector<16x32xf32> to vector<16x32xbf16>
    %474 = vector.extract_strided_slice %5 {offsets = [15, 0, 0], sizes = [1, 32, 128], strides = [1, 1, 1]} : vector<18x32x128xbf16> to vector<1x32x128xbf16>
    %475 = vector.shape_cast %474 : vector<1x32x128xbf16> to vector<32x128xbf16>
    %cst_127 = arith.constant dense<0.000000e+00> : vector<16x128xf32>
    %476 = tpu.matmul %473, %475, %cst_127 {dimension_numbers = #tpu.dot_dimension_numbers<[1], [0], [0], [1], [0, 0, 1, 1], [], []>} : vector<16x32xbf16>, vector<32x128xbf16>, vector<16x128xf32> -> vector<16x128xf32>
    %477 = arith.addf %469, %476 : vector<16x128xf32>
    %cst_128 = arith.constant 0.000000e+00 : f32
    %478 = vector.broadcast %cst_128 : f32 to vector<16x128xf32>
    %479 = arith.maximumf %477, %478 : vector<16x128xf32>
    %480 = arith.truncf %479 : vector<16x128xf32> to vector<16x128xbf16>
    %c16 = arith.constant 16 : index
    %c0_129 = arith.constant 0 : index
    %c0_130 = arith.constant 0 : index
    %481 = vector.load %arg2[%c16, %c0_129, %c0_130] : memref<18x128x128xbf16, #tpu.memory_space<vmem>>, vector<1x128x128xbf16>
    %482 = vector.shape_cast %481 : vector<1x128x128xbf16> to vector<128x128xbf16>
    %cst_131 = arith.constant dense<0.000000e+00> : vector<16x128xf32>
    %483 = tpu.matmul %480, %482, %cst_131 {dimension_numbers = #tpu.dot_dimension_numbers<[1], [0], [0], [1], [0, 0, 1, 1], [], []>} : vector<16x128xbf16>, vector<128x128xbf16>, vector<16x128xf32> -> vector<16x128xf32>
    %484 = vector.extract_strided_slice %1 {offsets = [16, 0], sizes = [1, 128], strides = [1, 1]} : vector<18x128xf32> to vector<1x128xf32>
    %485 = vector.shape_cast %484 : vector<1x128xf32> to vector<128xf32>
    %486 = vector.shape_cast %485 : vector<128xf32> to vector<1x128xf32>
    %487 = vector.broadcast %486 : vector<1x128xf32> to vector<16x128xf32>
    %488 = arith.addf %483, %487 : vector<16x128xf32>
    %489 = arith.truncf %488 : vector<16x128xf32> to vector<16x128xbf16>
    %490 = arith.extf %489 : vector<16x128xbf16> to vector<16x128xf32>
    %491 = vector.extract_strided_slice %3 {offsets = [16, 0, 0], sizes = [1, 128, 32], strides = [1, 1, 1]} : vector<18x128x32xbf16> to vector<1x128x32xbf16>
    %492 = vector.shape_cast %491 : vector<1x128x32xbf16> to vector<128x32xbf16>
    %cst_132 = arith.constant dense<0.000000e+00> : vector<16x32xf32>
    %493 = tpu.matmul %480, %492, %cst_132 {dimension_numbers = #tpu.dot_dimension_numbers<[1], [0], [0], [1], [0, 0, 1, 1], [], []>} : vector<16x128xbf16>, vector<128x32xbf16>, vector<16x32xf32> -> vector<16x32xf32>
    %494 = arith.truncf %493 : vector<16x32xf32> to vector<16x32xbf16>
    %495 = vector.extract_strided_slice %5 {offsets = [16, 0, 0], sizes = [1, 32, 128], strides = [1, 1, 1]} : vector<18x32x128xbf16> to vector<1x32x128xbf16>
    %496 = vector.shape_cast %495 : vector<1x32x128xbf16> to vector<32x128xbf16>
    %cst_133 = arith.constant dense<0.000000e+00> : vector<16x128xf32>
    %497 = tpu.matmul %494, %496, %cst_133 {dimension_numbers = #tpu.dot_dimension_numbers<[1], [0], [0], [1], [0, 0, 1, 1], [], []>} : vector<16x32xbf16>, vector<32x128xbf16>, vector<16x128xf32> -> vector<16x128xf32>
    %498 = arith.addf %490, %497 : vector<16x128xf32>
    %cst_134 = arith.constant 0.000000e+00 : f32
    %499 = vector.broadcast %cst_134 : f32 to vector<16x128xf32>
    %500 = arith.maximumf %498, %499 : vector<16x128xf32>
    %501 = arith.truncf %500 : vector<16x128xf32> to vector<16x128xbf16>
    %c17 = arith.constant 17 : index
    %c0_135 = arith.constant 0 : index
    %c0_136 = arith.constant 0 : index
    %502 = vector.load %arg2[%c17, %c0_135, %c0_136] : memref<18x128x128xbf16, #tpu.memory_space<vmem>>, vector<1x128x128xbf16>
    %503 = vector.shape_cast %502 : vector<1x128x128xbf16> to vector<128x128xbf16>
    %cst_137 = arith.constant dense<0.000000e+00> : vector<16x128xf32>
    %504 = tpu.matmul %501, %503, %cst_137 {dimension_numbers = #tpu.dot_dimension_numbers<[1], [0], [0], [1], [0, 0, 1, 1], [], []>} : vector<16x128xbf16>, vector<128x128xbf16>, vector<16x128xf32> -> vector<16x128xf32>
    %505 = vector.extract_strided_slice %1 {offsets = [17, 0], sizes = [1, 128], strides = [1, 1]} : vector<18x128xf32> to vector<1x128xf32>
    %506 = vector.shape_cast %505 : vector<1x128xf32> to vector<128xf32>
    %507 = vector.shape_cast %506 : vector<128xf32> to vector<1x128xf32>
    %508 = vector.broadcast %507 : vector<1x128xf32> to vector<16x128xf32>
    %509 = arith.addf %504, %508 : vector<16x128xf32>
    %510 = arith.truncf %509 : vector<16x128xf32> to vector<16x128xbf16>
    %511 = arith.extf %510 : vector<16x128xbf16> to vector<16x128xf32>
    %512 = vector.extract_strided_slice %3 {offsets = [17, 0, 0], sizes = [1, 128, 32], strides = [1, 1, 1]} : vector<18x128x32xbf16> to vector<1x128x32xbf16>
    %513 = vector.shape_cast %512 : vector<1x128x32xbf16> to vector<128x32xbf16>
    %cst_138 = arith.constant dense<0.000000e+00> : vector<16x32xf32>
    %514 = tpu.matmul %501, %513, %cst_138 {dimension_numbers = #tpu.dot_dimension_numbers<[1], [0], [0], [1], [0, 0, 1, 1], [], []>} : vector<16x128xbf16>, vector<128x32xbf16>, vector<16x32xf32> -> vector<16x32xf32>
    %515 = arith.truncf %514 : vector<16x32xf32> to vector<16x32xbf16>
    %516 = vector.extract_strided_slice %5 {offsets = [17, 0, 0], sizes = [1, 32, 128], strides = [1, 1, 1]} : vector<18x32x128xbf16> to vector<1x32x128xbf16>
    %517 = vector.shape_cast %516 : vector<1x32x128xbf16> to vector<32x128xbf16>
    %cst_139 = arith.constant dense<0.000000e+00> : vector<16x128xf32>
    %518 = tpu.matmul %515, %517, %cst_139 {dimension_numbers = #tpu.dot_dimension_numbers<[1], [0], [0], [1], [0, 0, 1, 1], [], []>} : vector<16x32xbf16>, vector<32x128xbf16>, vector<16x128xf32> -> vector<16x128xf32>
    %519 = arith.addf %511, %518 : vector<16x128xf32>
    %520 = arith.addf %519, %458 : vector<16x128xf32>
    %c0_140 = arith.constant 0 : index
    %c0_141 = arith.constant 0 : index
    %521 = vector.load %arg8[%c0_140, %c0_141] : memref<16x128xf32, #tpu.memory_space<vmem>>, vector<16x128xf32>
    tpu.vector_store %arg8[%c0_140, %c0_141], %520 {strides = array<i32>} : memref<16x128xf32, #tpu.memory_space<vmem>>, vector<16x128xf32>,
    return
  }
  func.func @transform_0(%arg0: i32) -> (i32, i32) {
    %c0_i32 = arith.constant 0 : i32
    %c0_i32_0 = arith.constant 0 : i32
    return %arg0, %c0_i32 : i32, i32
  }
  func.func @transform_1(%arg0: i32) -> (i32, i32, i32) {
    %c0_i32 = arith.constant 0 : i32
    %c0_i32_0 = arith.constant 0 : i32
    %c0_i32_1 = arith.constant 0 : i32
    %c0_i32_2 = arith.constant 0 : i32
    return %c0_i32, %c0_i32_0, %c0_i32_1 : i32, i32, i32
  }
  func.func @transform_2(%arg0: i32) -> (i32, i32) {
    %c0_i32 = arith.constant 0 : i32
    %c0_i32_0 = arith.constant 0 : i32
    %c0_i32_1 = arith.constant 0 : i32
    return %c0_i32, %c0_i32_0 : i32, i32
  }
  func.func @transform_3(%arg0: i32) -> (i32, i32, i32) {
    %c0_i32 = arith.constant 0 : i32
    %c0_i32_0 = arith.constant 0 : i32
    %c0_i32_1 = arith.constant 0 : i32
    %c0_i32_2 = arith.constant 0 : i32
    return %c0_i32, %c0_i32_0, %c0_i32_1 : i32, i32, i32
  }
  func.func @transform_4(%arg0: i32) -> (i32, i32, i32) {
    %c0_i32 = arith.constant 0 : i32
    %c0_i32_0 = arith.constant 0 : i32
    %c0_i32_1 = arith.constant 0 : i32
    %c0_i32_2 = arith.constant 0 : i32
    return %c0_i32, %c0_i32_0, %c0_i32_1 : i32, i32, i32
  }
  func.func @transform_5(%arg0: i32) -> (i32, i32) {
    %c0_i32 = arith.constant 0 : i32
    %c0_i32_0 = arith.constant 0 : i32
    %c0_i32_1 = arith.constant 0 : i32
    return %c0_i32, %c0_i32_0 : i32, i32
  }
  func.func @transform_6(%arg0: i32) -> (i32, i32) {
    %c0_i32 = arith.constant 0 : i32
    %c0_i32_0 = arith.constant 0 : i32
    %c0_i32_1 = arith.constant 0 : i32
    return %c0_i32, %c0_i32_0 : i32, i32
  }
  func.func @transform_7(%arg0: i32) -> (i32, i32) {
    %c0_i32 = arith.constant 0 : i32
    %c0_i32_0 = arith.constant 0 : i32
    return %arg0, %c0_i32 : i32, i32
  }
}

</mosaic_0001>

<llo_original>
// kernel: tpu_custom_call.1
$region0: #{tpu_custom_call.1}
  #allocation0 [shape = 'u32[]', space=smem, size = 0x4, offset = 0x4, fixed_abs, tag = 'smem constant byte address 0x4 - core index']
  #allocation1 [shape = 'u32[144,128]{1,0:T(1,128)}', space=vmem, size = 0x12000, scoped, tag = 'internal scratch']
  %s0 = inlined_call_operand.vmem [shape: f32[16,128], index: 0, kind: input, shape index: {}]
  %s1 = inlined_call_operand.vmem [shape: bf16[18,128,128], index: 1, kind: input, shape index: {}]
  %s2 = inlined_call_operand.vmem [shape: bf16[18,128], index: 2, kind: input, shape index: {}]
  %s3 = inlined_call_operand.vmem [shape: f32[18,128,32], index: 3, kind: input, shape index: {}]
  %s4 = inlined_call_operand.vmem [shape: f32[18,32,128], index: 4, kind: input, shape index: {}]
  %s5 = inlined_call_operand.vmem [shape: f32[5,128], index: 5, kind: input, shape index: {}]
  %s6 = inlined_call_operand.vmem [shape: f32[5,128], index: 6, kind: input, shape index: {}]
  %s7 = inlined_call_operand.hbm [shape: f32[16,128], index: 7, kind: output, shape index: {}]
  %s8 = sld [smem:[#allocation0]]
  $region38: #{tpu_custom_call.1} parent=0
    _
  %s10 = ssub.s32 1, %s8
  %s11 = scalar_select 0, %s10, %s8
  $region1: #{tpu_custom_call.1} parent=0
    #allocation2 [shape = 'u8[8192]{0}', space=vmem, size = 0x2000, scoped, tag = 'output window, operand 0, single buffered']
    #allocation3 [shape = 's32[1]{0}', space=sflag, size = 0x4, scoped, tag = 'scoped memory for tpu_custom_call.1']
    %12 = vsyncpa [#allocation3], 0
    // Predicated region
    $region2: #{tpu_custom_call.1} parent=1 // pred_check
      _
    $region3: #{tpu_custom_call.1} parent=1 // pred_check_branch
      %14 = sbr.rel (0) target = $region5
    $region4: #{tpu_custom_call.1} parent=1 // pred_region
      _
    $region5: #{tpu_custom_call.1} parent=1 // pred_fallthru
      _
    // Predicated region
    $region6: #{tpu_custom_call.1} parent=1 // pred_check
      _
    $region7: #{tpu_custom_call.1} parent=1 // pred_check_branch
      %16 = sbr.rel (0) target = $region9
    $region8: #{tpu_custom_call.1} parent=1 // pred_region
      _
    $region9: #{tpu_custom_call.1} parent=1 // pred_fallthru
      _
    // Predicated region
    $region10: #{tpu_custom_call.1} parent=1 // pred_check
      _
    $region11: #{tpu_custom_call.1} parent=1 // pred_check_branch
      %18 = sbr.rel (0) target = $region13
    $region12: #{tpu_custom_call.1} parent=1 // pred_region
      _
    $region13: #{tpu_custom_call.1} parent=1 // pred_fallthru
      _
    // Predicated region
    $region14: #{tpu_custom_call.1} parent=1 // pred_check
      _
    $region15: #{tpu_custom_call.1} parent=1 // pred_check_branch
      %20 = sbr.rel (0) target = $region17
    $region16: #{tpu_custom_call.1} parent=1 // pred_region
      _
    $region17: #{tpu_custom_call.1} parent=1 // pred_fallthru
      _
    // Predicated region
    $region18: #{tpu_custom_call.1} parent=1 // pred_check
      _
    $region19: #{tpu_custom_call.1} parent=1 // pred_check_branch
      %22 = sbr.rel (0) target = $region21
    $region20: #{tpu_custom_call.1} parent=1 // pred_region
      _
    $region21: #{tpu_custom_call.1} parent=1 // pred_fallthru
      _
    // Predicated region
    $region22: #{tpu_custom_call.1} parent=1 // pred_check
      _
    $region23: #{tpu_custom_call.1} parent=1 // pred_check_branch
      %24 = sbr.rel (0) target = $region25
    $region24: #{tpu_custom_call.1} parent=1 // pred_region
      _
    $region25: #{tpu_custom_call.1} parent=1 // pred_fallthru
      _
    // Predicated region
    $region26: #{tpu_custom_call.1} parent=1 // pred_check
      _
    $region27: #{tpu_custom_call.1} parent=1 // pred_check_branch
      %26 = sbr.rel (0) target = $region29
    $region28: #{tpu_custom_call.1} parent=1 // pred_region
      _
    $region29: #{tpu_custom_call.1} parent=1 // pred_fallthru
      _
    %v28 = vld [vmem:[%s2] sm:$0xf]
    %v29 = vld [vmem:[%s2 + $0x4] sm:$0xf]
    %v30 = vld [vmem:[%s2 + $0x8] sm:$0x1]
    %v31 = vunpack.c.l.bf16 %v28
    %v32 = vunpack.c.l.bf16 %v29
    %v33 = vunpack.c.l.bf16 %v30
    %v34 = vld [vmem:[%s3] sm:$0xff]
    %v35 = vld [vmem:[%s3 + $0x8] sm:$0xff]
    %v36 = vld [vmem:[%s3 + $0x10] sm:$0xff]
    %v37 = vld [vmem:[%s3 + $0x18] sm:$0xff]
    %v38 = vld [vmem:[%s3 + $0x20] sm:$0xff]
    %v39 = vld [vmem:[%s3 + $0x28] sm:$0xff]
    %v40 = vld [vmem:[%s3 + $0x30] sm:$0xff]
    %v41 = vld [vmem:[%s3 + $0x38] sm:$0xff]
    %v42 = vld [vmem:[%s3 + $0x40] sm:$0xff]
    %v43 = vld [vmem:[%s3 + $0x48] sm:$0xff]
    %v44 = vld [vmem:[%s3 + $0x50] sm:$0xff]
    %v45 = vld [vmem:[%s3 + $0x58] sm:$0xff]
    %v46 = vld [vmem:[%s3 + $0x60] sm:$0xff]
    %v47 = vld [vmem:[%s3 + $0x68] sm:$0xff]
    %v48 = vld [vmem:[%s3 + $0x70] sm:$0xff]
    %v49 = vld [vmem:[%s3 + $0x78] sm:$0xff]
    %v50 = vld [vmem:[%s3 + $0x80] sm:$0xff]
    %v51 = vld [vmem:[%s3 + $0x88] sm:$0xff]
    %v52 = vld [vmem:[%s3 + $0x90] sm:$0xff]
    %v53 = vld [vmem:[%s3 + $0x98] sm:$0xff]
    %v54 = vld [vmem:[%s3 + $0xa0] sm:$0xff]
    %v55 = vld [vmem:[%s3 + $0xa8] sm:$0xff]
    %v56 = vld [vmem:[%s3 + $0xb0] sm:$0xff]
    %v57 = vld [vmem:[%s3 + $0xb8] sm:$0xff]
    %v58 = vld [vmem:[%s3 + $0xc0] sm:$0xff]
    %v59 = vld [vmem:[%s3 + $0xc8] sm:$0xff]
    %v60 = vld [vmem:[%s3 + $0xd0] sm:$0xff]
    %v61 = vld [vmem:[%s3 + $0xd8] sm:$0xff]
    %v62 = vld [vmem:[%s3 + $0xe0] sm:$0xff]
    %v63 = vld [vmem:[%s3 + $0xe8] sm:$0xff]
    %v64 = vld [vmem:[%s3 + $0xf0] sm:$0xff]
    %v65 = vld [vmem:[%s3 + $0xf8] sm:$0xff]
    %v66 = vld [vmem:[%s3 + $0x100] sm:$0xff]
    %v67 = vld [vmem:[%s3 + $0x108] sm:$0xff]
    %v68 = vld [vmem:[%s3 + $0x110] sm:$0xff]
    %v69 = vld [vmem:[%s3 + $0x118] sm:$0xff]
    %v70 = vld [vmem:[%s3 + $0x120] sm:$0xff]
    %v71 = vld [vmem:[%s3 + $0x128] sm:$0xff]
    %v72 = vld [vmem:[%s3 + $0x130] sm:$0xff]
    %v73 = vld [vmem:[%s3 + $0x138] sm:$0xff]
    %v74 = vld [vmem:[%s3 + $0x140] sm:$0xff]
    %v75 = vld [vmem:[%s3 + $0x148] sm:$0xff]
    %v76 = vld [vmem:[%s3 + $0x150] sm:$0xff]
    %v77 = vld [vmem:[%s3 + $0x158] sm:$0xff]
    %v78 = vld [vmem:[%s3 + $0x160] sm:$0xff]
    %v79 = vld [vmem:[%s3 + $0x168] sm:$0xff]
    %v80 = vld [vmem:[%s3 + $0x170] sm:$0xff]
    %v81 = vld [vmem:[%s3 + $0x178] sm:$0xff]
    %v82 = vld [vmem:[%s3 + $0x180] sm:$0xff]
    %v83 = vld [vmem:[%s3 + $0x188] sm:$0xff]
    %v84 = vld [vmem:[%s3 + $0x190] sm:$0xff]
    %v85 = vld [vmem:[%s3 + $0x198] sm:$0xff]
    %v86 = vld [vmem:[%s3 + $0x1a0] sm:$0xff]
    %v87 = vld [vmem:[%s3 + $0x1a8] sm:$0xff]
    %v88 = vld [vmem:[%s3 + $0x1b0] sm:$0xff]
    %v89 = vld [vmem:[%s3 + $0x1b8] sm:$0xff]
    %v90 = vld [vmem:[%s3 + $0x1c0] sm:$0xff]
    %v91 = vld [vmem:[%s3 + $0x1c8] sm:$0xff]
    %v92 = vld [vmem:[%s3 + $0x1d0] sm:$0xff]
    %v93 = vld [vmem:[%s3 + $0x1d8] sm:$0xff]
    %v94 = vld [vmem:[%s3 + $0x1e0] sm:$0xff]
    %v95 = vld [vmem:[%s3 + $0x1e8] sm:$0xff]
    %v96 = vld [vmem:[%s3 + $0x1f0] sm:$0xff]
    %v97 = vld [vmem:[%s3 + $0x1f8] sm:$0xff]
    %v98 = vld [vmem:[%s3 + $0x200] sm:$0xff]
    %v99 = vld [vmem:[%s3 + $0x208] sm:$0xff]
    %v100 = vld [vmem:[%s3 + $0x210] sm:$0xff]
    %v101 = vld [vmem:[%s3 + $0x218] sm:$0xff]
    %v102 = vld [vmem:[%s3 + $0x220] sm:$0xff]
    %v103 = vld [vmem:[%s3 + $0x228] sm:$0xff]
    %v104 = vld [vmem:[%s3 + $0x230] sm:$0xff]
    %v105 = vld [vmem:[%s3 + $0x238] sm:$0xff]
    %v106 = vld [vmem:[%s3 + $0x240] sm:$0xff]
    %v107 = vld [vmem:[%s3 + $0x248] sm:$0xff]
    %v108 = vld [vmem:[%s3 + $0x250] sm:$0xff]
    %v109 = vld [vmem:[%s3 + $0x258] sm:$0xff]
    %v110 = vld [vmem:[%s3 + $0x260] sm:$0xff]
    %v111 = vld [vmem:[%s3 + $0x268] sm:$0xff]
    %v112 = vld [vmem:[%s3 + $0x270] sm:$0xff]
    %v113 = vld [vmem:[%s3 + $0x278] sm:$0xff]
    %v114 = vld [vmem:[%s3 + $0x280] sm:$0xff]
    %v115 = vld [vmem:[%s3 + $0x288] sm:$0xff]
    %v116 = vld [vmem:[%s3 + $0x290] sm:$0xff]
    %v117 = vld [vmem:[%s3 + $0x298] sm:$0xff]
    %v118 = vld [vmem:[%s3 + $0x2a0] sm:$0xff]
    %v119 = vld [vmem:[%s3 + $0x2a8] sm:$0xff]
    %v120 = vld [vmem:[%s3 + $0x2b0] sm:$0xff]
    %v121 = vld [vmem:[%s3 + $0x2b8] sm:$0xff]
    %v122 = vld [vmem:[%s3 + $0x2c0] sm:$0xff]
    %v123 = vld [vmem:[%s3 + $0x2c8] sm:$0xff]
    %v124 = vld [vmem:[%s3 + $0x2d0] sm:$0xff]
    %v125 = vld [vmem:[%s3 + $0x2d8] sm:$0xff]
    %v126 = vld [vmem:[%s3 + $0x2e0] sm:$0xff]
    %v127 = vld [vmem:[%s3 + $0x2e8] sm:$0xff]
    %v128 = vld [vmem:[%s3 + $0x2f0] sm:$0xff]
    %v129 = vld [vmem:[%s3 + $0x2f8] sm:$0xff]
    %v130 = vld [vmem:[%s3 + $0x300] sm:$0xff]
    %v131 = vld [vmem:[%s3 + $0x308] sm:$0xff]
    %v132 = vld [vmem:[%s3 + $0x310] sm:$0xff]
    %v133 = vld [vmem:[%s3 + $0x318] sm:$0xff]
    %v134 = vld [vmem:[%s3 + $0x320] sm:$0xff]
    %v135 = vld [vmem:[%s3 + $0x328] sm:$0xff]
    %v136 = vld [vmem:[%s3 + $0x330] sm:$0xff]
    %v137 = vld [vmem:[%s3 + $0x338] sm:$0xff]
    %v138 = vld [vmem:[%s3 + $0x340] sm:$0xff]
    %v139 = vld [vmem:[%s3 + $0x348] sm:$0xff]
    %v140 = vld [vmem:[%s3 + $0x350] sm:$0xff]
    %v141 = vld [vmem:[%s3 + $0x358] sm:$0xff]
    %v142 = vld [vmem:[%s3 + $0x360] sm:$0xff]
    %v143 = vld [vmem:[%s3 + $0x368] sm:$0xff]
    %v144 = vld [vmem:[%s3 + $0x370] sm:$0xff]
    %v145 = vld [vmem:[%s3 + $0x378] sm:$0xff]
    %v146 = vld [vmem:[%s3 + $0x380] sm:$0xff]
    %v147 = vld [vmem:[%s3 + $0x388] sm:$0xff]
    %v148 = vld [vmem:[%s3 + $0x390] sm:$0xff]
    %v149 = vld [vmem:[%s3 + $0x398] sm:$0xff]
    %v150 = vld [vmem:[%s3 + $0x3a0] sm:$0xff]
    %v151 = vld [vmem:[%s3 + $0x3a8] sm:$0xff]
    %v152 = vld [vmem:[%s3 + $0x3b0] sm:$0xff]
    %v153 = vld [vmem:[%s3 + $0x3b8] sm:$0xff]
    %v154 = vld [vmem:[%s3 + $0x3c0] sm:$0xff]
    %v155 = vld [vmem:[%s3 + $0x3c8] sm:$0xff]
    %v156 = vld [vmem:[%s3 + $0x3d0] sm:$0xff]
    %v157 = vld [vmem:[%s3 + $0x3d8] sm:$0xff]
    %v158 = vld [vmem:[%s3 + $0x3e0] sm:$0xff]
    %v159 = vld [vmem:[%s3 + $0x3e8] sm:$0xff]
    %v160 = vld [vmem:[%s3 + $0x3f0] sm:$0xff]
    %v161 = vld [vmem:[%s3 + $0x3f8] sm:$0xff]
    %v162 = vld [vmem:[%s3 + $0x400] sm:$0xff]
    %v163 = vld [vmem:[%s3 + $0x408] sm:$0xff]
    %v164 = vld [vmem:[%s3 + $0x410] sm:$0xff]
    %v165 = vld [vmem:[%s3 + $0x418] sm:$0xff]
    %v166 = vld [vmem:[%s3 + $0x420] sm:$0xff]
    %v167 = vld [vmem:[%s3 + $0x428] sm:$0xff]
    %v168 = vld [vmem:[%s3 + $0x430] sm:$0xff]
    %v169 = vld [vmem:[%s3 + $0x438] sm:$0xff]
    %v170 = vld [vmem:[%s3 + $0x440] sm:$0xff]
    %v171 = vld [vmem:[%s3 + $0x448] sm:$0xff]
    %v172 = vld [vmem:[%s3 + $0x450] sm:$0xff]
    %v173 = vld [vmem:[%s3 + $0x458] sm:$0xff]
    %v174 = vld [vmem:[%s3 + $0x460] sm:$0xff]
    %v175 = vld [vmem:[%s3 + $0x468] sm:$0xff]
    %v176 = vld [vmem:[%s3 + $0x470] sm:$0xff]
    %v177 = vld [vmem:[%s3 + $0x478] sm:$0xff]
    %v178 = vld [vmem:[%s3 + $0x480] sm:$0xff]
    %v179 = vld [vmem:[%s3 + $0x488] sm:$0xff]
    %v180 = vld [vmem:[%s3 + $0x490] sm:$0xff]
    %v181 = vld [vmem:[%s3 + $0x498] sm:$0xff]
    %v182 = vld [vmem:[%s3 + $0x4a0] sm:$0xff]
    %v183 = vld [vmem:[%s3 + $0x4a8] sm:$0xff]
    %v184 = vld [vmem:[%s3 + $0x4b0] sm:$0xff]
    %v185 = vld [vmem:[%s3 + $0x4b8] sm:$0xff]
    %v186 = vld [vmem:[%s3 + $0x4c0] sm:$0xff]
    %v187 = vld [vmem:[%s3 + $0x4c8] sm:$0xff]
    %v188 = vld [vmem:[%s3 + $0x4d0] sm:$0xff]
    %v189 = vld [vmem:[%s3 + $0x4d8] sm:$0xff]
    %v190 = vld [vmem:[%s3 + $0x4e0] sm:$0xff]
    %v191 = vld [vmem:[%s3 + $0x4e8] sm:$0xff]
    %v192 = vld [vmem:[%s3 + $0x4f0] sm:$0xff]
    %v193 = vld [vmem:[%s3 + $0x4f8] sm:$0xff]
    %v194 = vld [vmem:[%s3 + $0x500] sm:$0xff]
    %v195 = vld [vmem:[%s3 + $0x508] sm:$0xff]
    %v196 = vld [vmem:[%s3 + $0x510] sm:$0xff]
    %v197 = vld [vmem:[%s3 + $0x518] sm:$0xff]
    %v198 = vld [vmem:[%s3 + $0x520] sm:$0xff]
    %v199 = vld [vmem:[%s3 + $0x528] sm:$0xff]
    %v200 = vld [vmem:[%s3 + $0x530] sm:$0xff]
    %v201 = vld [vmem:[%s3 + $0x538] sm:$0xff]
    %v202 = vld [vmem:[%s3 + $0x540] sm:$0xff]
    %v203 = vld [vmem:[%s3 + $0x548] sm:$0xff]
    %v204 = vld [vmem:[%s3 + $0x550] sm:$0xff]
    %v205 = vld [vmem:[%s3 + $0x558] sm:$0xff]
    %v206 = vld [vmem:[%s3 + $0x560] sm:$0xff]
    %v207 = vld [vmem:[%s3 + $0x568] sm:$0xff]
    %v208 = vld [vmem:[%s3 + $0x570] sm:$0xff]
    %v209 = vld [vmem:[%s3 + $0x578] sm:$0xff]
    %v210 = vld [vmem:[%s3 + $0x580] sm:$0xff]
    %v211 = vld [vmem:[%s3 + $0x588] sm:$0xff]
    %v212 = vld [vmem:[%s3 + $0x590] sm:$0xff]
    %v213 = vld [vmem:[%s3 + $0x598] sm:$0xff]
    %v214 = vld [vmem:[%s3 + $0x5a0] sm:$0xff]
    %v215 = vld [vmem:[%s3 + $0x5a8] sm:$0xff]
    %v216 = vld [vmem:[%s3 + $0x5b0] sm:$0xff]
    %v217 = vld [vmem:[%s3 + $0x5b8] sm:$0xff]
    %v218 = vld [vmem:[%s3 + $0x5c0] sm:$0xff]
    %v219 = vld [vmem:[%s3 + $0x5c8] sm:$0xff]
    %v220 = vld [vmem:[%s3 + $0x5d0] sm:$0xff]
    %v221 = vld [vmem:[%s3 + $0x5d8] sm:$0xff]
    %v222 = vld [vmem:[%s3 + $0x5e0] sm:$0xff]
    %v223 = vld [vmem:[%s3 + $0x5e8] sm:$0xff]
    %v224 = vld [vmem:[%s3 + $0x5f0] sm:$0xff]
    %v225 = vld [vmem:[%s3 + $0x5f8] sm:$0xff]
    %v226 = vld [vmem:[%s3 + $0x600] sm:$0xff]
    %v227 = vld [vmem:[%s3 + $0x608] sm:$0xff]
    %v228 = vld [vmem:[%s3 + $0x610] sm:$0xff]
    %v229 = vld [vmem:[%s3 + $0x618] sm:$0xff]
    %v230 = vld [vmem:[%s3 + $0x620] sm:$0xff]
    %v231 = vld [vmem:[%s3 + $0x628] sm:$0xff]
    %v232 = vld [vmem:[%s3 + $0x630] sm:$0xff]
    %v233 = vld [vmem:[%s3 + $0x638] sm:$0xff]
    %v234 = vld [vmem:[%s3 + $0x640] sm:$0xff]
    %v235 = vld [vmem:[%s3 + $0x648] sm:$0xff]
    %v236 = vld [vmem:[%s3 + $0x650] sm:$0xff]
    %v237 = vld [vmem:[%s3 + $0x658] sm:$0xff]
    %v238 = vld [vmem:[%s3 + $0x660] sm:$0xff]
    %v239 = vld [vmem:[%s3 + $0x668] sm:$0xff]
    %v240 = vld [vmem:[%s3 + $0x670] sm:$0xff]
    %v241 = vld [vmem:[%s3 + $0x678] sm:$0xff]
    %v242 = vld [vmem:[%s3 + $0x680] sm:$0xff]
    %v243 = vld [vmem:[%s3 + $0x688] sm:$0xff]
    %v244 = vld [vmem:[%s3 + $0x690] sm:$0xff]
    %v245 = vld [vmem:[%s3 + $0x698] sm:$0xff]
    %v246 = vld [vmem:[%s3 + $0x6a0] sm:$0xff]
    %v247 = vld [vmem:[%s3 + $0x6a8] sm:$0xff]
    %v248 = vld [vmem:[%s3 + $0x6b0] sm:$0xff]
    %v249 = vld [vmem:[%s3 + $0x6b8] sm:$0xff]
    %v250 = vld [vmem:[%s3 + $0x6c0] sm:$0xff]
    %v251 = vld [vmem:[%s3 + $0x6c8] sm:$0xff]
    %v252 = vld [vmem:[%s3 + $0x6d0] sm:$0xff]
    %v253 = vld [vmem:[%s3 + $0x6d8] sm:$0xff]
    %v254 = vld [vmem:[%s3 + $0x6e0] sm:$0xff]
    %v255 = vld [vmem:[%s3 + $0x6e8] sm:$0xff]
    %v256 = vld [vmem:[%s3 + $0x6f0] sm:$0xff]
    %v257 = vld [vmem:[%s3 + $0x6f8] sm:$0xff]
    %v258 = vld [vmem:[%s3 + $0x700] sm:$0xff]
    %v259 = vld [vmem:[%s3 + $0x708] sm:$0xff]
    %v260 = vld [vmem:[%s3 + $0x710] sm:$0xff]
    %v261 = vld [vmem:[%s3 + $0x718] sm:$0xff]
    %v262 = vld [vmem:[%s3 + $0x720] sm:$0xff]
    %v263 = vld [vmem:[%s3 + $0x728] sm:$0xff]
    %v264 = vld [vmem:[%s3 + $0x730] sm:$0xff]
    %v265 = vld [vmem:[%s3 + $0x738] sm:$0xff]
    %v266 = vld [vmem:[%s3 + $0x740] sm:$0xff]
    %v267 = vld [vmem:[%s3 + $0x748] sm:$0xff]
    %v268 = vld [vmem:[%s3 + $0x750] sm:$0xff]
    %v269 = vld [vmem:[%s3 + $0x758] sm:$0xff]
    %v270 = vld [vmem:[%s3 + $0x760] sm:$0xff]
    %v271 = vld [vmem:[%s3 + $0x768] sm:$0xff]
    %v272 = vld [vmem:[%s3 + $0x770] sm:$0xff]
    %v273 = vld [vmem:[%s3 + $0x778] sm:$0xff]
    %v274 = vld [vmem:[%s3 + $0x780] sm:$0xff]
    %v275 = vld [vmem:[%s3 + $0x788] sm:$0xff]
    %v276 = vld [vmem:[%s3 + $0x790] sm:$0xff]
    %v277 = vld [vmem:[%s3 + $0x798] sm:$0xff]
    %v278 = vld [vmem:[%s3 + $0x7a0] sm:$0xff]
    %v279 = vld [vmem:[%s3 + $0x7a8] sm:$0xff]
    %v280 = vld [vmem:[%s3 + $0x7b0] sm:$0xff]
    %v281 = vld [vmem:[%s3 + $0x7b8] sm:$0xff]
    %v282 = vld [vmem:[%s3 + $0x7c0] sm:$0xff]
    %v283 = vld [vmem:[%s3 + $0x7c8] sm:$0xff]
    %v284 = vld [vmem:[%s3 + $0x7d0] sm:$0xff]
    %v285 = vld [vmem:[%s3 + $0x7d8] sm:$0xff]
    %v286 = vld [vmem:[%s3 + $0x7e0] sm:$0xff]
    %v287 = vld [vmem:[%s3 + $0x7e8] sm:$0xff]
    %v288 = vld [vmem:[%s3 + $0x7f0] sm:$0xff]
    %v289 = vld [vmem:[%s3 + $0x7f8] sm:$0xff]
    %v290 = vld [vmem:[%s3 + $0x800] sm:$0xff]
    %v291 = vld [vmem:[%s3 + $0x808] sm:$0xff]
    %v292 = vld [vmem:[%s3 + $0x810] sm:$0xff]
    %v293 = vld [vmem:[%s3 + $0x818] sm:$0xff]
    %v294 = vld [vmem:[%s3 + $0x820] sm:$0xff]
    %v295 = vld [vmem:[%s3 + $0x828] sm:$0xff]
    %v296 = vld [vmem:[%s3 + $0x830] sm:$0xff]
    %v297 = vld [vmem:[%s3 + $0x838] sm:$0xff]
    %v298 = vld [vmem:[%s3 + $0x840] sm:$0xff]
    %v299 = vld [vmem:[%s3 + $0x848] sm:$0xff]
    %v300 = vld [vmem:[%s3 + $0x850] sm:$0xff]
    %v301 = vld [vmem:[%s3 + $0x858] sm:$0xff]
    %v302 = vld [vmem:[%s3 + $0x860] sm:$0xff]
    %v303 = vld [vmem:[%s3 + $0x868] sm:$0xff]
    %v304 = vld [vmem:[%s3 + $0x870] sm:$0xff]
    %v305 = vld [vmem:[%s3 + $0x878] sm:$0xff]
    %v306 = vld [vmem:[%s3 + $0x880] sm:$0xff]
    %v307 = vld [vmem:[%s3 + $0x888] sm:$0xff]
    %v308 = vld [vmem:[%s3 + $0x890] sm:$0xff]
    %v309 = vld [vmem:[%s3 + $0x898] sm:$0xff]
    %v310 = vld [vmem:[%s3 + $0x8a0] sm:$0xff]
    %v311 = vld [vmem:[%s3 + $0x8a8] sm:$0xff]
    %v312 = vld [vmem:[%s3 + $0x8b0] sm:$0xff]
    %v313 = vld [vmem:[%s3 + $0x8b8] sm:$0xff]
    %v314 = vld [vmem:[%s3 + $0x8c0] sm:$0xff]
    %v315 = vld [vmem:[%s3 + $0x8c8] sm:$0xff]
    %v316 = vld [vmem:[%s3 + $0x8d0] sm:$0xff]
    %v317 = vld [vmem:[%s3 + $0x8d8] sm:$0xff]
    %v318 = vld [vmem:[%s3 + $0x8e0] sm:$0xff]
    %v319 = vld [vmem:[%s3 + $0x8e8] sm:$0xff]
    %v320 = vld [vmem:[%s3 + $0x8f0] sm:$0xff]
    %v321 = vld [vmem:[%s3 + $0x8f8] sm:$0xff]
    %v322 = vpack.c.bf16 %v35, %v34
    %v323 = vpack.c.bf16 %v37, %v36
    %v324 = vpack.c.bf16 %v39, %v38
    %v325 = vpack.c.bf16 %v41, %v40
    %v326 = vpack.c.bf16 %v43, %v42
    %v327 = vpack.c.bf16 %v45, %v44
    %v328 = vpack.c.bf16 %v47, %v46
    %v329 = vpack.c.bf16 %v49, %v48
    %v330 = vpack.c.bf16 %v51, %v50
    %v331 = vpack.c.bf16 %v53, %v52
    %v332 = vpack.c.bf16 %v55, %v54
    %v333 = vpack.c.bf16 %v57, %v56
    %v334 = vpack.c.bf16 %v59, %v58
    %v335 = vpack.c.bf16 %v61, %v60
    %v336 = vpack.c.bf16 %v63, %v62
    %v337 = vpack.c.bf16 %v65, %v64
    %v338 = vpack.c.bf16 %v67, %v66
    %v339 = vpack.c.bf16 %v69, %v68
    %v340 = vpack.c.bf16 %v71, %v70
    %v341 = vpack.c.bf16 %v73, %v72
    %v342 = vpack.c.bf16 %v75, %v74
    %v343 = vpack.c.bf16 %v77, %v76
    %v344 = vpack.c.bf16 %v79, %v78
    %v345 = vpack.c.bf16 %v81, %v80
    %v346 = vpack.c.bf16 %v83, %v82
    %v347 = vpack.c.bf16 %v85, %v84
    %v348 = vpack.c.bf16 %v87, %v86
    %v349 = vpack.c.bf16 %v89, %v88
    %v350 = vpack.c.bf16 %v91, %v90
    %v351 = vpack.c.bf16 %v93, %v92
    %v352 = vpack.c.bf16 %v95, %v94
    %v353 = vpack.c.bf16 %v97, %v96
    %v354 = vpack.c.bf16 %v99, %v98
    %v355 = vpack.c.bf16 %v101, %v100
    %v356 = vpack.c.bf16 %v103, %v102
    %v357 = vpack.c.bf16 %v105, %v104
    %v358 = vpack.c.bf16 %v107, %v106
    %v359 = vpack.c.bf16 %v109, %v108
    %v360 = vpack.c.bf16 %v111, %v110
    %v361 = vpack.c.bf16 %v113, %v112
    %v362 = vpack.c.bf16 %v115, %v114
    %v363 = vpack.c.bf16 %v117, %v116
    %v364 = vpack.c.bf16 %v119, %v118
    %v365 = vpack.c.bf16 %v121, %v120
    %v366 = vpack.c.bf16 %v123, %v122
    %v367 = vpack.c.bf16 %v125, %v124
    %v368 = vpack.c.bf16 %v127, %v126
    %v369 = vpack.c.bf16 %v129, %v128
    %v370 = vpack.c.bf16 %v131, %v130
    %v371 = vpack.c.bf16 %v133, %v132
    %v372 = vpack.c.bf16 %v135, %v134
    %v373 = vpack.c.bf16 %v137, %v136
    %v374 = vpack.c.bf16 %v139, %v138
    %v375 = vpack.c.bf16 %v141, %v140
    %v376 = vpack.c.bf16 %v143, %v142
    %v377 = vpack.c.bf16 %v145, %v144
    %v378 = vpack.c.bf16 %v147, %v146
    %v379 = vpack.c.bf16 %v149, %v148
    %v380 = vpack.c.bf16 %v151, %v150
    %v381 = vpack.c.bf16 %v153, %v152
    %v382 = vpack.c.bf16 %v155, %v154
    %v383 = vpack.c.bf16 %v157, %v156
    %v384 = vpack.c.bf16 %v159, %v158
    %v385 = vpack.c.bf16 %v161, %v160
    %v386 = vpack.c.bf16 %v163, %v162
    %v387 = vpack.c.bf16 %v165, %v164
    %v388 = vpack.c.bf16 %v167, %v166
    %v389 = vpack.c.bf16 %v169, %v168
    %v390 = vpack.c.bf16 %v171, %v170
    %v391 = vpack.c.bf16 %v173, %v172
    %v392 = vpack.c.bf16 %v175, %v174
    %v393 = vpack.c.bf16 %v177, %v176
    %v394 = vpack.c.bf16 %v179, %v178
    %v395 = vpack.c.bf16 %v181, %v180
    %v396 = vpack.c.bf16 %v183, %v182
    %v397 = vpack.c.bf16 %v185, %v184
    %v398 = vpack.c.bf16 %v187, %v186
    %v399 = vpack.c.bf16 %v189, %v188
    %v400 = vpack.c.bf16 %v191, %v190
    %v401 = vpack.c.bf16 %v193, %v192
    %v402 = vpack.c.bf16 %v195, %v194
    %v403 = vpack.c.bf16 %v197, %v196
    %v404 = vpack.c.bf16 %v199, %v198
    %v405 = vpack.c.bf16 %v201, %v200
    %v406 = vpack.c.bf16 %v203, %v202
    %v407 = vpack.c.bf16 %v205, %v204
    %v408 = vpack.c.bf16 %v207, %v206
    %v409 = vpack.c.bf16 %v209, %v208
    %v410 = vpack.c.bf16 %v211, %v210
    %v411 = vpack.c.bf16 %v213, %v212
    %v412 = vpack.c.bf16 %v215, %v214
    %v413 = vpack.c.bf16 %v217, %v216
    %v414 = vpack.c.bf16 %v219, %v218
    %v415 = vpack.c.bf16 %v221, %v220
    %v416 = vpack.c.bf16 %v223, %v222
    %v417 = vpack.c.bf16 %v225, %v224
    %v418 = vpack.c.bf16 %v227, %v226
    %v419 = vpack.c.bf16 %v229, %v228
    %v420 = vpack.c.bf16 %v231, %v230
    %v421 = vpack.c.bf16 %v233, %v232
    %v422 = vpack.c.bf16 %v235, %v234
    %v423 = vpack.c.bf16 %v237, %v236
    %v424 = vpack.c.bf16 %v239, %v238
    %v425 = vpack.c.bf16 %v241, %v240
    %v426 = vpack.c.bf16 %v243, %v242
    %v427 = vpack.c.bf16 %v245, %v244
    %v428 = vpack.c.bf16 %v247, %v246
    %v429 = vpack.c.bf16 %v249, %v248
    %v430 = vpack.c.bf16 %v251, %v250
    %v431 = vpack.c.bf16 %v253, %v252
    %v432 = vpack.c.bf16 %v255, %v254
    %v433 = vpack.c.bf16 %v257, %v256
    %v434 = vpack.c.bf16 %v259, %v258
    %v435 = vpack.c.bf16 %v261, %v260
    %v436 = vpack.c.bf16 %v263, %v262
    %v437 = vpack.c.bf16 %v265, %v264
    %v438 = vpack.c.bf16 %v267, %v266
    %v439 = vpack.c.bf16 %v269, %v268
    %v440 = vpack.c.bf16 %v271, %v270
    %v441 = vpack.c.bf16 %v273, %v272
    %v442 = vpack.c.bf16 %v275, %v274
    %v443 = vpack.c.bf16 %v277, %v276
    %v444 = vpack.c.bf16 %v279, %v278
    %v445 = vpack.c.bf16 %v281, %v280
    %v446 = vpack.c.bf16 %v283, %v282
    %v447 = vpack.c.bf16 %v285, %v284
    %v448 = vpack.c.bf16 %v287, %v286
    %v449 = vpack.c.bf16 %v289, %v288
    %v450 = vpack.c.bf16 %v291, %v290
    %v451 = vpack.c.bf16 %v293, %v292
    %v452 = vpack.c.bf16 %v295, %v294
    %v453 = vpack.c.bf16 %v297, %v296
    %v454 = vpack.c.bf16 %v299, %v298
    %v455 = vpack.c.bf16 %v301, %v300
    %v456 = vpack.c.bf16 %v303, %v302
    %v457 = vpack.c.bf16 %v305, %v304
    %v458 = vpack.c.bf16 %v307, %v306
    %v459 = vpack.c.bf16 %v309, %v308
    %v460 = vpack.c.bf16 %v311, %v310
    %v461 = vpack.c.bf16 %v313, %v312
    %v462 = vpack.c.bf16 %v315, %v314
    %v463 = vpack.c.bf16 %v317, %v316
    %v464 = vpack.c.bf16 %v319, %v318
    %v465 = vpack.c.bf16 %v321, %v320
    %v466 = vld [vmem:[%s4] sm:$0xff]
    %v467 = vld [vmem:[%s4 + $0x8] sm:$0xff]
    %v468 = vld [vmem:[%s4 + $0x10] sm:$0xff]
    %v469 = vld [vmem:[%s4 + $0x18] sm:$0xff]
    %v470 = vld [vmem:[%s4 + $0x20] sm:$0xff]
    %v471 = vld [vmem:[%s4 + $0x28] sm:$0xff]
    %v472 = vld [vmem:[%s4 + $0x30] sm:$0xff]
    %v473 = vld [vmem:[%s4 + $0x38] sm:$0xff]
    %v474 = vld [vmem:[%s4 + $0x40] sm:$0xff]
    %v475 = vld [vmem:[%s4 + $0x48] sm:$0xff]
    %v476 = vld [vmem:[%s4 + $0x50] sm:$0xff]
    %v477 = vld [vmem:[%s4 + $0x58] sm:$0xff]
    %v478 = vld [vmem:[%s4 + $0x60] sm:$0xff]
    %v479 = vld [vmem:[%s4 + $0x68] sm:$0xff]
    %v480 = vld [vmem:[%s4 + $0x70] sm:$0xff]
    %v481 = vld [vmem:[%s4 + $0x78] sm:$0xff]
    %v482 = vld [vmem:[%s4 + $0x80] sm:$0xff]
    %v483 = vld [vmem:[%s4 + $0x88] sm:$0xff]
    %v484 = vld [vmem:[%s4 + $0x90] sm:$0xff]
    %v485 = vld [vmem:[%s4 + $0x98] sm:$0xff]
    %v486 = vld [vmem:[%s4 + $0xa0] sm:$0xff]
    %v487 = vld [vmem:[%s4 + $0xa8] sm:$0xff]
    %v488 = vld [vmem:[%s4 + $0xb0] sm:$0xff]
    %v489 = vld [vmem:[%s4 + $0xb8] sm:$0xff]
    %v490 = vld [vmem:[%s4 + $0xc0] sm:$0xff]
    %v491 = vld [vmem:[%s4 + $0xc8] sm:$0xff]
    %v492 = vld [vmem:[%s4 + $0xd0] sm:$0xff]
    %v493 = vld [vmem:[%s4 + $0xd8] sm:$0xff]
    %v494 = vld [vmem:[%s4 + $0xe0] sm:$0xff]
    %v495 = vld [vmem:[%s4 + $0xe8] sm:$0xff]
    %v496 = vld [vmem:[%s4 + $0xf0] sm:$0xff]
    %v497 = vld [vmem:[%s4 + $0xf8] sm:$0xff]
    %v498 = vld [vmem:[%s4 + $0x100] sm:$0xff]
    %v499 = vld [vmem:[%s4 + $0x108] sm:$0xff]
    %v500 = vld [vmem:[%s4 + $0x110] sm:$0xff]
    %v501 = vld [vmem:[%s4 + $0x118] sm:$0xff]
    %v502 = vld [vmem:[%s4 + $0x120] sm:$0xff]
    %v503 = vld [vmem:[%s4 + $0x128] sm:$0xff]
    %v504 = vld [vmem:[%s4 + $0x130] sm:$0xff]
    %v505 = vld [vmem:[%s4 + $0x138] sm:$0xff]
    %v506 = vld [vmem:[%s4 + $0x140] sm:$0xff]
    %v507 = vld [vmem:[%s4 + $0x148] sm:$0xff]
    %v508 = vld [vmem:[%s4 + $0x150] sm:$0xff]
    %v509 = vld [vmem:[%s4 + $0x158] sm:$0xff]
    %v510 = vld [vmem:[%s4 + $0x160] sm:$0xff]
    %v511 = vld [vmem:[%s4 + $0x168] sm:$0xff]
    %v512 = vld [vmem:[%s4 + $0x170] sm:$0xff]
    %v513 = vld [vmem:[%s4 + $0x178] sm:$0xff]
    %v514 = vld [vmem:[%s4 + $0x180] sm:$0xff]
    %v515 = vld [vmem:[%s4 + $0x188] sm:$0xff]
    %v516 = vld [vmem:[%s4 + $0x190] sm:$0xff]
    %v517 = vld [vmem:[%s4 + $0x198] sm:$0xff]
    %v518 = vld [vmem:[%s4 + $0x1a0] sm:$0xff]
    %v519 = vld [vmem:[%s4 + $0x1a8] sm:$0xff]
    %v520 = vld [vmem:[%s4 + $0x1b0] sm:$0xff]
    %v521 = vld [vmem:[%s4 + $0x1b8] sm:$0xff]
    %v522 = vld [vmem:[%s4 + $0x1c0] sm:$0xff]
    %v523 = vld [vmem:[%s4 + $0x1c8] sm:$0xff]
    %v524 = vld [vmem:[%s4 + $0x1d0] sm:$0xff]
    %v525 = vld [vmem:[%s4 + $0x1d8] sm:$0xff]
    %v526 = vld [vmem:[%s4 + $0x1e0] sm:$0xff]
    %v527 = vld [vmem:[%s4 + $0x1e8] sm:$0xff]
    %v528 = vld [vmem:[%s4 + $0x1f0] sm:$0xff]
    %v529 = vld [vmem:[%s4 + $0x1f8] sm:$0xff]
    %v530 = vld [vmem:[%s4 + $0x200] sm:$0xff]
    %v531 = vld [vmem:[%s4 + $0x208] sm:$0xff]
    %v532 = vld [vmem:[%s4 + $0x210] sm:$0xff]
    %v533 = vld [vmem:[%s4 + $0x218] sm:$0xff]
    %v534 = vld [vmem:[%s4 + $0x220] sm:$0xff]
    %v535 = vld [vmem:[%s4 + $0x228] sm:$0xff]
    %v536 = vld [vmem:[%s4 + $0x230] sm:$0xff]
    %v537 = vld [vmem:[%s4 + $0x238] sm:$0xff]
    %v538 = vpack.c.bf16 %v467, %v466
    %v539 = vpack.c.bf16 %v469, %v468
    %v540 = vpack.c.bf16 %v471, %v470
    %v541 = vpack.c.bf16 %v473, %v472
    %v542 = vpack.c.bf16 %v475, %v474
    %v543 = vpack.c.bf16 %v477, %v476
    %v544 = vpack.c.bf16 %v479, %v478
    %v545 = vpack.c.bf16 %v481, %v480
    %v546 = vpack.c.bf16 %v483, %v482
    %v547 = vpack.c.bf16 %v485, %v484
    %v548 = vpack.c.bf16 %v487, %v486
    %v549 = vpack.c.bf16 %v489, %v488
    %v550 = vpack.c.bf16 %v491, %v490
    %v551 = vpack.c.bf16 %v493, %v492
    %v552 = vpack.c.bf16 %v495, %v494
    %v553 = vpack.c.bf16 %v497, %v496
    %v554 = vpack.c.bf16 %v499, %v498
    %v555 = vpack.c.bf16 %v501, %v500
    %v556 = vpack.c.bf16 %v503, %v502
    %v557 = vpack.c.bf16 %v505, %v504
    %v558 = vpack.c.bf16 %v507, %v506
    %v559 = vpack.c.bf16 %v509, %v508
    %v560 = vpack.c.bf16 %v511, %v510
    %v561 = vpack.c.bf16 %v513, %v512
    %v562 = vpack.c.bf16 %v515, %v514
    %v563 = vpack.c.bf16 %v517, %v516
    %v564 = vpack.c.bf16 %v519, %v518
    %v565 = vpack.c.bf16 %v521, %v520
    %v566 = vpack.c.bf16 %v523, %v522
    %v567 = vpack.c.bf16 %v525, %v524
    %v568 = vpack.c.bf16 %v527, %v526
    %v569 = vpack.c.bf16 %v529, %v528
    %v570 = vpack.c.bf16 %v531, %v530
    %v571 = vpack.c.bf16 %v533, %v532
    %v572 = vpack.c.bf16 %v535, %v534
    %v573 = vpack.c.bf16 %v537, %v536
    %v574 = vld [vmem:[%s5] sm:$0x1f]
    %v575 = vld [vmem:[%s6] sm:$0x1f]
    %v576 = vld [vmem:[%s0] sm:$0xff]
    %v577 = vld [vmem:[%s0 + $0x8] sm:$0xff]
    %v578 = vpack.c.bf16 %v577, %v576
    %v579 = vld [vmem:[%s1] sm:$0xf]
    %v580 = vld [vmem:[%s1 + $0x4] sm:$0xf]
    %v581 = vld [vmem:[%s1 + $0x8] sm:$0xf]
    %v582 = vld [vmem:[%s1 + $0xc] sm:$0xf]
    %v583 = vld [vmem:[%s1 + $0x10] sm:$0xf]
    %v584 = vld [vmem:[%s1 + $0x14] sm:$0xf]
    %v585 = vld [vmem:[%s1 + $0x18] sm:$0xf]
    %v586 = vld [vmem:[%s1 + $0x1c] sm:$0xf]
    %v587 = vld [vmem:[%s1 + $0x20] sm:$0xf]
    %v588 = vld [vmem:[%s1 + $0x24] sm:$0xf]
    %v589 = vld [vmem:[%s1 + $0x28] sm:$0xf]
    %v590 = vld [vmem:[%s1 + $0x2c] sm:$0xf]
    %v591 = vld [vmem:[%s1 + $0x30] sm:$0xf]
    %v592 = vld [vmem:[%s1 + $0x34] sm:$0xf]
    %v593 = vld [vmem:[%s1 + $0x38] sm:$0xf]
    %v594 = vld [vmem:[%s1 + $0x3c] sm:$0xf]
    %v595 = vlaneseq
    %v596 = vshrl.u32 %v595, 7
    %v597 = vsub.s32 0, %v596
    %v598 = vrot.slane %v31, %v597
    %v615 = vunpack.c.l.b16 %v579
    %v616 = vunpack.c.l.b16 %v580
    %v617 = vunpack.c.l.b16 %v581
    %v618 = vunpack.c.l.b16 %v582
    %v619 = vunpack.c.l.b16 %v583
    %v620 = vunpack.c.l.b16 %v584
    %v621 = vunpack.c.l.b16 %v585
    %v622 = vunpack.c.l.b16 %v586
    %v623 = vunpack.c.l.b16 %v587
    %v624 = vunpack.c.l.b16 %v588
    %v625 = vunpack.c.l.b16 %v589
    %v626 = vunpack.c.l.b16 %v590
    %v627 = vunpack.c.l.b16 %v591
    %v628 = vunpack.c.l.b16 %v592
    %v629 = vunpack.c.l.b16 %v593
    %v630 = vunpack.c.l.b16 %v594
    %v631 = vpack.c.b16 %v616, %v615
    %v632 = vpack.c.b16 %v618, %v617
    %v633 = vpack.c.b16 %v620, %v619
    %v634 = vpack.c.b16 %v622, %v621
    %v635 = vpack.c.b16 %v624, %v623
    %v636 = vpack.c.b16 %v626, %v625
    %v637 = vpack.c.b16 %v628, %v627
    %v638 = vpack.c.b16 %v630, %v629
    %647 = vmatprep.subr.bf16.mxu0 0
    %648 = vmatpush1.bf16.msra.mxu0 %v631
    %649 = vmatprep.subr.bf16.mxu0 0
    %650 = vmatpush1.bf16.msra.mxu0 %v632
    %651 = vmatprep.subr.bf16.mxu0 0
    %652 = vmatpush1.bf16.msra.mxu0 %v633
    %653 = vmatprep.subr.bf16.mxu0 0
    %654 = vmatpush1.bf16.msra.mxu0 %v634
    %655 = vmatprep.subr.bf16.mxu0 0
    %656 = vmatpush1.bf16.msra.mxu0 %v635
    %657 = vmatprep.subr.bf16.mxu0 0
    %658 = vmatpush1.bf16.msra.mxu0 %v636
    %659 = vmatprep.subr.bf16.mxu0 0
    %660 = vmatpush1.bf16.msra.mxu0 %v637
    %661 = vmatprep.subr.bf16.mxu0 0
    %662 = vmatpush1.bf16.msra.mxu0 %v638
    %663 = vmatprep.subr.bf16.mxu0 0
    %664 = vmatpush1.bf16.msra.mxu0 0
    %665 = vmatprep.subr.bf16.mxu0 0
    %666 = vmatpush1.bf16.msra.mxu0 0
    %667 = vmatprep.subr.bf16.mxu0 0
    %668 = vmatpush1.bf16.msra.mxu0 0
    %669 = vmatprep.subr.bf16.mxu0 0
    %670 = vmatpush1.bf16.msra.mxu0 0
    %671 = vmatprep.subr.bf16.mxu0 0
    %672 = vmatpush1.bf16.msra.mxu0 0
    %673 = vmatprep.subr.bf16.mxu0 0
    %674 = vmatpush1.bf16.msra.mxu0 0
    %675 = vmatprep.subr.bf16.mxu0 0
    %676 = vmatpush1.bf16.msra.mxu0 0
    %677 = vmatprep.subr.bf16.mxu0 0
    %678 = vmatpush1.bf16.msra.mxu0 0
    %679 = vmatprep.mubr.bf16.mxu0 0
    %680 = vmatmul.mubr.bf16.gmra.mrb[0].mxu0 %v578
    %v681 = vpop.f32.mrb[0].mxu0
    %v682 = vadd.f32 %v598, %v681
    %v683 = vpop.f32.mrb[0].mxu0
    %v684 = vpop.f32.mrb[0].mxu0
    %v685 = vadd.f32 %v598, %v684
    %v686 = vpop.f32.mrb[0].mxu0
    %687 = vdwg.mxu0
    %v688 = vpack.c.bf16 %v685, %v682
    %v689 = vunpack.c.l.bf16 %v688
    %v690 = vunpack.c.h.bf16 %v688
    %691 = vmatprep.subr.bf16.mxu0 0
    %692 = vmatpush1.bf16.msra.mxu0 %v322
    %693 = vmatprep.subr.bf16.mxu0 0
    %694 = vmatpush1.bf16.msra.mxu0 %v323
    %695 = vmatprep.subr.bf16.mxu0 0
    %696 = vmatpush1.bf16.msra.mxu0 %v324
    %697 = vmatprep.subr.bf16.mxu0 0
    %698 = vmatpush1.bf16.msra.mxu0 %v325
    %699 = vmatprep.subr.bf16.mxu0 0
    %700 = vmatpush1.bf16.msra.mxu0 %v326
    %701 = vmatprep.subr.bf16.mxu0 0
    %702 = vmatpush1.bf16.msra.mxu0 %v327
    %703 = vmatprep.subr.bf16.mxu0 0
    %704 = vmatpush1.bf16.msra.mxu0 %v328
    %705 = vmatprep.subr.bf16.mxu0 0
    %706 = vmatpush1.bf16.msra.mxu0 %v329
    %707 = vmatprep.subr.bf16.mxu0 0
    %708 = vmatpush1.bf16.msra.mxu0 0
    %709 = vmatprep.subr.bf16.mxu0 0
    %710 = vmatpush1.bf16.msra.mxu0 0
    %711 = vmatprep.subr.bf16.mxu0 0
    %712 = vmatpush1.bf16.msra.mxu0 0
    %713 = vmatprep.subr.bf16.mxu0 0
    %714 = vmatpush1.bf16.msra.mxu0 0
    %715 = vmatprep.subr.bf16.mxu0 0
    %716 = vmatpush1.bf16.msra.mxu0 0
    %717 = vmatprep.subr.bf16.mxu0 0
    %718 = vmatpush1.bf16.msra.mxu0 0
    %719 = vmatprep.subr.bf16.mxu0 0
    %720 = vmatpush1.bf16.msra.mxu0 0
    %721 = vmatprep.subr.bf16.mxu0 0
    %722 = vmatpush1.bf16.msra.mxu0 0
    %723 = vmatprep.mubr.bf16.mxu0 0
    %724 = vmatmul.mubr.bf16.gmra.mrb[0].mxu0 %v578
    %v725 = vpop.f32.mrb[0].mxu0
    %v726 = vadd.f32 0.0, %v725
    %v727 = vpop.f32.mrb[0].mxu0
    %v728 = vpop.f32.mrb[0].mxu0
    %v729 = vadd.f32 0.0, %v728
    %v730 = vpop.f32.mrb[0].mxu0
    %731 = vdwg.mxu0
    %v732 = vpack.c.bf16 %v729, %v726
    %vm733 = vcmask 261120
    %v735 = vsel %vm733, %v732, 0
    %737 = vmatprep.subr.bf16.mxu0 0
    %738 = vmatpush1.bf16.msra.mxu0 %v538
    %739 = vmatprep.subr.bf16.mxu0 0
    %740 = vmatpush1.bf16.msra.mxu0 %v539
    %741 = vmatprep.subr.bf16.mxu0 0
    %742 = vmatpush1.bf16.msra.mxu0 0
    %743 = vmatprep.subr.bf16.mxu0 0
    %744 = vmatpush1.bf16.msra.mxu0 0
    %745 = vmatprep.subr.bf16.mxu0 0
    %746 = vmatpush1.bf16.msra.mxu0 0
    %747 = vmatprep.subr.bf16.mxu0 0
    %748 = vmatpush1.bf16.msra.mxu0 0
    %749 = vmatprep.subr.bf16.mxu0 0
    %750 = vmatpush1.bf16.msra.mxu0 0
    %751 = vmatprep.subr.bf16.mxu0 0
    %752 = vmatpush1.bf16.msra.mxu0 0
    %753 = vmatprep.subr.bf16.mxu0 0
    %754 = vmatpush1.bf16.msra.mxu0 0
    %755 = vmatprep.subr.bf16.mxu0 0
    %756 = vmatpush1.bf16.msra.mxu0 0
    %757 = vmatprep.subr.bf16.mxu0 0
    %758 = vmatpush1.bf16.msra.mxu0 0
    %759 = vmatprep.subr.bf16.mxu0 0
    %760 = vmatpush1.bf16.msra.mxu0 0
    %761 = vmatprep.subr.bf16.mxu0 0
    %762 = vmatpush1.bf16.msra.mxu0 0
    %763 = vmatprep.subr.bf16.mxu0 0
    %764 = vmatpush1.bf16.msra.mxu0 0
    %765 = vmatprep.subr.bf16.mxu0 0
    %766 = vmatpush1.bf16.msra.mxu0 0
    %767 = vmatprep.subr.bf16.mxu0 0
    %768 = vmatpush1.bf16.msra.mxu0 0
    %769 = vmatprep.mubr.bf16.mxu0 0
    %770 = vmatmul.mubr.bf16.gmra.mrb[0].mxu0 %v735
    %v771 = vpop.f32.mrb[0].mxu0
    %v772 = vadd.f32 0.0, %v771
    %v773 = vpop.f32.mrb[0].mxu0
    %v774 = vpop.f32.mrb[0].mxu0
    %v775 = vadd.f32 0.0, %v774
    %v776 = vpop.f32.mrb[0].mxu0
    %777 = vdwg.mxu0
    %v778 = vadd.f32 %v689, %v772
    %v779 = vadd.f32 %v690, %v775
    %v780 = vmax.f32 %v778, 0.0
    %v781 = vmax.f32 %v779, 0.0
    %v782 = vpack.c.bf16 %v781, %v780
    %s783 = scalar_lea.vmem %s1, 64
    %v784 = vld [vmem:[%s783] sm:$0xf]
    %v785 = vld [vmem:[%s783 + $0x4] sm:$0xf]
    %v786 = vld [vmem:[%s783 + $0x8] sm:$0xf]
    %v787 = vld [vmem:[%s783 + $0xc] sm:$0xf]
    %v788 = vld [vmem:[%s783 + $0x10] sm:$0xf]
    %v789 = vld [vmem:[%s783 + $0x14] sm:$0xf]
    %v790 = vld [vmem:[%s783 + $0x18] sm:$0xf]
    %v791 = vld [vmem:[%s783 + $0x1c] sm:$0xf]
    %v792 = vld [vmem:[%s783 + $0x20] sm:$0xf]
    %v793 = vld [vmem:[%s783 + $0x24] sm:$0xf]
    %v794 = vld [vmem:[%s783 + $0x28] sm:$0xf]
    %v795 = vld [vmem:[%s783 + $0x2c] sm:$0xf]
    %v796 = vld [vmem:[%s783 + $0x30] sm:$0xf]
    %v797 = vld [vmem:[%s783 + $0x34] sm:$0xf]
    %v798 = vld [vmem:[%s783 + $0x38] sm:$0xf]
    %v799 = vld [vmem:[%s783 + $0x3c] sm:$0xf]
    %v800 = vlaneseq
    %v801 = vshrl.u32 %v800, 7
    %v802 = vsub.s32 1, %v801
    %v803 = vrot.slane %v31, %v802
    %v820 = vunpack.c.l.b16 %v784
    %v821 = vunpack.c.l.b16 %v785
    %v822 = vunpack.c.l.b16 %v786
    %v823 = vunpack.c.l.b16 %v787
    %v824 = vunpack.c.l.b16 %v788
    %v825 = vunpack.c.l.b16 %v789
    %v826 = vunpack.c.l.b16 %v790
    %v827 = vunpack.c.l.b16 %v791
    %v828 = vunpack.c.l.b16 %v792
    %v829 = vunpack.c.l.b16 %v793
    %v830 = vunpack.c.l.b16 %v794
    %v831 = vunpack.c.l.b16 %v795
    %v832 = vunpack.c.l.b16 %v796
    %v833 = vunpack.c.l.b16 %v797
    %v834 = vunpack.c.l.b16 %v798
    %v835 = vunpack.c.l.b16 %v799
    %v836 = vpack.c.b16 %v821, %v820
    %v837 = vpack.c.b16 %v823, %v822
    %v838 = vpack.c.b16 %v825, %v824
    %v839 = vpack.c.b16 %v827, %v826
    %v840 = vpack.c.b16 %v829, %v828
    %v841 = vpack.c.b16 %v831, %v830
    %v842 = vpack.c.b16 %v833, %v832
    %v843 = vpack.c.b16 %v835, %v834
    %852 = vmatprep.subr.bf16.mxu0 0
    %853 = vmatpush1.bf16.msra.mxu0 %v836
    %854 = vmatprep.subr.bf16.mxu0 0
    %855 = vmatpush1.bf16.msra.mxu0 %v837
    %856 = vmatprep.subr.bf16.mxu0 0
    %857 = vmatpush1.bf16.msra.mxu0 %v838
    %858 = vmatprep.subr.bf16.mxu0 0
    %859 = vmatpush1.bf16.msra.mxu0 %v839
    %860 = vmatprep.subr.bf16.mxu0 0
    %861 = vmatpush1.bf16.msra.mxu0 %v840
    %862 = vmatprep.subr.bf16.mxu0 0
    %863 = vmatpush1.bf16.msra.mxu0 %v841
    %864 = vmatprep.subr.bf16.mxu0 0
    %865 = vmatpush1.bf16.msra.mxu0 %v842
    %866 = vmatprep.subr.bf16.mxu0 0
    %867 = vmatpush1.bf16.msra.mxu0 %v843
    %868 = vmatprep.subr.bf16.mxu0 0
    %869 = vmatpush1.bf16.msra.mxu0 0
    %870 = vmatprep.subr.bf16.mxu0 0
    %871 = vmatpush1.bf16.msra.mxu0 0
    %872 = vmatprep.subr.bf16.mxu0 0
    %873 = vmatpush1.bf16.msra.mxu0 0
    %874 = vmatprep.subr.bf16.mxu0 0
    %875 = vmatpush1.bf16.msra.mxu0 0
    %876 = vmatprep.subr.bf16.mxu0 0
    %877 = vmatpush1.bf16.msra.mxu0 0
    %878 = vmatprep.subr.bf16.mxu0 0
    %879 = vmatpush1.bf16.msra.mxu0 0
    %880 = vmatprep.subr.bf16.mxu0 0
    %881 = vmatpush1.bf16.msra.mxu0 0
    %882 = vmatprep.subr.bf16.mxu0 0
    %883 = vmatpush1.bf16.msra.mxu0 0
    %884 = vmatprep.mubr.bf16.mxu0 0
    %885 = vmatmul.mubr.bf16.gmra.mrb[0].mxu0 %v782
    %v886 = vpop.f32.mrb[0].mxu0
    %v887 = vadd.f32 %v803, %v886
    %v888 = vpop.f32.mrb[0].mxu0
    %v889 = vpop.f32.mrb[0].mxu0
    %v890 = vadd.f32 %v803, %v889
    %v891 = vpop.f32.mrb[0].mxu0
    %892 = vdwg.mxu0
    %v893 = vpack.c.bf16 %v890, %v887
    %v894 = vunpack.c.l.bf16 %v893
    %v895 = vunpack.c.h.bf16 %v893
    %896 = vmatprep.subr.bf16.mxu0 0
    %897 = vmatpush1.bf16.msra.mxu0 %v330
    %898 = vmatprep.subr.bf16.mxu0 0
    %899 = vmatpush1.bf16.msra.mxu0 %v331
    %900 = vmatprep.subr.bf16.mxu0 0
    %901 = vmatpush1.bf16.msra.mxu0 %v332
    %902 = vmatprep.subr.bf16.mxu0 0
    %903 = vmatpush1.bf16.msra.mxu0 %v333
    %904 = vmatprep.subr.bf16.mxu0 0
    %905 = vmatpush1.bf16.msra.mxu0 %v334
    %906 = vmatprep.subr.bf16.mxu0 0
    %907 = vmatpush1.bf16.msra.mxu0 %v335
    %908 = vmatprep.subr.bf16.mxu0 0
    %909 = vmatpush1.bf16.msra.mxu0 %v336
    %910 = vmatprep.subr.bf16.mxu0 0
    %911 = vmatpush1.bf16.msra.mxu0 %v337
    %912 = vmatprep.subr.bf16.mxu0 0
    %913 = vmatpush1.bf16.msra.mxu0 0
    %914 = vmatprep.subr.bf16.mxu0 0
    %915 = vmatpush1.bf16.msra.mxu0 0
    %916 = vmatprep.subr.bf16.mxu0 0
    %917 = vmatpush1.bf16.msra.mxu0 0
    %918 = vmatprep.subr.bf16.mxu0 0
    %919 = vmatpush1.bf16.msra.mxu0 0
    %920 = vmatprep.subr.bf16.mxu0 0
    %921 = vmatpush1.bf16.msra.mxu0 0
    %922 = vmatprep.subr.bf16.mxu0 0
    %923 = vmatpush1.bf16.msra.mxu0 0
    %924 = vmatprep.subr.bf16.mxu0 0
    %925 = vmatpush1.bf16.msra.mxu0 0
    %926 = vmatprep.subr.bf16.mxu0 0
    %927 = vmatpush1.bf16.msra.mxu0 0
    %928 = vmatprep.mubr.bf16.mxu0 0
    %929 = vmatmul.mubr.bf16.gmra.mrb[0].mxu0 %v782
    %v930 = vpop.f32.mrb[0].mxu0
    %v931 = vadd.f32 0.0, %v930
    %v932 = vpop.f32.mrb[0].mxu0
    %v933 = vpop.f32.mrb[0].mxu0
    %v934 = vadd.f32 0.0, %v933
    %v935 = vpop.f32.mrb[0].mxu0
    %936 = vdwg.mxu0
    %v937 = vpack.c.bf16 %v934, %v931
    %v939 = vsel %vm733, %v937, 0
    %941 = vmatprep.subr.bf16.mxu0 0
    %942 = vmatpush1.bf16.msra.mxu0 %v540
    %943 = vmatprep.subr.bf16.mxu0 0
    %944 = vmatpush1.bf16.msra.mxu0 %v541
    %945 = vmatprep.subr.bf16.mxu0 0
    %946 = vmatpush1.bf16.msra.mxu0 0
    %947 = vmatprep.subr.bf16.mxu0 0
    %948 = vmatpush1.bf16.msra.mxu0 0
    %949 = vmatprep.subr.bf16.mxu0 0
    %950 = vmatpush1.bf16.msra.mxu0 0
    %951 = vmatprep.subr.bf16.mxu0 0
    %952 = vmatpush1.bf16.msra.mxu0 0
    %953 = vmatprep.subr.bf16.mxu0 0
    %954 = vmatpush1.bf16.msra.mxu0 0
    %955 = vmatprep.subr.bf16.mxu0 0
    %956 = vmatpush1.bf16.msra.mxu0 0
    %957 = vmatprep.subr.bf16.mxu0 0
    %958 = vmatpush1.bf16.msra.mxu0 0
    %959 = vmatprep.subr.bf16.mxu0 0
    %960 = vmatpush1.bf16.msra.mxu0 0
    %961 = vmatprep.subr.bf16.mxu0 0
    %962 = vmatpush1.bf16.msra.mxu0 0
    %963 = vmatprep.subr.bf16.mxu0 0
    %964 = vmatpush1.bf16.msra.mxu0 0
    %965 = vmatprep.subr.bf16.mxu0 0
    %966 = vmatpush1.bf16.msra.mxu0 0
    %967 = vmatprep.subr.bf16.mxu0 0
    %968 = vmatpush1.bf16.msra.mxu0 0
    %969 = vmatprep.subr.bf16.mxu0 0
    %970 = vmatpush1.bf16.msra.mxu0 0
    %971 = vmatprep.subr.bf16.mxu0 0
    %972 = vmatpush1.bf16.msra.mxu0 0
    %973 = vmatprep.mubr.bf16.mxu0 0
    %974 = vmatmul.mubr.bf16.gmra.mrb[0].mxu0 %v939
    %v975 = vpop.f32.mrb[0].mxu0
    %v976 = vadd.f32 0.0, %v975
    %v977 = vpop.f32.mrb[0].mxu0
    %v978 = vpop.f32.mrb[0].mxu0
    %v979 = vadd.f32 0.0, %v978
    %v980 = vpop.f32.mrb[0].mxu0
    %981 = vdwg.mxu0
    %v982 = vadd.f32 %v894, %v976
    %v983 = vadd.f32 %v895, %v979
    %v984 = vmax.f32 %v982, 0.0
    %v985 = vmax.f32 %v983, 0.0
    %v986 = vpack.c.bf16 %v985, %v984
    %s987 = scalar_lea.vmem %s1, 128
    %v988 = vld [vmem:[%s987] sm:$0xf]
    %v989 = vld [vmem:[%s987 + $0x4] sm:$0xf]
    %v990 = vld [vmem:[%s987 + $0x8] sm:$0xf]
    %v991 = vld [vmem:[%s987 + $0xc] sm:$0xf]
    %v992 = vld [vmem:[%s987 + $0x10] sm:$0xf]
    %v993 = vld [vmem:[%s987 + $0x14] sm:$0xf]
    %v994 = vld [vmem:[%s987 + $0x18] sm:$0xf]
    %v995 = vld [vmem:[%s987 + $0x1c] sm:$0xf]
    %v996 = vld [vmem:[%s987 + $0x20] sm:$0xf]
    %v997 = vld [vmem:[%s987 + $0x24] sm:$0xf]
    %v998 = vld [vmem:[%s987 + $0x28] sm:$0xf]
    %v999 = vld [vmem:[%s987 + $0x2c] sm:$0xf]
    %v1000 = vld [vmem:[%s987 + $0x30] sm:$0xf]
    %v1001 = vld [vmem:[%s987 + $0x34] sm:$0xf]
    %v1002 = vld [vmem:[%s987 + $0x38] sm:$0xf]
    %v1003 = vld [vmem:[%s987 + $0x3c] sm:$0xf]
    %v1004 = vlaneseq
    %v1005 = vshrl.u32 %v1004, 7
    %v1006 = vsub.s32 2, %v1005
    %v1007 = vrot.slane %v31, %v1006
    %v1024 = vunpack.c.l.b16 %v988
    %v1025 = vunpack.c.l.b16 %v989
    %v1026 = vunpack.c.l.b16 %v990
    %v1027 = vunpack.c.l.b16 %v991
    %v1028 = vunpack.c.l.b16 %v992
    %v1029 = vunpack.c.l.b16 %v993
    %v1030 = vunpack.c.l.b16 %v994
    %v1031 = vunpack.c.l.b16 %v995
    %v1032 = vunpack.c.l.b16 %v996
    %v1033 = vunpack.c.l.b16 %v997
    %v1034 = vunpack.c.l.b16 %v998
    %v1035 = vunpack.c.l.b16 %v999
    %v1036 = vunpack.c.l.b16 %v1000
    %v1037 = vunpack.c.l.b16 %v1001
    %v1038 = vunpack.c.l.b16 %v1002
    %v1039 = vunpack.c.l.b16 %v1003
    %v1040 = vpack.c.b16 %v1025, %v1024
    %v1041 = vpack.c.b16 %v1027, %v1026
    %v1042 = vpack.c.b16 %v1029, %v1028
    %v1043 = vpack.c.b16 %v1031, %v1030
    %v1044 = vpack.c.b16 %v1033, %v1032
    %v1045 = vpack.c.b16 %v1035, %v1034
    %v1046 = vpack.c.b16 %v1037, %v1036
    %v1047 = vpack.c.b16 %v1039, %v1038
    %1056 = vmatprep.subr.bf16.mxu0 0
    %1057 = vmatpush1.bf16.msra.mxu0 %v1040
    %1058 = vmatprep.subr.bf16.mxu0 0
    %1059 = vmatpush1.bf16.msra.mxu0 %v1041
    %1060 = vmatprep.subr.bf16.mxu0 0
    %1061 = vmatpush1.bf16.msra.mxu0 %v1042
    %1062 = vmatprep.subr.bf16.mxu0 0
    %1063 = vmatpush1.bf16.msra.mxu0 %v1043
    %1064 = vmatprep.subr.bf16.mxu0 0
    %1065 = vmatpush1.bf16.msra.mxu0 %v1044
    %1066 = vmatprep.subr.bf16.mxu0 0
    %1067 = vmatpush1.bf16.msra.mxu0 %v1045
    %1068 = vmatprep.subr.bf16.mxu0 0
    %1069 = vmatpush1.bf16.msra.mxu0 %v1046
    %1070 = vmatprep.subr.bf16.mxu0 0
    %1071 = vmatpush1.bf16.msra.mxu0 %v1047
    %1072 = vmatprep.subr.bf16.mxu0 0
    %1073 = vmatpush1.bf16.msra.mxu0 0
    %1074 = vmatprep.subr.bf16.mxu0 0
    %1075 = vmatpush1.bf16.msra.mxu0 0
    %1076 = vmatprep.subr.bf16.mxu0 0
    %1077 = vmatpush1.bf16.msra.mxu0 0
    %1078 = vmatprep.subr.bf16.mxu0 0
    %1079 = vmatpush1.bf16.msra.mxu0 0
    %1080 = vmatprep.subr.bf16.mxu0 0
    %1081 = vmatpush1.bf16.msra.mxu0 0
    %1082 = vmatprep.subr.bf16.mxu0 0
    %1083 = vmatpush1.bf16.msra.mxu0 0
    %1084 = vmatprep.subr.bf16.mxu0 0
    %1085 = vmatpush1.bf16.msra.mxu0 0
    %1086 = vmatprep.subr.bf16.mxu0 0
    %1087 = vmatpush1.bf16.msra.mxu0 0
    %1088 = vmatprep.mubr.bf16.mxu0 0
    %1089 = vmatmul.mubr.bf16.gmra.mrb[0].mxu0 %v986
    %v1090 = vpop.f32.mrb[0].mxu0
    %v1091 = vadd.f32 %v1007, %v1090
    %v1092 = vpop.f32.mrb[0].mxu0
    %v1093 = vpop.f32.mrb[0].mxu0
    %v1094 = vadd.f32 %v1007, %v1093
    %v1095 = vpop.f32.mrb[0].mxu0
    %1096 = vdwg.mxu0
    %v1097 = vpack.c.bf16 %v1094, %v1091
    %v1098 = vunpack.c.l.bf16 %v1097
    %v1099 = vunpack.c.h.bf16 %v1097
    %1100 = vmatprep.subr.bf16.mxu0 0
    %1101 = vmatpush1.bf16.msra.mxu0 %v338
    %1102 = vmatprep.subr.bf16.mxu0 0
    %1103 = vmatpush1.bf16.msra.mxu0 %v339
    %1104 = vmatprep.subr.bf16.mxu0 0
    %1105 = vmatpush1.bf16.msra.mxu0 %v340
    %1106 = vmatprep.subr.bf16.mxu0 0
    %1107 = vmatpush1.bf16.msra.mxu0 %v341
    %1108 = vmatprep.subr.bf16.mxu0 0
    %1109 = vmatpush1.bf16.msra.mxu0 %v342
    %1110 = vmatprep.subr.bf16.mxu0 0
    %1111 = vmatpush1.bf16.msra.mxu0 %v343
    %1112 = vmatprep.subr.bf16.mxu0 0
    %1113 = vmatpush1.bf16.msra.mxu0 %v344
    %1114 = vmatprep.subr.bf16.mxu0 0
    %1115 = vmatpush1.bf16.msra.mxu0 %v345
    %1116 = vmatprep.subr.bf16.mxu0 0
    %1117 = vmatpush1.bf16.msra.mxu0 0
    %1118 = vmatprep.subr.bf16.mxu0 0
    %1119 = vmatpush1.bf16.msra.mxu0 0
    %1120 = vmatprep.subr.bf16.mxu0 0
    %1121 = vmatpush1.bf16.msra.mxu0 0
    %1122 = vmatprep.subr.bf16.mxu0 0
    %1123 = vmatpush1.bf16.msra.mxu0 0
    %1124 = vmatprep.subr.bf16.mxu0 0
    %1125 = vmatpush1.bf16.msra.mxu0 0
    %1126 = vmatprep.subr.bf16.mxu0 0
    %1127 = vmatpush1.bf16.msra.mxu0 0
    %1128 = vmatprep.subr.bf16.mxu0 0
    %1129 = vmatpush1.bf16.msra.mxu0 0
    %1130 = vmatprep.subr.bf16.mxu0 0
    %1131 = vmatpush1.bf16.msra.mxu0 0
    %1132 = vmatprep.mubr.bf16.mxu0 0
    %1133 = vmatmul.mubr.bf16.gmra.mrb[0].mxu0 %v986
    %v1134 = vpop.f32.mrb[0].mxu0
    %v1135 = vadd.f32 0.0, %v1134
    %v1136 = vpop.f32.mrb[0].mxu0
    %v1137 = vpop.f32.mrb[0].mxu0
    %v1138 = vadd.f32 0.0, %v1137
    %v1139 = vpop.f32.mrb[0].mxu0
    %1140 = vdwg.mxu0
    %v1141 = vpack.c.bf16 %v1138, %v1135
    %v1143 = vsel %vm733, %v1141, 0
    %1145 = vmatprep.subr.bf16.mxu0 0
    %1146 = vmatpush1.bf16.msra.mxu0 %v542
    %1147 = vmatprep.subr.bf16.mxu0 0
    %1148 = vmatpush1.bf16.msra.mxu0 %v543
    %1149 = vmatprep.subr.bf16.mxu0 0
    %1150 = vmatpush1.bf16.msra.mxu0 0
    %1151 = vmatprep.subr.bf16.mxu0 0
    %1152 = vmatpush1.bf16.msra.mxu0 0
    %1153 = vmatprep.subr.bf16.mxu0 0
    %1154 = vmatpush1.bf16.msra.mxu0 0
    %1155 = vmatprep.subr.bf16.mxu0 0
    %1156 = vmatpush1.bf16.msra.mxu0 0
    %1157 = vmatprep.subr.bf16.mxu0 0
    %1158 = vmatpush1.bf16.msra.mxu0 0
    %1159 = vmatprep.subr.bf16.mxu0 0
    %1160 = vmatpush1.bf16.msra.mxu0 0
    %1161 = vmatprep.subr.bf16.mxu0 0
    %1162 = vmatpush1.bf16.msra.mxu0 0
    %1163 = vmatprep.subr.bf16.mxu0 0
    %1164 = vmatpush1.bf16.msra.mxu0 0
    %1165 = vmatprep.subr.bf16.mxu0 0
    %1166 = vmatpush1.bf16.msra.mxu0 0
    %1167 = vmatprep.subr.bf16.mxu0 0
    %1168 = vmatpush1.bf16.msra.mxu0 0
    %1169 = vmatprep.subr.bf16.mxu0 0
    %1170 = vmatpush1.bf16.msra.mxu0 0
    %1171 = vmatprep.subr.bf16.mxu0 0
    %1172 = vmatpush1.bf16.msra.mxu0 0
    %1173 = vmatprep.subr.bf16.mxu0 0
    %1174 = vmatpush1.bf16.msra.mxu0 0
    %1175 = vmatprep.subr.bf16.mxu0 0
    %1176 = vmatpush1.bf16.msra.mxu0 0
    %1177 = vmatprep.mubr.bf16.mxu0 0
    %1178 = vmatmul.mubr.bf16.gmra.mrb[0].mxu0 %v1143
    %v1179 = vpop.f32.mrb[0].mxu0
    %v1180 = vadd.f32 0.0, %v1179
    %v1181 = vpop.f32.mrb[0].mxu0
    %v1182 = vpop.f32.mrb[0].mxu0
    %v1183 = vadd.f32 0.0, %v1182
    %v1184 = vpop.f32.mrb[0].mxu0
    %1185 = vdwg.mxu0
    %v1186 = vadd.f32 %v1098, %v1180
    %v1187 = vadd.f32 %v1099, %v1183
    %v1188 = vadd.f32 %v1186, %v576
    %v1189 = vadd.f32 %v1187, %v577
    %1190 = vadd.xlane.f32.xlu0 %v1188
    %v1191 = vpop.xlane.xlu0 %1190
    %1192 = vadd.xlane.f32.xlu0 %v1189
    %v1193 = vpop.xlane.xlu0 %1192
    %v1194 = vrcp.pop 128.0
    %v1195 = vmul.f32 %v1191, %v1194
    %v1196 = vmul.f32 %v1193, %v1194
    %v1197 = vsub.f32 %v1188, %v1195
    %v1198 = vsub.f32 %v1189, %v1196
    %v1199 = vmul.f32 %v1197, %v1197
    %v1200 = vmul.f32 %v1198, %v1198
    %1201 = vadd.xlane.f32.xlu0 %v1199
    %v1202 = vpop.xlane.xlu0 %1201
    %1203 = vadd.xlane.f32.xlu0 %v1200
    %v1204 = vpop.xlane.xlu0 %1203
    %v1205 = vmul.f32 %v1202, %v1194
    %v1206 = vmul.f32 %v1204, %v1194
    %v1207 = vadd.f32 %v1205, 1e-05
    %v1208 = vadd.f32 %v1206, 1e-05
    %v1209 = vrsqrt.pop %v1207
    %v1210 = vrsqrt.pop %v1208
    %v1211 = vmul.f32 %v1197, %v1209
    %v1212 = vmul.f32 %v1198, %v1210
    %v1213 = vlaneseq
    %v1214 = vshrl.u32 %v1213, 7
    %v1215 = vsub.s32 0, %v1214
    %v1216 = vrot.slane %v574, %v1215
    %v1217 = vmul.f32 %v1211, %v1216
    %v1218 = vmul.f32 %v1212, %v1216
    %v1219 = vlaneseq
    %v1220 = vshrl.u32 %v1219, 7
    %v1221 = vsub.s32 0, %v1220
    %v1222 = vrot.slane %v575, %v1221
    %v1223 = vadd.f32 %v1217, %v1222
    %v1224 = vadd.f32 %v1218, %v1222
    %v1225 = vpack.c.bf16 %v1224, %v1223
    %s1226 = scalar_lea.vmem %s1, 192
    %v1227 = vld [vmem:[%s1226] sm:$0xf]
    %v1228 = vld [vmem:[%s1226 + $0x4] sm:$0xf]
    %v1229 = vld [vmem:[%s1226 + $0x8] sm:$0xf]
    %v1230 = vld [vmem:[%s1226 + $0xc] sm:$0xf]
    %v1231 = vld [vmem:[%s1226 + $0x10] sm:$0xf]
    %v1232 = vld [vmem:[%s1226 + $0x14] sm:$0xf]
    %v1233 = vld [vmem:[%s1226 + $0x18] sm:$0xf]
    %v1234 = vld [vmem:[%s1226 + $0x1c] sm:$0xf]
    %v1235 = vld [vmem:[%s1226 + $0x20] sm:$0xf]
    %v1236 = vld [vmem:[%s1226 + $0x24] sm:$0xf]
    %v1237 = vld [vmem:[%s1226 + $0x28] sm:$0xf]
    %v1238 = vld [vmem:[%s1226 + $0x2c] sm:$0xf]
    %v1239 = vld [vmem:[%s1226 + $0x30] sm:$0xf]
    %v1240 = vld [vmem:[%s1226 + $0x34] sm:$0xf]
    %v1241 = vld [vmem:[%s1226 + $0x38] sm:$0xf]
    %v1242 = vld [vmem:[%s1226 + $0x3c] sm:$0xf]
    %v1243 = vlaneseq
    %v1244 = vshrl.u32 %v1243, 7
    %v1245 = vsub.s32 3, %v1244
    %v1246 = vrot.slane %v31, %v1245
    %v1263 = vunpack.c.l.b16 %v1227
    %v1264 = vunpack.c.l.b16 %v1228
    %v1265 = vunpack.c.l.b16 %v1229
    %v1266 = vunpack.c.l.b16 %v1230
    %v1267 = vunpack.c.l.b16 %v1231
    %v1268 = vunpack.c.l.b16 %v1232
    %v1269 = vunpack.c.l.b16 %v1233
    %v1270 = vunpack.c.l.b16 %v1234
    %v1271 = vunpack.c.l.b16 %v1235
    %v1272 = vunpack.c.l.b16 %v1236
    %v1273 = vunpack.c.l.b16 %v1237
    %v1274 = vunpack.c.l.b16 %v1238
    %v1275 = vunpack.c.l.b16 %v1239
    %v1276 = vunpack.c.l.b16 %v1240
    %v1277 = vunpack.c.l.b16 %v1241
    %v1278 = vunpack.c.l.b16 %v1242
    %v1279 = vpack.c.b16 %v1264, %v1263
    %v1280 = vpack.c.b16 %v1266, %v1265
    %v1281 = vpack.c.b16 %v1268, %v1267
    %v1282 = vpack.c.b16 %v1270, %v1269
    %v1283 = vpack.c.b16 %v1272, %v1271
    %v1284 = vpack.c.b16 %v1274, %v1273
    %v1285 = vpack.c.b16 %v1276, %v1275
    %v1286 = vpack.c.b16 %v1278, %v1277
    %1295 = vmatprep.subr.bf16.mxu0 0
    %1296 = vmatpush1.bf16.msra.mxu0 %v1279
    %1297 = vmatprep.subr.bf16.mxu0 0
    %1298 = vmatpush1.bf16.msra.mxu0 %v1280
    %1299 = vmatprep.subr.bf16.mxu0 0
    %1300 = vmatpush1.bf16.msra.mxu0 %v1281
    %1301 = vmatprep.subr.bf16.mxu0 0
    %1302 = vmatpush1.bf16.msra.mxu0 %v1282
    %1303 = vmatprep.subr.bf16.mxu0 0
    %1304 = vmatpush1.bf16.msra.mxu0 %v1283
    %1305 = vmatprep.subr.bf16.mxu0 0
    %1306 = vmatpush1.bf16.msra.mxu0 %v1284
    %1307 = vmatprep.subr.bf16.mxu0 0
    %1308 = vmatpush1.bf16.msra.mxu0 %v1285
    %1309 = vmatprep.subr.bf16.mxu0 0
    %1310 = vmatpush1.bf16.msra.mxu0 %v1286
    %1311 = vmatprep.subr.bf16.mxu0 0
    %1312 = vmatpush1.bf16.msra.mxu0 0
    %1313 = vmatprep.subr.bf16.mxu0 0
    %1314 = vmatpush1.bf16.msra.mxu0 0
    %1315 = vmatprep.subr.bf16.mxu0 0
    %1316 = vmatpush1.bf16.msra.mxu0 0
    %1317 = vmatprep.subr.bf16.mxu0 0
    %1318 = vmatpush1.bf16.msra.mxu0 0
    %1319 = vmatprep.subr.bf16.mxu0 0
    %1320 = vmatpush1.bf16.msra.mxu0 0
    %1321 = vmatprep.subr.bf16.mxu0 0
    %1322 = vmatpush1.bf16.msra.mxu0 0
    %1323 = vmatprep.subr.bf16.mxu0 0
    %1324 = vmatpush1.bf16.msra.mxu0 0
    %1325 = vmatprep.subr.bf16.mxu0 0
    %1326 = vmatpush1.bf16.msra.mxu0 0
    %1327 = vmatprep.mubr.bf16.mxu0 0
    %1328 = vmatmul.mubr.bf16.gmra.mrb[0].mxu0 %v1225
    %v1329 = vpop.f32.mrb[0].mxu0
    %v1330 = vadd.f32 %v1246, %v1329
    %v1331 = vpop.f32.mrb[0].mxu0
    %v1332 = vpop.f32.mrb[0].mxu0
    %v1333 = vadd.f32 %v1246, %v1332
    %v1334 = vpop.f32.mrb[0].mxu0
    %1335 = vdwg.mxu0
    %v1336 = vpack.c.bf16 %v1333, %v1330
    %v1337 = vunpack.c.l.bf16 %v1336
    %v1338 = vunpack.c.h.bf16 %v1336
    %1339 = vmatprep.subr.bf16.mxu0 0
    %1340 = vmatpush1.bf16.msra.mxu0 %v346
    %1341 = vmatprep.subr.bf16.mxu0 0
    %1342 = vmatpush1.bf16.msra.mxu0 %v347
    %1343 = vmatprep.subr.bf16.mxu0 0
    %1344 = vmatpush1.bf16.msra.mxu0 %v348
    %1345 = vmatprep.subr.bf16.mxu0 0
    %1346 = vmatpush1.bf16.msra.mxu0 %v349
    %1347 = vmatprep.subr.bf16.mxu0 0
    %1348 = vmatpush1.bf16.msra.mxu0 %v350
    %1349 = vmatprep.subr.bf16.mxu0 0
    %1350 = vmatpush1.bf16.msra.mxu0 %v351
    %1351 = vmatprep.subr.bf16.mxu0 0
    %1352 = vmatpush1.bf16.msra.mxu0 %v352
    %1353 = vmatprep.subr.bf16.mxu0 0
    %1354 = vmatpush1.bf16.msra.mxu0 %v353
    %1355 = vmatprep.subr.bf16.mxu0 0
    %1356 = vmatpush1.bf16.msra.mxu0 0
    %1357 = vmatprep.subr.bf16.mxu0 0
    %1358 = vmatpush1.bf16.msra.mxu0 0
    %1359 = vmatprep.subr.bf16.mxu0 0
    %1360 = vmatpush1.bf16.msra.mxu0 0
    %1361 = vmatprep.subr.bf16.mxu0 0
    %1362 = vmatpush1.bf16.msra.mxu0 0
    %1363 = vmatprep.subr.bf16.mxu0 0
    %1364 = vmatpush1.bf16.msra.mxu0 0
    %1365 = vmatprep.subr.bf16.mxu0 0
    %1366 = vmatpush1.bf16.msra.mxu0 0
    %1367 = vmatprep.subr.bf16.mxu0 0
    %1368 = vmatpush1.bf16.msra.mxu0 0
    %1369 = vmatprep.subr.bf16.mxu0 0
    %1370 = vmatpush1.bf16.msra.mxu0 0
    %1371 = vmatprep.mubr.bf16.mxu0 0
    %1372 = vmatmul.mubr.bf16.gmra.mrb[0].mxu0 %v1225
    %v1373 = vpop.f32.mrb[0].mxu0
    %v1374 = vadd.f32 0.0, %v1373
    %v1375 = vpop.f32.mrb[0].mxu0
    %v1376 = vpop.f32.mrb[0].mxu0
    %v1377 = vadd.f32 0.0, %v1376
    %v1378 = vpop.f32.mrb[0].mxu0
    %1379 = vdwg.mxu0
    %v1380 = vpack.c.bf16 %v1377, %v1374
    %v1382 = vsel %vm733, %v1380, 0
    %1384 = vmatprep.subr.bf16.mxu0 0
    %1385 = vmatpush1.bf16.msra.mxu0 %v544
    %1386 = vmatprep.subr.bf16.mxu0 0
    %1387 = vmatpush1.bf16.msra.mxu0 %v545
    %1388 = vmatprep.subr.bf16.mxu0 0
    %1389 = vmatpush1.bf16.msra.mxu0 0
    %1390 = vmatprep.subr.bf16.mxu0 0
    %1391 = vmatpush1.bf16.msra.mxu0 0
    %1392 = vmatprep.subr.bf16.mxu0 0
    %1393 = vmatpush1.bf16.msra.mxu0 0
    %1394 = vmatprep.subr.bf16.mxu0 0
    %1395 = vmatpush1.bf16.msra.mxu0 0
    %1396 = vmatprep.subr.bf16.mxu0 0
    %1397 = vmatpush1.bf16.msra.mxu0 0
    %1398 = vmatprep.subr.bf16.mxu0 0
    %1399 = vmatpush1.bf16.msra.mxu0 0
    %1400 = vmatprep.subr.bf16.mxu0 0
    %1401 = vmatpush1.bf16.msra.mxu0 0
    %1402 = vmatprep.subr.bf16.mxu0 0
    %1403 = vmatpush1.bf16.msra.mxu0 0
    %1404 = vmatprep.subr.bf16.mxu0 0
    %1405 = vmatpush1.bf16.msra.mxu0 0
    %1406 = vmatprep.subr.bf16.mxu0 0
    %1407 = vmatpush1.bf16.msra.mxu0 0
    %1408 = vmatprep.subr.bf16.mxu0 0
    %1409 = vmatpush1.bf16.msra.mxu0 0
    %1410 = vmatprep.subr.bf16.mxu0 0
    %1411 = vmatpush1.bf16.msra.mxu0 0
    %1412 = vmatprep.subr.bf16.mxu0 0
    %1413 = vmatpush1.bf16.msra.mxu0 0
    %1414 = vmatprep.subr.bf16.mxu0 0
    %1415 = vmatpush1.bf16.msra.mxu0 0
    %1416 = vmatprep.mubr.bf16.mxu0 0
    %1417 = vmatmul.mubr.bf16.gmra.mrb[0].mxu0 %v1382
    %v1418 = vpop.f32.mrb[0].mxu0
    %v1419 = vadd.f32 0.0, %v1418
    %v1420 = vpop.f32.mrb[0].mxu0
    %v1421 = vpop.f32.mrb[0].mxu0
    %v1422 = vadd.f32 0.0, %v1421
    %v1423 = vpop.f32.mrb[0].mxu0
    %1424 = vdwg.mxu0
    %v1425 = vadd.f32 %v1337, %v1419
    %v1426 = vadd.f32 %v1338, %v1422
    %v1427 = vmax.f32 %v1425, 0.0
    %v1428 = vmax.f32 %v1426, 0.0
    %v1429 = vpack.c.bf16 %v1428, %v1427
    %s1430 = scalar_lea.vmem %s1, 256
    %v1431 = vld [vmem:[%s1430] sm:$0xf]
    %v1432 = vld [vmem:[%s1430 + $0x4] sm:$0xf]
    %v1433 = vld [vmem:[%s1430 + $0x8] sm:$0xf]
    %v1434 = vld [vmem:[%s1430 + $0xc] sm:$0xf]
    %v1435 = vld [vmem:[%s1430 + $0x10] sm:$0xf]
    %v1436 = vld [vmem:[%s1430 + $0x14] sm:$0xf]
    %v1437 = vld [vmem:[%s1430 + $0x18] sm:$0xf]
    %v1438 = vld [vmem:[%s1430 + $0x1c] sm:$0xf]
    %v1439 = vld [vmem:[%s1430 + $0x20] sm:$0xf]
    %v1440 = vld [vmem:[%s1430 + $0x24] sm:$0xf]
    %v1441 = vld [vmem:[%s1430 + $0x28] sm:$0xf]
    %v1442 = vld [vmem:[%s1430 + $0x2c] sm:$0xf]
    %v1443 = vld [vmem:[%s1430 + $0x30] sm:$0xf]
    %v1444 = vld [vmem:[%s1430 + $0x34] sm:$0xf]
    %v1445 = vld [vmem:[%s1430 + $0x38] sm:$0xf]
    %v1446 = vld [vmem:[%s1430 + $0x3c] sm:$0xf]
    %v1447 = vlaneseq
    %v1448 = vshrl.u32 %v1447, 7
    %v1449 = vsub.s32 4, %v1448
    %v1450 = vrot.slane %v31, %v1449
    %v1467 = vunpack.c.l.b16 %v1431
    %v1468 = vunpack.c.l.b16 %v1432
    %v1469 = vunpack.c.l.b16 %v1433
    %v1470 = vunpack.c.l.b16 %v1434
    %v1471 = vunpack.c.l.b16 %v1435
    %v1472 = vunpack.c.l.b16 %v1436
    %v1473 = vunpack.c.l.b16 %v1437
    %v1474 = vunpack.c.l.b16 %v1438
    %v1475 = vunpack.c.l.b16 %v1439
    %v1476 = vunpack.c.l.b16 %v1440
    %v1477 = vunpack.c.l.b16 %v1441
    %v1478 = vunpack.c.l.b16 %v1442
    %v1479 = vunpack.c.l.b16 %v1443
    %v1480 = vunpack.c.l.b16 %v1444
    %v1481 = vunpack.c.l.b16 %v1445
    %v1482 = vunpack.c.l.b16 %v1446
    %v1483 = vpack.c.b16 %v1468, %v1467
    %v1484 = vpack.c.b16 %v1470, %v1469
    %v1485 = vpack.c.b16 %v1472, %v1471
    %v1486 = vpack.c.b16 %v1474, %v1473
    %v1487 = vpack.c.b16 %v1476, %v1475
    %v1488 = vpack.c.b16 %v1478, %v1477
    %v1489 = vpack.c.b16 %v1480, %v1479
    %v1490 = vpack.c.b16 %v1482, %v1481
    %1499 = vmatprep.subr.bf16.mxu0 0
    %1500 = vmatpush1.bf16.msra.mxu0 %v1483
    %1501 = vmatprep.subr.bf16.mxu0 0
    %1502 = vmatpush1.bf16.msra.mxu0 %v1484
    %1503 = vmatprep.subr.bf16.mxu0 0
    %1504 = vmatpush1.bf16.msra.mxu0 %v1485
    %1505 = vmatprep.subr.bf16.mxu0 0
    %1506 = vmatpush1.bf16.msra.mxu0 %v1486
    %1507 = vmatprep.subr.bf16.mxu0 0
    %1508 = vmatpush1.bf16.msra.mxu0 %v1487
    %1509 = vmatprep.subr.bf16.mxu0 0
    %1510 = vmatpush1.bf16.msra.mxu0 %v1488
    %1511 = vmatprep.subr.bf16.mxu0 0
    %1512 = vmatpush1.bf16.msra.mxu0 %v1489
    %1513 = vmatprep.subr.bf16.mxu0 0
    %1514 = vmatpush1.bf16.msra.mxu0 %v1490
    %1515 = vmatprep.subr.bf16.mxu0 0
    %1516 = vmatpush1.bf16.msra.mxu0 0
    %1517 = vmatprep.subr.bf16.mxu0 0
    %1518 = vmatpush1.bf16.msra.mxu0 0
    %1519 = vmatprep.subr.bf16.mxu0 0
    %1520 = vmatpush1.bf16.msra.mxu0 0
    %1521 = vmatprep.subr.bf16.mxu0 0
    %1522 = vmatpush1.bf16.msra.mxu0 0
    %1523 = vmatprep.subr.bf16.mxu0 0
    %1524 = vmatpush1.bf16.msra.mxu0 0
    %1525 = vmatprep.subr.bf16.mxu0 0
    %1526 = vmatpush1.bf16.msra.mxu0 0
    %1527 = vmatprep.subr.bf16.mxu0 0
    %1528 = vmatpush1.bf16.msra.mxu0 0
    %1529 = vmatprep.subr.bf16.mxu0 0
    %1530 = vmatpush1.bf16.msra.mxu0 0
    %1531 = vmatprep.mubr.bf16.mxu0 0
    %1532 = vmatmul.mubr.bf16.gmra.mrb[0].mxu0 %v1429
    %v1533 = vpop.f32.mrb[0].mxu0
    %v1534 = vadd.f32 %v1450, %v1533
    %v1535 = vpop.f32.mrb[0].mxu0
    %v1536 = vpop.f32.mrb[0].mxu0
    %v1537 = vadd.f32 %v1450, %v1536
    %v1538 = vpop.f32.mrb[0].mxu0
    %1539 = vdwg.mxu0
    %v1540 = vpack.c.bf16 %v1537, %v1534
    %v1541 = vunpack.c.l.bf16 %v1540
    %v1542 = vunpack.c.h.bf16 %v1540
    %1543 = vmatprep.subr.bf16.mxu0 0
    %1544 = vmatpush1.bf16.msra.mxu0 %v354
    %1545 = vmatprep.subr.bf16.mxu0 0
    %1546 = vmatpush1.bf16.msra.mxu0 %v355
    %1547 = vmatprep.subr.bf16.mxu0 0
    %1548 = vmatpush1.bf16.msra.mxu0 %v356
    %1549 = vmatprep.subr.bf16.mxu0 0
    %1550 = vmatpush1.bf16.msra.mxu0 %v357
    %1551 = vmatprep.subr.bf16.mxu0 0
    %1552 = vmatpush1.bf16.msra.mxu0 %v358
    %1553 = vmatprep.subr.bf16.mxu0 0
    %1554 = vmatpush1.bf16.msra.mxu0 %v359
    %1555 = vmatprep.subr.bf16.mxu0 0
    %1556 = vmatpush1.bf16.msra.mxu0 %v360
    %1557 = vmatprep.subr.bf16.mxu0 0
    %1558 = vmatpush1.bf16.msra.mxu0 %v361
    %1559 = vmatprep.subr.bf16.mxu0 0
    %1560 = vmatpush1.bf16.msra.mxu0 0
    %1561 = vmatprep.subr.bf16.mxu0 0
    %1562 = vmatpush1.bf16.msra.mxu0 0
    %1563 = vmatprep.subr.bf16.mxu0 0
    %1564 = vmatpush1.bf16.msra.mxu0 0
    %1565 = vmatprep.subr.bf16.mxu0 0
    %1566 = vmatpush1.bf16.msra.mxu0 0
    %1567 = vmatprep.subr.bf16.mxu0 0
    %1568 = vmatpush1.bf16.msra.mxu0 0
    %1569 = vmatprep.subr.bf16.mxu0 0
    %1570 = vmatpush1.bf16.msra.mxu0 0
    %1571 = vmatprep.subr.bf16.mxu0 0
    %1572 = vmatpush1.bf16.msra.mxu0 0
    %1573 = vmatprep.subr.bf16.mxu0 0
    %1574 = vmatpush1.bf16.msra.mxu0 0
    %1575 = vmatprep.mubr.bf16.mxu0 0
    %1576 = vmatmul.mubr.bf16.gmra.mrb[0].mxu0 %v1429
    %v1577 = vpop.f32.mrb[0].mxu0
    %v1578 = vadd.f32 0.0, %v1577
    %v1579 = vpop.f32.mrb[0].mxu0
    %v1580 = vpop.f32.mrb[0].mxu0
    %v1581 = vadd.f32 0.0, %v1580
    %v1582 = vpop.f32.mrb[0].mxu0
    %1583 = vdwg.mxu0
    %v1584 = vpack.c.bf16 %v1581, %v1578
    %v1586 = vsel %vm733, %v1584, 0
    %1588 = vmatprep.subr.bf16.mxu0 0
    %1589 = vmatpush1.bf16.msra.mxu0 %v546
    %1590 = vmatprep.subr.bf16.mxu0 0
    %1591 = vmatpush1.bf16.msra.mxu0 %v547
    %1592 = vmatprep.subr.bf16.mxu0 0
    %1593 = vmatpush1.bf16.msra.mxu0 0
    %1594 = vmatprep.subr.bf16.mxu0 0
    %1595 = vmatpush1.bf16.msra.mxu0 0
    %1596 = vmatprep.subr.bf16.mxu0 0
    %1597 = vmatpush1.bf16.msra.mxu0 0
    %1598 = vmatprep.subr.bf16.mxu0 0
    %1599 = vmatpush1.bf16.msra.mxu0 0
    %1600 = vmatprep.subr.bf16.mxu0 0
    %1601 = vmatpush1.bf16.msra.mxu0 0
    %1602 = vmatprep.subr.bf16.mxu0 0
    %1603 = vmatpush1.bf16.msra.mxu0 0
    %1604 = vmatprep.subr.bf16.mxu0 0
    %1605 = vmatpush1.bf16.msra.mxu0 0
    %1606 = vmatprep.subr.bf16.mxu0 0
    %1607 = vmatpush1.bf16.msra.mxu0 0
    %1608 = vmatprep.subr.bf16.mxu0 0
    %1609 = vmatpush1.bf16.msra.mxu0 0
    %1610 = vmatprep.subr.bf16.mxu0 0
    %1611 = vmatpush1.bf16.msra.mxu0 0
    %1612 = vmatprep.subr.bf16.mxu0 0
    %1613 = vmatpush1.bf16.msra.mxu0 0
    %1614 = vmatprep.subr.bf16.mxu0 0
    %1615 = vmatpush1.bf16.msra.mxu0 0
    %1616 = vmatprep.subr.bf16.mxu0 0
    %1617 = vmatpush1.bf16.msra.mxu0 0
    %1618 = vmatprep.subr.bf16.mxu0 0
    %1619 = vmatpush1.bf16.msra.mxu0 0
    %1620 = vmatprep.mubr.bf16.mxu0 0
    %1621 = vmatmul.mubr.bf16.gmra.mrb[0].mxu0 %v1586
    %v1622 = vpop.f32.mrb[0].mxu0
    %v1623 = vadd.f32 0.0, %v1622
    %v1624 = vpop.f32.mrb[0].mxu0
    %v1625 = vpop.f32.mrb[0].mxu0
    %v1626 = vadd.f32 0.0, %v1625
    %v1627 = vpop.f32.mrb[0].mxu0
    %1628 = vdwg.mxu0
    %v1629 = vadd.f32 %v1541, %v1623
    %v1630 = vadd.f32 %v1542, %v1626
    %v1631 = vmax.f32 %v1629, 0.0
    %v1632 = vmax.f32 %v1630, 0.0
    %v1633 = vpack.c.bf16 %v1632, %v1631
    %s1634 = scalar_lea.vmem %s1, 320
    %v1635 = vld [vmem:[%s1634] sm:$0xf]
    %v1636 = vld [vmem:[%s1634 + $0x4] sm:$0xf]
    %v1637 = vld [vmem:[%s1634 + $0x8] sm:$0xf]
    %v1638 = vld [vmem:[%s1634 + $0xc] sm:$0xf]
    %v1639 = vld [vmem:[%s1634 + $0x10] sm:$0xf]
    %v1640 = vld [vmem:[%s1634 + $0x14] sm:$0xf]
    %v1641 = vld [vmem:[%s1634 + $0x18] sm:$0xf]
    %v1642 = vld [vmem:[%s1634 + $0x1c] sm:$0xf]
    %v1643 = vld [vmem:[%s1634 + $0x20] sm:$0xf]
    %v1644 = vld [vmem:[%s1634 + $0x24] sm:$0xf]
    %v1645 = vld [vmem:[%s1634 + $0x28] sm:$0xf]
    %v1646 = vld [vmem:[%s1634 + $0x2c] sm:$0xf]
    %v1647 = vld [vmem:[%s1634 + $0x30] sm:$0xf]
    %v1648 = vld [vmem:[%s1634 + $0x34] sm:$0xf]
    %v1649 = vld [vmem:[%s1634 + $0x38] sm:$0xf]
    %v1650 = vld [vmem:[%s1634 + $0x3c] sm:$0xf]
    %v1651 = vlaneseq
    %v1652 = vshrl.u32 %v1651, 7
    %v1653 = vsub.s32 5, %v1652
    %v1654 = vrot.slane %v31, %v1653
    %v1671 = vunpack.c.l.b16 %v1635
    %v1672 = vunpack.c.l.b16 %v1636
    %v1673 = vunpack.c.l.b16 %v1637
    %v1674 = vunpack.c.l.b16 %v1638
    %v1675 = vunpack.c.l.b16 %v1639
    %v1676 = vunpack.c.l.b16 %v1640
    %v1677 = vunpack.c.l.b16 %v1641
    %v1678 = vunpack.c.l.b16 %v1642
    %v1679 = vunpack.c.l.b16 %v1643
    %v1680 = vunpack.c.l.b16 %v1644
    %v1681 = vunpack.c.l.b16 %v1645
    %v1682 = vunpack.c.l.b16 %v1646
    %v1683 = vunpack.c.l.b16 %v1647
    %v1684 = vunpack.c.l.b16 %v1648
    %v1685 = vunpack.c.l.b16 %v1649
    %v1686 = vunpack.c.l.b16 %v1650
    %v1687 = vpack.c.b16 %v1672, %v1671
    %v1688 = vpack.c.b16 %v1674, %v1673
    %v1689 = vpack.c.b16 %v1676, %v1675
    %v1690 = vpack.c.b16 %v1678, %v1677
    %v1691 = vpack.c.b16 %v1680, %v1679
    %v1692 = vpack.c.b16 %v1682, %v1681
    %v1693 = vpack.c.b16 %v1684, %v1683
    %v1694 = vpack.c.b16 %v1686, %v1685
    %1703 = vmatprep.subr.bf16.mxu0 0
    %1704 = vmatpush1.bf16.msra.mxu0 %v1687
    %1705 = vmatprep.subr.bf16.mxu0 0
    %1706 = vmatpush1.bf16.msra.mxu0 %v1688
    %1707 = vmatprep.subr.bf16.mxu0 0
    %1708 = vmatpush1.bf16.msra.mxu0 %v1689
    %1709 = vmatprep.subr.bf16.mxu0 0
    %1710 = vmatpush1.bf16.msra.mxu0 %v1690
    %1711 = vmatprep.subr.bf16.mxu0 0
    %1712 = vmatpush1.bf16.msra.mxu0 %v1691
    %1713 = vmatprep.subr.bf16.mxu0 0
    %1714 = vmatpush1.bf16.msra.mxu0 %v1692
    %1715 = vmatprep.subr.bf16.mxu0 0
    %1716 = vmatpush1.bf16.msra.mxu0 %v1693
    %1717 = vmatprep.subr.bf16.mxu0 0
    %1718 = vmatpush1.bf16.msra.mxu0 %v1694
    %1719 = vmatprep.subr.bf16.mxu0 0
    %1720 = vmatpush1.bf16.msra.mxu0 0
    %1721 = vmatprep.subr.bf16.mxu0 0
    %1722 = vmatpush1.bf16.msra.mxu0 0
    %1723 = vmatprep.subr.bf16.mxu0 0
    %1724 = vmatpush1.bf16.msra.mxu0 0
    %1725 = vmatprep.subr.bf16.mxu0 0
    %1726 = vmatpush1.bf16.msra.mxu0 0
    %1727 = vmatprep.subr.bf16.mxu0 0
    %1728 = vmatpush1.bf16.msra.mxu0 0
    %1729 = vmatprep.subr.bf16.mxu0 0
    %1730 = vmatpush1.bf16.msra.mxu0 0
    %1731 = vmatprep.subr.bf16.mxu0 0
    %1732 = vmatpush1.bf16.msra.mxu0 0
    %1733 = vmatprep.subr.bf16.mxu0 0
    %1734 = vmatpush1.bf16.msra.mxu0 0
    %1735 = vmatprep.mubr.bf16.mxu0 0
    %1736 = vmatmul.mubr.bf16.gmra.mrb[0].mxu0 %v1633
    %v1737 = vpop.f32.mrb[0].mxu0
    %v1738 = vadd.f32 %v1654, %v1737
    %v1739 = vpop.f32.mrb[0].mxu0
    %v1740 = vpop.f32.mrb[0].mxu0
    %v1741 = vadd.f32 %v1654, %v1740
    %v1742 = vpop.f32.mrb[0].mxu0
    %1743 = vdwg.mxu0
    %v1744 = vpack.c.bf16 %v1741, %v1738
    %v1745 = vunpack.c.l.bf16 %v1744
    %v1746 = vunpack.c.h.bf16 %v1744
    %1747 = vmatprep.subr.bf16.mxu0 0
    %1748 = vmatpush1.bf16.msra.mxu0 %v362
    %1749 = vmatprep.subr.bf16.mxu0 0
    %1750 = vmatpush1.bf16.msra.mxu0 %v363
    %1751 = vmatprep.subr.bf16.mxu0 0
    %1752 = vmatpush1.bf16.msra.mxu0 %v364
    %1753 = vmatprep.subr.bf16.mxu0 0
    %1754 = vmatpush1.bf16.msra.mxu0 %v365
    %1755 = vmatprep.subr.bf16.mxu0 0
    %1756 = vmatpush1.bf16.msra.mxu0 %v366
    %1757 = vmatprep.subr.bf16.mxu0 0
    %1758 = vmatpush1.bf16.msra.mxu0 %v367
    %1759 = vmatprep.subr.bf16.mxu0 0
    %1760 = vmatpush1.bf16.msra.mxu0 %v368
    %1761 = vmatprep.subr.bf16.mxu0 0
    %1762 = vmatpush1.bf16.msra.mxu0 %v369
    %1763 = vmatprep.subr.bf16.mxu0 0
    %1764 = vmatpush1.bf16.msra.mxu0 0
    %1765 = vmatprep.subr.bf16.mxu0 0
    %1766 = vmatpush1.bf16.msra.mxu0 0
    %1767 = vmatprep.subr.bf16.mxu0 0
    %1768 = vmatpush1.bf16.msra.mxu0 0
    %1769 = vmatprep.subr.bf16.mxu0 0
    %1770 = vmatpush1.bf16.msra.mxu0 0
    %1771 = vmatprep.subr.bf16.mxu0 0
    %1772 = vmatpush1.bf16.msra.mxu0 0
    %1773 = vmatprep.subr.bf16.mxu0 0
    %1774 = vmatpush1.bf16.msra.mxu0 0
    %1775 = vmatprep.subr.bf16.mxu0 0
    %1776 = vmatpush1.bf16.msra.mxu0 0
    %1777 = vmatprep.subr.bf16.mxu0 0
    %1778 = vmatpush1.bf16.msra.mxu0 0
    %1779 = vmatprep.mubr.bf16.mxu0 0
    %1780 = vmatmul.mubr.bf16.gmra.mrb[0].mxu0 %v1633
    %v1781 = vpop.f32.mrb[0].mxu0
    %v1782 = vadd.f32 0.0, %v1781
    %v1783 = vpop.f32.mrb[0].mxu0
    %v1784 = vpop.f32.mrb[0].mxu0
    %v1785 = vadd.f32 0.0, %v1784
    %v1786 = vpop.f32.mrb[0].mxu0
    %1787 = vdwg.mxu0
    %v1788 = vpack.c.bf16 %v1785, %v1782
    %v1790 = vsel %vm733, %v1788, 0
    %1792 = vmatprep.subr.bf16.mxu0 0
    %1793 = vmatpush1.bf16.msra.mxu0 %v548
    %1794 = vmatprep.subr.bf16.mxu0 0
    %1795 = vmatpush1.bf16.msra.mxu0 %v549
    %1796 = vmatprep.subr.bf16.mxu0 0
    %1797 = vmatpush1.bf16.msra.mxu0 0
    %1798 = vmatprep.subr.bf16.mxu0 0
    %1799 = vmatpush1.bf16.msra.mxu0 0
    %1800 = vmatprep.subr.bf16.mxu0 0
    %1801 = vmatpush1.bf16.msra.mxu0 0
    %1802 = vmatprep.subr.bf16.mxu0 0
    %1803 = vmatpush1.bf16.msra.mxu0 0
    %1804 = vmatprep.subr.bf16.mxu0 0
    %1805 = vmatpush1.bf16.msra.mxu0 0
    %1806 = vmatprep.subr.bf16.mxu0 0
    %1807 = vmatpush1.bf16.msra.mxu0 0
    %1808 = vmatprep.subr.bf16.mxu0 0
    %1809 = vmatpush1.bf16.msra.mxu0 0
    %1810 = vmatprep.subr.bf16.mxu0 0
    %1811 = vmatpush1.bf16.msra.mxu0 0
    %1812 = vmatprep.subr.bf16.mxu0 0
    %1813 = vmatpush1.bf16.msra.mxu0 0
    %1814 = vmatprep.subr.bf16.mxu0 0
    %1815 = vmatpush1.bf16.msra.mxu0 0
    %1816 = vmatprep.subr.bf16.mxu0 0
    %1817 = vmatpush1.bf16.msra.mxu0 0
    %1818 = vmatprep.subr.bf16.mxu0 0
    %1819 = vmatpush1.bf16.msra.mxu0 0
    %1820 = vmatprep.subr.bf16.mxu0 0
    %1821 = vmatpush1.bf16.msra.mxu0 0
    %1822 = vmatprep.subr.bf16.mxu0 0
    %1823 = vmatpush1.bf16.msra.mxu0 0
    %1824 = vmatprep.mubr.bf16.mxu0 0
    %1825 = vmatmul.mubr.bf16.gmra.mrb[0].mxu0 %v1790
    %v1826 = vpop.f32.mrb[0].mxu0
    %v1827 = vadd.f32 0.0, %v1826
    %v1828 = vpop.f32.mrb[0].mxu0
    %v1829 = vpop.f32.mrb[0].mxu0
    %v1830 = vadd.f32 0.0, %v1829
    %v1831 = vpop.f32.mrb[0].mxu0
    %1832 = vdwg.mxu0
    %v1833 = vadd.f32 %v1745, %v1827
    %v1834 = vadd.f32 %v1746, %v1830
    %v1835 = vadd.f32 %v1833, %v1223
    %v1836 = vadd.f32 %v1834, %v1224
    %1837 = vadd.xlane.f32.xlu0 %v1835
    %v1838 = vpop.xlane.xlu0 %1837
    %1839 = vadd.xlane.f32.xlu0 %v1836
    %v1840 = vpop.xlane.xlu0 %1839
    %v1841 = vmul.f32 %v1838, %v1194
    %v1842 = vmul.f32 %v1840, %v1194
    %v1843 = vsub.f32 %v1835, %v1841
    %v1844 = vsub.f32 %v1836, %v1842
    %v1845 = vmul.f32 %v1843, %v1843
    %v1846 = vmul.f32 %v1844, %v1844
    %1847 = vadd.xlane.f32.xlu0 %v1845
    %v1848 = vpop.xlane.xlu0 %1847
    %1849 = vadd.xlane.f32.xlu0 %v1846
    %v1850 = vpop.xlane.xlu0 %1849
    %v1851 = vmul.f32 %v1848, %v1194
    %v1852 = vmul.f32 %v1850, %v1194
    %v1853 = vadd.f32 %v1851, 1e-05
    %v1854 = vadd.f32 %v1852, 1e-05
    %v1855 = vrsqrt.pop %v1853
    %v1856 = vrsqrt.pop %v1854
    %v1857 = vmul.f32 %v1843, %v1855
    %v1858 = vmul.f32 %v1844, %v1856
    %v1859 = vlaneseq
    %v1860 = vshrl.u32 %v1859, 7
    %v1861 = vsub.s32 1, %v1860
    %v1862 = vrot.slane %v574, %v1861
    %v1863 = vmul.f32 %v1857, %v1862
    %v1864 = vmul.f32 %v1858, %v1862
    %v1865 = vlaneseq
    %v1866 = vshrl.u32 %v1865, 7
    %v1867 = vsub.s32 1, %v1866
    %v1868 = vrot.slane %v575, %v1867
    %v1869 = vadd.f32 %v1863, %v1868
    %v1870 = vadd.f32 %v1864, %v1868
    %v1871 = vpack.c.bf16 %v1870, %v1869
    %s1872 = scalar_lea.vmem %s1, 384
    %v1873 = vld [vmem:[%s1872] sm:$0xf]
    %v1874 = vld [vmem:[%s1872 + $0x4] sm:$0xf]
    %v1875 = vld [vmem:[%s1872 + $0x8] sm:$0xf]
    %v1876 = vld [vmem:[%s1872 + $0xc] sm:$0xf]
    %v1877 = vld [vmem:[%s1872 + $0x10] sm:$0xf]
    %v1878 = vld [vmem:[%s1872 + $0x14] sm:$0xf]
    %v1879 = vld [vmem:[%s1872 + $0x18] sm:$0xf]
    %v1880 = vld [vmem:[%s1872 + $0x1c] sm:$0xf]
    %v1881 = vld [vmem:[%s1872 + $0x20] sm:$0xf]
    %v1882 = vld [vmem:[%s1872 + $0x24] sm:$0xf]
    %v1883 = vld [vmem:[%s1872 + $0x28] sm:$0xf]
    %v1884 = vld [vmem:[%s1872 + $0x2c] sm:$0xf]
    %v1885 = vld [vmem:[%s1872 + $0x30] sm:$0xf]
    %v1886 = vld [vmem:[%s1872 + $0x34] sm:$0xf]
    %v1887 = vld [vmem:[%s1872 + $0x38] sm:$0xf]
    %v1888 = vld [vmem:[%s1872 + $0x3c] sm:$0xf]
    %v1889 = vlaneseq
    %v1890 = vshrl.u32 %v1889, 7
    %v1891 = vsub.s32 6, %v1890
    %v1892 = vrot.slane %v31, %v1891
    %v1909 = vunpack.c.l.b16 %v1873
    %v1910 = vunpack.c.l.b16 %v1874
    %v1911 = vunpack.c.l.b16 %v1875
    %v1912 = vunpack.c.l.b16 %v1876
    %v1913 = vunpack.c.l.b16 %v1877
    %v1914 = vunpack.c.l.b16 %v1878
    %v1915 = vunpack.c.l.b16 %v1879
    %v1916 = vunpack.c.l.b16 %v1880
    %v1917 = vunpack.c.l.b16 %v1881
    %v1918 = vunpack.c.l.b16 %v1882
    %v1919 = vunpack.c.l.b16 %v1883
    %v1920 = vunpack.c.l.b16 %v1884
    %v1921 = vunpack.c.l.b16 %v1885
    %v1922 = vunpack.c.l.b16 %v1886
    %v1923 = vunpack.c.l.b16 %v1887
    %v1924 = vunpack.c.l.b16 %v1888
    %v1925 = vpack.c.b16 %v1910, %v1909
    %v1926 = vpack.c.b16 %v1912, %v1911
    %v1927 = vpack.c.b16 %v1914, %v1913
    %v1928 = vpack.c.b16 %v1916, %v1915
    %v1929 = vpack.c.b16 %v1918, %v1917
    %v1930 = vpack.c.b16 %v1920, %v1919
    %v1931 = vpack.c.b16 %v1922, %v1921
    %v1932 = vpack.c.b16 %v1924, %v1923
    %1941 = vmatprep.subr.bf16.mxu0 0
    %1942 = vmatpush1.bf16.msra.mxu0 %v1925
    %1943 = vmatprep.subr.bf16.mxu0 0
    %1944 = vmatpush1.bf16.msra.mxu0 %v1926
    %1945 = vmatprep.subr.bf16.mxu0 0
    %1946 = vmatpush1.bf16.msra.mxu0 %v1927
    %1947 = vmatprep.subr.bf16.mxu0 0
    %1948 = vmatpush1.bf16.msra.mxu0 %v1928
    %1949 = vmatprep.subr.bf16.mxu0 0
    %1950 = vmatpush1.bf16.msra.mxu0 %v1929
    %1951 = vmatprep.subr.bf16.mxu0 0
    %1952 = vmatpush1.bf16.msra.mxu0 %v1930
    %1953 = vmatprep.subr.bf16.mxu0 0
    %1954 = vmatpush1.bf16.msra.mxu0 %v1931
    %1955 = vmatprep.subr.bf16.mxu0 0
    %1956 = vmatpush1.bf16.msra.mxu0 %v1932
    %1957 = vmatprep.subr.bf16.mxu0 0
    %1958 = vmatpush1.bf16.msra.mxu0 0
    %1959 = vmatprep.subr.bf16.mxu0 0
    %1960 = vmatpush1.bf16.msra.mxu0 0
    %1961 = vmatprep.subr.bf16.mxu0 0
    %1962 = vmatpush1.bf16.msra.mxu0 0
    %1963 = vmatprep.subr.bf16.mxu0 0
    %1964 = vmatpush1.bf16.msra.mxu0 0
    %1965 = vmatprep.subr.bf16.mxu0 0
    %1966 = vmatpush1.bf16.msra.mxu0 0
    %1967 = vmatprep.subr.bf16.mxu0 0
    %1968 = vmatpush1.bf16.msra.mxu0 0
    %1969 = vmatprep.subr.bf16.mxu0 0
    %1970 = vmatpush1.bf16.msra.mxu0 0
    %1971 = vmatprep.subr.bf16.mxu0 0
    %1972 = vmatpush1.bf16.msra.mxu0 0
    %1973 = vmatprep.mubr.bf16.mxu0 0
    %1974 = vmatmul.mubr.bf16.gmra.mrb[0].mxu0 %v1871
    %v1975 = vpop.f32.mrb[0].mxu0
    %v1976 = vadd.f32 %v1892, %v1975
    %v1977 = vpop.f32.mrb[0].mxu0
    %v1978 = vpop.f32.mrb[0].mxu0
    %v1979 = vadd.f32 %v1892, %v1978
    %v1980 = vpop.f32.mrb[0].mxu0
    %1981 = vdwg.mxu0
    %v1982 = vpack.c.bf16 %v1979, %v1976
    %v1983 = vunpack.c.l.bf16 %v1982
    %v1984 = vunpack.c.h.bf16 %v1982
    %1985 = vmatprep.subr.bf16.mxu0 0
    %1986 = vmatpush1.bf16.msra.mxu0 %v370
    %1987 = vmatprep.subr.bf16.mxu0 0
    %1988 = vmatpush1.bf16.msra.mxu0 %v371
    %1989 = vmatprep.subr.bf16.mxu0 0
    %1990 = vmatpush1.bf16.msra.mxu0 %v372
    %1991 = vmatprep.subr.bf16.mxu0 0
    %1992 = vmatpush1.bf16.msra.mxu0 %v373
    %1993 = vmatprep.subr.bf16.mxu0 0
    %1994 = vmatpush1.bf16.msra.mxu0 %v374
    %1995 = vmatprep.subr.bf16.mxu0 0
    %1996 = vmatpush1.bf16.msra.mxu0 %v375
    %1997 = vmatprep.subr.bf16.mxu0 0
    %1998 = vmatpush1.bf16.msra.mxu0 %v376
    %1999 = vmatprep.subr.bf16.mxu0 0
    %2000 = vmatpush1.bf16.msra.mxu0 %v377
    %2001 = vmatprep.subr.bf16.mxu0 0
    %2002 = vmatpush1.bf16.msra.mxu0 0
    %2003 = vmatprep.subr.bf16.mxu0 0
    %2004 = vmatpush1.bf16.msra.mxu0 0
    %2005 = vmatprep.subr.bf16.mxu0 0
    %2006 = vmatpush1.bf16.msra.mxu0 0
    %2007 = vmatprep.subr.bf16.mxu0 0
    %2008 = vmatpush1.bf16.msra.mxu0 0
    %2009 = vmatprep.subr.bf16.mxu0 0
    %2010 = vmatpush1.bf16.msra.mxu0 0
    %2011 = vmatprep.subr.bf16.mxu0 0
    %2012 = vmatpush1.bf16.msra.mxu0 0
    %2013 = vmatprep.subr.bf16.mxu0 0
    %2014 = vmatpush1.bf16.msra.mxu0 0
    %2015 = vmatprep.subr.bf16.mxu0 0
    %2016 = vmatpush1.bf16.msra.mxu0 0
    %2017 = vmatprep.mubr.bf16.mxu0 0
    %2018 = vmatmul.mubr.bf16.gmra.mrb[0].mxu0 %v1871
    %v2019 = vpop.f32.mrb[0].mxu0
    %v2020 = vadd.f32 0.0, %v2019
    %v2021 = vpop.f32.mrb[0].mxu0
    %v2022 = vpop.f32.mrb[0].mxu0
    %v2023 = vadd.f32 0.0, %v2022
    %v2024 = vpop.f32.mrb[0].mxu0
    %2025 = vdwg.mxu0
    %v2026 = vpack.c.bf16 %v2023, %v2020
    %v2028 = vsel %vm733, %v2026, 0
    %2030 = vmatprep.subr.bf16.mxu0 0
    %2031 = vmatpush1.bf16.msra.mxu0 %v550
    %2032 = vmatprep.subr.bf16.mxu0 0
    %2033 = vmatpush1.bf16.msra.mxu0 %v551
    %2034 = vmatprep.subr.bf16.mxu0 0
    %2035 = vmatpush1.bf16.msra.mxu0 0
    %2036 = vmatprep.subr.bf16.mxu0 0
    %2037 = vmatpush1.bf16.msra.mxu0 0
    %2038 = vmatprep.subr.bf16.mxu0 0
    %2039 = vmatpush1.bf16.msra.mxu0 0
    %2040 = vmatprep.subr.bf16.mxu0 0
    %2041 = vmatpush1.bf16.msra.mxu0 0
    %2042 = vmatprep.subr.bf16.mxu0 0
    %2043 = vmatpush1.bf16.msra.mxu0 0
    %2044 = vmatprep.subr.bf16.mxu0 0
    %2045 = vmatpush1.bf16.msra.mxu0 0
    %2046 = vmatprep.subr.bf16.mxu0 0
    %2047 = vmatpush1.bf16.msra.mxu0 0
    %2048 = vmatprep.subr.bf16.mxu0 0
    %2049 = vmatpush1.bf16.msra.mxu0 0
    %2050 = vmatprep.subr.bf16.mxu0 0
    %2051 = vmatpush1.bf16.msra.mxu0 0
    %2052 = vmatprep.subr.bf16.mxu0 0
    %2053 = vmatpush1.bf16.msra.mxu0 0
    %2054 = vmatprep.subr.bf16.mxu0 0
    %2055 = vmatpush1.bf16.msra.mxu0 0
    %2056 = vmatprep.subr.bf16.mxu0 0
    %2057 = vmatpush1.bf16.msra.mxu0 0
    %2058 = vmatprep.subr.bf16.mxu0 0
    %2059 = vmatpush1.bf16.msra.mxu0 0
    %2060 = vmatprep.subr.bf16.mxu0 0
    %2061 = vmatpush1.bf16.msra.mxu0 0
    %2062 = vmatprep.mubr.bf16.mxu0 0
    %2063 = vmatmul.mubr.bf16.gmra.mrb[0].mxu0 %v2028
    %v2064 = vpop.f32.mrb[0].mxu0
    %v2065 = vadd.f32 0.0, %v2064
    %v2066 = vpop.f32.mrb[0].mxu0
    %v2067 = vpop.f32.mrb[0].mxu0
    %v2068 = vadd.f32 0.0, %v2067
    %v2069 = vpop.f32.mrb[0].mxu0
    %2070 = vdwg.mxu0
    %v2071 = vadd.f32 %v1983, %v2065
    %v2072 = vadd.f32 %v1984, %v2068
    %v2073 = vmax.f32 %v2071, 0.0
    %v2074 = vmax.f32 %v2072, 0.0
    %v2075 = vpack.c.bf16 %v2074, %v2073
    %s2076 = scalar_lea.vmem %s1, 448
    %v2077 = vld [vmem:[%s2076] sm:$0xf]
    %v2078 = vld [vmem:[%s2076 + $0x4] sm:$0xf]
    %v2079 = vld [vmem:[%s2076 + $0x8] sm:$0xf]
    %v2080 = vld [vmem:[%s2076 + $0xc] sm:$0xf]
    %v2081 = vld [vmem:[%s2076 + $0x10] sm:$0xf]
    %v2082 = vld [vmem:[%s2076 + $0x14] sm:$0xf]
    %v2083 = vld [vmem:[%s2076 + $0x18] sm:$0xf]
    %v2084 = vld [vmem:[%s2076 + $0x1c] sm:$0xf]
    %v2085 = vld [vmem:[%s2076 + $0x20] sm:$0xf]
    %v2086 = vld [vmem:[%s2076 + $0x24] sm:$0xf]
    %v2087 = vld [vmem:[%s2076 + $0x28] sm:$0xf]
    %v2088 = vld [vmem:[%s2076 + $0x2c] sm:$0xf]
    %v2089 = vld [vmem:[%s2076 + $0x30] sm:$0xf]
    %v2090 = vld [vmem:[%s2076 + $0x34] sm:$0xf]
    %v2091 = vld [vmem:[%s2076 + $0x38] sm:$0xf]
    %v2092 = vld [vmem:[%s2076 + $0x3c] sm:$0xf]
    %v2093 = vlaneseq
    %v2094 = vshrl.u32 %v2093, 7
    %v2095 = vsub.s32 7, %v2094
    %v2096 = vrot.slane %v31, %v2095
    %v2113 = vunpack.c.l.b16 %v2077
    %v2114 = vunpack.c.l.b16 %v2078
    %v2115 = vunpack.c.l.b16 %v2079
    %v2116 = vunpack.c.l.b16 %v2080
    %v2117 = vunpack.c.l.b16 %v2081
    %v2118 = vunpack.c.l.b16 %v2082
    %v2119 = vunpack.c.l.b16 %v2083
    %v2120 = vunpack.c.l.b16 %v2084
    %v2121 = vunpack.c.l.b16 %v2085
    %v2122 = vunpack.c.l.b16 %v2086
    %v2123 = vunpack.c.l.b16 %v2087
    %v2124 = vunpack.c.l.b16 %v2088
    %v2125 = vunpack.c.l.b16 %v2089
    %v2126 = vunpack.c.l.b16 %v2090
    %v2127 = vunpack.c.l.b16 %v2091
    %v2128 = vunpack.c.l.b16 %v2092
    %v2129 = vpack.c.b16 %v2114, %v2113
    %v2130 = vpack.c.b16 %v2116, %v2115
    %v2131 = vpack.c.b16 %v2118, %v2117
    %v2132 = vpack.c.b16 %v2120, %v2119
    %v2133 = vpack.c.b16 %v2122, %v2121
    %v2134 = vpack.c.b16 %v2124, %v2123
    %v2135 = vpack.c.b16 %v2126, %v2125
    %v2136 = vpack.c.b16 %v2128, %v2127
    %2145 = vmatprep.subr.bf16.mxu0 0
    %2146 = vmatpush1.bf16.msra.mxu0 %v2129
    %2147 = vmatprep.subr.bf16.mxu0 0
    %2148 = vmatpush1.bf16.msra.mxu0 %v2130
    %2149 = vmatprep.subr.bf16.mxu0 0
    %2150 = vmatpush1.bf16.msra.mxu0 %v2131
    %2151 = vmatprep.subr.bf16.mxu0 0
    %2152 = vmatpush1.bf16.msra.mxu0 %v2132
    %2153 = vmatprep.subr.bf16.mxu0 0
    %2154 = vmatpush1.bf16.msra.mxu0 %v2133
    %2155 = vmatprep.subr.bf16.mxu0 0
    %2156 = vmatpush1.bf16.msra.mxu0 %v2134
    %2157 = vmatprep.subr.bf16.mxu0 0
    %2158 = vmatpush1.bf16.msra.mxu0 %v2135
    %2159 = vmatprep.subr.bf16.mxu0 0
    %2160 = vmatpush1.bf16.msra.mxu0 %v2136
    %2161 = vmatprep.subr.bf16.mxu0 0
    %2162 = vmatpush1.bf16.msra.mxu0 0
    %2163 = vmatprep.subr.bf16.mxu0 0
    %2164 = vmatpush1.bf16.msra.mxu0 0
    %2165 = vmatprep.subr.bf16.mxu0 0
    %2166 = vmatpush1.bf16.msra.mxu0 0
    %2167 = vmatprep.subr.bf16.mxu0 0
    %2168 = vmatpush1.bf16.msra.mxu0 0
    %2169 = vmatprep.subr.bf16.mxu0 0
    %2170 = vmatpush1.bf16.msra.mxu0 0
    %2171 = vmatprep.subr.bf16.mxu0 0
    %2172 = vmatpush1.bf16.msra.mxu0 0
    %2173 = vmatprep.subr.bf16.mxu0 0
    %2174 = vmatpush1.bf16.msra.mxu0 0
    %2175 = vmatprep.subr.bf16.mxu0 0
    %2176 = vmatpush1.bf16.msra.mxu0 0
    %2177 = vmatprep.mubr.bf16.mxu0 0
    %2178 = vmatmul.mubr.bf16.gmra.mrb[0].mxu0 %v2075
    %v2179 = vpop.f32.mrb[0].mxu0
    %v2180 = vadd.f32 %v2096, %v2179
    %v2181 = vpop.f32.mrb[0].mxu0
    %v2182 = vpop.f32.mrb[0].mxu0
    %v2183 = vadd.f32 %v2096, %v2182
    %v2184 = vpop.f32.mrb[0].mxu0
    %2185 = vdwg.mxu0
    %v2186 = vpack.c.bf16 %v2183, %v2180
    %v2187 = vunpack.c.l.bf16 %v2186
    %v2188 = vunpack.c.h.bf16 %v2186
    %2189 = vmatprep.subr.bf16.mxu0 0
    %2190 = vmatpush1.bf16.msra.mxu0 %v378
    %2191 = vmatprep.subr.bf16.mxu0 0
    %2192 = vmatpush1.bf16.msra.mxu0 %v379
    %2193 = vmatprep.subr.bf16.mxu0 0
    %2194 = vmatpush1.bf16.msra.mxu0 %v380
    %2195 = vmatprep.subr.bf16.mxu0 0
    %2196 = vmatpush1.bf16.msra.mxu0 %v381
    %2197 = vmatprep.subr.bf16.mxu0 0
    %2198 = vmatpush1.bf16.msra.mxu0 %v382
    %2199 = vmatprep.subr.bf16.mxu0 0
    %2200 = vmatpush1.bf16.msra.mxu0 %v383
    %2201 = vmatprep.subr.bf16.mxu0 0
    %2202 = vmatpush1.bf16.msra.mxu0 %v384
    %2203 = vmatprep.subr.bf16.mxu0 0
    %2204 = vmatpush1.bf16.msra.mxu0 %v385
    %2205 = vmatprep.subr.bf16.mxu0 0
    %2206 = vmatpush1.bf16.msra.mxu0 0
    %2207 = vmatprep.subr.bf16.mxu0 0
    %2208 = vmatpush1.bf16.msra.mxu0 0
    %2209 = vmatprep.subr.bf16.mxu0 0
    %2210 = vmatpush1.bf16.msra.mxu0 0
    %2211 = vmatprep.subr.bf16.mxu0 0
    %2212 = vmatpush1.bf16.msra.mxu0 0
    %2213 = vmatprep.subr.bf16.mxu0 0
    %2214 = vmatpush1.bf16.msra.mxu0 0
    %2215 = vmatprep.subr.bf16.mxu0 0
    %2216 = vmatpush1.bf16.msra.mxu0 0
    %2217 = vmatprep.subr.bf16.mxu0 0
    %2218 = vmatpush1.bf16.msra.mxu0 0
    %2219 = vmatprep.subr.bf16.mxu0 0
    %2220 = vmatpush1.bf16.msra.mxu0 0
    %2221 = vmatprep.mubr.bf16.mxu0 0
    %2222 = vmatmul.mubr.bf16.gmra.mrb[0].mxu0 %v2075
    %v2223 = vpop.f32.mrb[0].mxu0
    %v2224 = vadd.f32 0.0, %v2223
    %v2225 = vpop.f32.mrb[0].mxu0
    %v2226 = vpop.f32.mrb[0].mxu0
    %v2227 = vadd.f32 0.0, %v2226
    %v2228 = vpop.f32.mrb[0].mxu0
    %2229 = vdwg.mxu0
    %v2230 = vpack.c.bf16 %v2227, %v2224
    %v2232 = vsel %vm733, %v2230, 0
    %2234 = vmatprep.subr.bf16.mxu0 0
    %2235 = vmatpush1.bf16.msra.mxu0 %v552
    %2236 = vmatprep.subr.bf16.mxu0 0
    %2237 = vmatpush1.bf16.msra.mxu0 %v553
    %2238 = vmatprep.subr.bf16.mxu0 0
    %2239 = vmatpush1.bf16.msra.mxu0 0
    %2240 = vmatprep.subr.bf16.mxu0 0
    %2241 = vmatpush1.bf16.msra.mxu0 0
    %2242 = vmatprep.subr.bf16.mxu0 0
    %2243 = vmatpush1.bf16.msra.mxu0 0
    %2244 = vmatprep.subr.bf16.mxu0 0
    %2245 = vmatpush1.bf16.msra.mxu0 0
    %2246 = vmatprep.subr.bf16.mxu0 0
    %2247 = vmatpush1.bf16.msra.mxu0 0
    %2248 = vmatprep.subr.bf16.mxu0 0
    %2249 = vmatpush1.bf16.msra.mxu0 0
    %2250 = vmatprep.subr.bf16.mxu0 0
    %2251 = vmatpush1.bf16.msra.mxu0 0
    %2252 = vmatprep.subr.bf16.mxu0 0
    %2253 = vmatpush1.bf16.msra.mxu0 0
    %2254 = vmatprep.subr.bf16.mxu0 0
    %2255 = vmatpush1.bf16.msra.mxu0 0
    %2256 = vmatprep.subr.bf16.mxu0 0
    %2257 = vmatpush1.bf16.msra.mxu0 0
    %2258 = vmatprep.subr.bf16.mxu0 0
    %2259 = vmatpush1.bf16.msra.mxu0 0
    %2260 = vmatprep.subr.bf16.mxu0 0
    %2261 = vmatpush1.bf16.msra.mxu0 0
    %2262 = vmatprep.subr.bf16.mxu0 0
    %2263 = vmatpush1.bf16.msra.mxu0 0
    %2264 = vmatprep.subr.bf16.mxu0 0
    %2265 = vmatpush1.bf16.msra.mxu0 0
    %2266 = vmatprep.mubr.bf16.mxu0 0
    %2267 = vmatmul.mubr.bf16.gmra.mrb[0].mxu0 %v2232
    %v2268 = vpop.f32.mrb[0].mxu0
    %v2269 = vadd.f32 0.0, %v2268
    %v2270 = vpop.f32.mrb[0].mxu0
    %v2271 = vpop.f32.mrb[0].mxu0
    %v2272 = vadd.f32 0.0, %v2271
    %v2273 = vpop.f32.mrb[0].mxu0
    %2274 = vdwg.mxu0
    %v2275 = vadd.f32 %v2187, %v2269
    %v2276 = vadd.f32 %v2188, %v2272
    %v2277 = vmax.f32 %v2275, 0.0
    %v2278 = vmax.f32 %v2276, 0.0
    %v2279 = vpack.c.bf16 %v2278, %v2277
    %s2280 = scalar_lea.vmem %s1, 512
    %v2281 = vld [vmem:[%s2280] sm:$0xf]
    %v2282 = vld [vmem:[%s2280 + $0x4] sm:$0xf]
    %v2283 = vld [vmem:[%s2280 + $0x8] sm:$0xf]
    %v2284 = vld [vmem:[%s2280 + $0xc] sm:$0xf]
    %v2285 = vld [vmem:[%s2280 + $0x10] sm:$0xf]
    %v2286 = vld [vmem:[%s2280 + $0x14] sm:$0xf]
    %v2287 = vld [vmem:[%s2280 + $0x18] sm:$0xf]
    %v2288 = vld [vmem:[%s2280 + $0x1c] sm:$0xf]
    %v2289 = vld [vmem:[%s2280 + $0x20] sm:$0xf]
    %v2290 = vld [vmem:[%s2280 + $0x24] sm:$0xf]
    %v2291 = vld [vmem:[%s2280 + $0x28] sm:$0xf]
    %v2292 = vld [vmem:[%s2280 + $0x2c] sm:$0xf]
    %v2293 = vld [vmem:[%s2280 + $0x30] sm:$0xf]
    %v2294 = vld [vmem:[%s2280 + $0x34] sm:$0xf]
    %v2295 = vld [vmem:[%s2280 + $0x38] sm:$0xf]
    %v2296 = vld [vmem:[%s2280 + $0x3c] sm:$0xf]
    %v2297 = vlaneseq
    %v2298 = vshrl.u32 %v2297, 7
    %v2299 = vsub.s32 0, %v2298
    %v2300 = vrot.slane %v32, %v2299
    %v2317 = vunpack.c.l.b16 %v2281
    %v2318 = vunpack.c.l.b16 %v2282
    %v2319 = vunpack.c.l.b16 %v2283
    %v2320 = vunpack.c.l.b16 %v2284
    %v2321 = vunpack.c.l.b16 %v2285
    %v2322 = vunpack.c.l.b16 %v2286
    %v2323 = vunpack.c.l.b16 %v2287
    %v2324 = vunpack.c.l.b16 %v2288
    %v2325 = vunpack.c.l.b16 %v2289
    %v2326 = vunpack.c.l.b16 %v2290
    %v2327 = vunpack.c.l.b16 %v2291
    %v2328 = vunpack.c.l.b16 %v2292
    %v2329 = vunpack.c.l.b16 %v2293
    %v2330 = vunpack.c.l.b16 %v2294
    %v2331 = vunpack.c.l.b16 %v2295
    %v2332 = vunpack.c.l.b16 %v2296
    %v2333 = vpack.c.b16 %v2318, %v2317
    %v2334 = vpack.c.b16 %v2320, %v2319
    %v2335 = vpack.c.b16 %v2322, %v2321
    %v2336 = vpack.c.b16 %v2324, %v2323
    %v2337 = vpack.c.b16 %v2326, %v2325
    %v2338 = vpack.c.b16 %v2328, %v2327
    %v2339 = vpack.c.b16 %v2330, %v2329
    %v2340 = vpack.c.b16 %v2332, %v2331
    %2349 = vmatprep.subr.bf16.mxu0 0
    %2350 = vmatpush1.bf16.msra.mxu0 %v2333
    %2351 = vmatprep.subr.bf16.mxu0 0
    %2352 = vmatpush1.bf16.msra.mxu0 %v2334
    %2353 = vmatprep.subr.bf16.mxu0 0
    %2354 = vmatpush1.bf16.msra.mxu0 %v2335
    %2355 = vmatprep.subr.bf16.mxu0 0
    %2356 = vmatpush1.bf16.msra.mxu0 %v2336
    %2357 = vmatprep.subr.bf16.mxu0 0
    %2358 = vmatpush1.bf16.msra.mxu0 %v2337
    %2359 = vmatprep.subr.bf16.mxu0 0
    %2360 = vmatpush1.bf16.msra.mxu0 %v2338
    %2361 = vmatprep.subr.bf16.mxu0 0
    %2362 = vmatpush1.bf16.msra.mxu0 %v2339
    %2363 = vmatprep.subr.bf16.mxu0 0
    %2364 = vmatpush1.bf16.msra.mxu0 %v2340
    %2365 = vmatprep.subr.bf16.mxu0 0
    %2366 = vmatpush1.bf16.msra.mxu0 0
    %2367 = vmatprep.subr.bf16.mxu0 0
    %2368 = vmatpush1.bf16.msra.mxu0 0
    %2369 = vmatprep.subr.bf16.mxu0 0
    %2370 = vmatpush1.bf16.msra.mxu0 0
    %2371 = vmatprep.subr.bf16.mxu0 0
    %2372 = vmatpush1.bf16.msra.mxu0 0
    %2373 = vmatprep.subr.bf16.mxu0 0
    %2374 = vmatpush1.bf16.msra.mxu0 0
    %2375 = vmatprep.subr.bf16.mxu0 0
    %2376 = vmatpush1.bf16.msra.mxu0 0
    %2377 = vmatprep.subr.bf16.mxu0 0
    %2378 = vmatpush1.bf16.msra.mxu0 0
    %2379 = vmatprep.subr.bf16.mxu0 0
    %2380 = vmatpush1.bf16.msra.mxu0 0
    %2381 = vmatprep.mubr.bf16.mxu0 0
    %2382 = vmatmul.mubr.bf16.gmra.mrb[0].mxu0 %v2279
    %v2383 = vpop.f32.mrb[0].mxu0
    %v2384 = vadd.f32 %v2300, %v2383
    %v2385 = vpop.f32.mrb[0].mxu0
    %v2386 = vpop.f32.mrb[0].mxu0
    %v2387 = vadd.f32 %v2300, %v2386
    %v2388 = vpop.f32.mrb[0].mxu0
    %2389 = vdwg.mxu0
    %v2390 = vpack.c.bf16 %v2387, %v2384
    %v2391 = vunpack.c.l.bf16 %v2390
    %v2392 = vunpack.c.h.bf16 %v2390
    %2393 = vmatprep.subr.bf16.mxu0 0
    %2394 = vmatpush1.bf16.msra.mxu0 %v386
    %2395 = vmatprep.subr.bf16.mxu0 0
    %2396 = vmatpush1.bf16.msra.mxu0 %v387
    %2397 = vmatprep.subr.bf16.mxu0 0
    %2398 = vmatpush1.bf16.msra.mxu0 %v388
    %2399 = vmatprep.subr.bf16.mxu0 0
    %2400 = vmatpush1.bf16.msra.mxu0 %v389
    %2401 = vmatprep.subr.bf16.mxu0 0
    %2402 = vmatpush1.bf16.msra.mxu0 %v390
    %2403 = vmatprep.subr.bf16.mxu0 0
    %2404 = vmatpush1.bf16.msra.mxu0 %v391
    %2405 = vmatprep.subr.bf16.mxu0 0
    %2406 = vmatpush1.bf16.msra.mxu0 %v392
    %2407 = vmatprep.subr.bf16.mxu0 0
    %2408 = vmatpush1.bf16.msra.mxu0 %v393
    %2409 = vmatprep.subr.bf16.mxu0 0
    %2410 = vmatpush1.bf16.msra.mxu0 0
    %2411 = vmatprep.subr.bf16.mxu0 0
    %2412 = vmatpush1.bf16.msra.mxu0 0
    %2413 = vmatprep.subr.bf16.mxu0 0
    %2414 = vmatpush1.bf16.msra.mxu0 0
    %2415 = vmatprep.subr.bf16.mxu0 0
    %2416 = vmatpush1.bf16.msra.mxu0 0
    %2417 = vmatprep.subr.bf16.mxu0 0
    %2418 = vmatpush1.bf16.msra.mxu0 0
    %2419 = vmatprep.subr.bf16.mxu0 0
    %2420 = vmatpush1.bf16.msra.mxu0 0
    %2421 = vmatprep.subr.bf16.mxu0 0
    %2422 = vmatpush1.bf16.msra.mxu0 0
    %2423 = vmatprep.subr.bf16.mxu0 0
    %2424 = vmatpush1.bf16.msra.mxu0 0
    %2425 = vmatprep.mubr.bf16.mxu0 0
    %2426 = vmatmul.mubr.bf16.gmra.mrb[0].mxu0 %v2279
    %v2427 = vpop.f32.mrb[0].mxu0
    %v2428 = vadd.f32 0.0, %v2427
    %v2429 = vpop.f32.mrb[0].mxu0
    %v2430 = vpop.f32.mrb[0].mxu0
    %v2431 = vadd.f32 0.0, %v2430
    %v2432 = vpop.f32.mrb[0].mxu0
    %2433 = vdwg.mxu0
    %v2434 = vpack.c.bf16 %v2431, %v2428
    %v2436 = vsel %vm733, %v2434, 0
    %2438 = vmatprep.subr.bf16.mxu0 0
    %2439 = vmatpush1.bf16.msra.mxu0 %v554
    %2440 = vmatprep.subr.bf16.mxu0 0
    %2441 = vmatpush1.bf16.msra.mxu0 %v555
    %2442 = vmatprep.subr.bf16.mxu0 0
    %2443 = vmatpush1.bf16.msra.mxu0 0
    %2444 = vmatprep.subr.bf16.mxu0 0
    %2445 = vmatpush1.bf16.msra.mxu0 0
    %2446 = vmatprep.subr.bf16.mxu0 0
    %2447 = vmatpush1.bf16.msra.mxu0 0
    %2448 = vmatprep.subr.bf16.mxu0 0
    %2449 = vmatpush1.bf16.msra.mxu0 0
    %2450 = vmatprep.subr.bf16.mxu0 0
    %2451 = vmatpush1.bf16.msra.mxu0 0
    %2452 = vmatprep.subr.bf16.mxu0 0
    %2453 = vmatpush1.bf16.msra.mxu0 0
    %2454 = vmatprep.subr.bf16.mxu0 0
    %2455 = vmatpush1.bf16.msra.mxu0 0
    %2456 = vmatprep.subr.bf16.mxu0 0
    %2457 = vmatpush1.bf16.msra.mxu0 0
    %2458 = vmatprep.subr.bf16.mxu0 0
    %2459 = vmatpush1.bf16.msra.mxu0 0
    %2460 = vmatprep.subr.bf16.mxu0 0
    %2461 = vmatpush1.bf16.msra.mxu0 0
    %2462 = vmatprep.subr.bf16.mxu0 0
    %2463 = vmatpush1.bf16.msra.mxu0 0
    %2464 = vmatprep.subr.bf16.mxu0 0
    %2465 = vmatpush1.bf16.msra.mxu0 0
    %2466 = vmatprep.subr.bf16.mxu0 0
    %2467 = vmatpush1.bf16.msra.mxu0 0
    %2468 = vmatprep.subr.bf16.mxu0 0
    %2469 = vmatpush1.bf16.msra.mxu0 0
    %2470 = vmatprep.mubr.bf16.mxu0 0
    %2471 = vmatmul.mubr.bf16.gmra.mrb[0].mxu0 %v2436
    %v2472 = vpop.f32.mrb[0].mxu0
    %v2473 = vadd.f32 0.0, %v2472
    %v2474 = vpop.f32.mrb[0].mxu0
    %v2475 = vpop.f32.mrb[0].mxu0
    %v2476 = vadd.f32 0.0, %v2475
    %v2477 = vpop.f32.mrb[0].mxu0
    %2478 = vdwg.mxu0
    %v2479 = vadd.f32 %v2391, %v2473
    %v2480 = vadd.f32 %v2392, %v2476
    %v2481 = vadd.f32 %v2479, %v1869
    %v2482 = vadd.f32 %v2480, %v1870
    %2483 = vadd.xlane.f32.xlu0 %v2481
    %v2484 = vpop.xlane.xlu0 %2483
    %2485 = vadd.xlane.f32.xlu0 %v2482
    %v2486 = vpop.xlane.xlu0 %2485
    %v2487 = vmul.f32 %v2484, %v1194
    %v2488 = vmul.f32 %v2486, %v1194
    %v2489 = vsub.f32 %v2481, %v2487
    %v2490 = vsub.f32 %v2482, %v2488
    %v2491 = vmul.f32 %v2489, %v2489
    %v2492 = vmul.f32 %v2490, %v2490
    %2493 = vadd.xlane.f32.xlu0 %v2491
    %v2494 = vpop.xlane.xlu0 %2493
    %2495 = vadd.xlane.f32.xlu0 %v2492
    %v2496 = vpop.xlane.xlu0 %2495
    %v2497 = vmul.f32 %v2494, %v1194
    %v2498 = vmul.f32 %v2496, %v1194
    %v2499 = vadd.f32 %v2497, 1e-05
    %v2500 = vadd.f32 %v2498, 1e-05
    %v2501 = vrsqrt.pop %v2499
    %v2502 = vrsqrt.pop %v2500
    %v2503 = vmul.f32 %v2489, %v2501
    %v2504 = vmul.f32 %v2490, %v2502
    %v2505 = vlaneseq
    %v2506 = vshrl.u32 %v2505, 7
    %v2507 = vsub.s32 2, %v2506
    %v2508 = vrot.slane %v574, %v2507
    %v2509 = vmul.f32 %v2503, %v2508
    %v2510 = vmul.f32 %v2504, %v2508
    %v2511 = vlaneseq
    %v2512 = vshrl.u32 %v2511, 7
    %v2513 = vsub.s32 2, %v2512
    %v2514 = vrot.slane %v575, %v2513
    %v2515 = vadd.f32 %v2509, %v2514
    %v2516 = vadd.f32 %v2510, %v2514
    %v2517 = vpack.c.bf16 %v2516, %v2515
    %s2518 = scalar_lea.vmem %s1, 576
    %v2519 = vld [vmem:[%s2518] sm:$0xf]
    %v2520 = vld [vmem:[%s2518 + $0x4] sm:$0xf]
    %v2521 = vld [vmem:[%s2518 + $0x8] sm:$0xf]
    %v2522 = vld [vmem:[%s2518 + $0xc] sm:$0xf]
    %v2523 = vld [vmem:[%s2518 + $0x10] sm:$0xf]
    %v2524 = vld [vmem:[%s2518 + $0x14] sm:$0xf]
    %v2525 = vld [vmem:[%s2518 + $0x18] sm:$0xf]
    %v2526 = vld [vmem:[%s2518 + $0x1c] sm:$0xf]
    %v2527 = vld [vmem:[%s2518 + $0x20] sm:$0xf]
    %v2528 = vld [vmem:[%s2518 + $0x24] sm:$0xf]
    %v2529 = vld [vmem:[%s2518 + $0x28] sm:$0xf]
    %v2530 = vld [vmem:[%s2518 + $0x2c] sm:$0xf]
    %v2531 = vld [vmem:[%s2518 + $0x30] sm:$0xf]
    %v2532 = vld [vmem:[%s2518 + $0x34] sm:$0xf]
    %v2533 = vld [vmem:[%s2518 + $0x38] sm:$0xf]
    %v2534 = vld [vmem:[%s2518 + $0x3c] sm:$0xf]
    %v2535 = vlaneseq
    %v2536 = vshrl.u32 %v2535, 7
    %v2537 = vsub.s32 1, %v2536
    %v2538 = vrot.slane %v32, %v2537
    %v2555 = vunpack.c.l.b16 %v2519
    %v2556 = vunpack.c.l.b16 %v2520
    %v2557 = vunpack.c.l.b16 %v2521
    %v2558 = vunpack.c.l.b16 %v2522
    %v2559 = vunpack.c.l.b16 %v2523
    %v2560 = vunpack.c.l.b16 %v2524
    %v2561 = vunpack.c.l.b16 %v2525
    %v2562 = vunpack.c.l.b16 %v2526
    %v2563 = vunpack.c.l.b16 %v2527
    %v2564 = vunpack.c.l.b16 %v2528
    %v2565 = vunpack.c.l.b16 %v2529
    %v2566 = vunpack.c.l.b16 %v2530
    %v2567 = vunpack.c.l.b16 %v2531
    %v2568 = vunpack.c.l.b16 %v2532
    %v2569 = vunpack.c.l.b16 %v2533
    %v2570 = vunpack.c.l.b16 %v2534
    %v2571 = vpack.c.b16 %v2556, %v2555
    %v2572 = vpack.c.b16 %v2558, %v2557
    %v2573 = vpack.c.b16 %v2560, %v2559
    %v2574 = vpack.c.b16 %v2562, %v2561
    %v2575 = vpack.c.b16 %v2564, %v2563
    %v2576 = vpack.c.b16 %v2566, %v2565
    %v2577 = vpack.c.b16 %v2568, %v2567
    %v2578 = vpack.c.b16 %v2570, %v2569
    %2587 = vmatprep.subr.bf16.mxu0 0
    %2588 = vmatpush1.bf16.msra.mxu0 %v2571
    %2589 = vmatprep.subr.bf16.mxu0 0
    %2590 = vmatpush1.bf16.msra.mxu0 %v2572
    %2591 = vmatprep.subr.bf16.mxu0 0
    %2592 = vmatpush1.bf16.msra.mxu0 %v2573
    %2593 = vmatprep.subr.bf16.mxu0 0
    %2594 = vmatpush1.bf16.msra.mxu0 %v2574
    %2595 = vmatprep.subr.bf16.mxu0 0
    %2596 = vmatpush1.bf16.msra.mxu0 %v2575
    %2597 = vmatprep.subr.bf16.mxu0 0
    %2598 = vmatpush1.bf16.msra.mxu0 %v2576
    %2599 = vmatprep.subr.bf16.mxu0 0
    %2600 = vmatpush1.bf16.msra.mxu0 %v2577
    %2601 = vmatprep.subr.bf16.mxu0 0
    %2602 = vmatpush1.bf16.msra.mxu0 %v2578
    %2603 = vmatprep.subr.bf16.mxu0 0
    %2604 = vmatpush1.bf16.msra.mxu0 0
    %2605 = vmatprep.subr.bf16.mxu0 0
    %2606 = vmatpush1.bf16.msra.mxu0 0
    %2607 = vmatprep.subr.bf16.mxu0 0
    %2608 = vmatpush1.bf16.msra.mxu0 0
    %2609 = vmatprep.subr.bf16.mxu0 0
    %2610 = vmatpush1.bf16.msra.mxu0 0
    %2611 = vmatprep.subr.bf16.mxu0 0
    %2612 = vmatpush1.bf16.msra.mxu0 0
    %2613 = vmatprep.subr.bf16.mxu0 0
    %2614 = vmatpush1.bf16.msra.mxu0 0
    %2615 = vmatprep.subr.bf16.mxu0 0
    %2616 = vmatpush1.bf16.msra.mxu0 0
    %2617 = vmatprep.subr.bf16.mxu0 0
    %2618 = vmatpush1.bf16.msra.mxu0 0
    %2619 = vmatprep.mubr.bf16.mxu0 0
    %2620 = vmatmul.mubr.bf16.gmra.mrb[0].mxu0 %v2517
    %v2621 = vpop.f32.mrb[0].mxu0
    %v2622 = vadd.f32 %v2538, %v2621
    %v2623 = vpop.f32.mrb[0].mxu0
    %v2624 = vpop.f32.mrb[0].mxu0
    %v2625 = vadd.f32 %v2538, %v2624
    %v2626 = vpop.f32.mrb[0].mxu0
    %2627 = vdwg.mxu0
    %v2628 = vpack.c.bf16 %v2625, %v2622
    %v2629 = vunpack.c.l.bf16 %v2628
    %v2630 = vunpack.c.h.bf16 %v2628
    %2631 = vmatprep.subr.bf16.mxu0 0
    %2632 = vmatpush1.bf16.msra.mxu0 %v394
    %2633 = vmatprep.subr.bf16.mxu0 0
    %2634 = vmatpush1.bf16.msra.mxu0 %v395
    %2635 = vmatprep.subr.bf16.mxu0 0
    %2636 = vmatpush1.bf16.msra.mxu0 %v396
    %2637 = vmatprep.subr.bf16.mxu0 0
    %2638 = vmatpush1.bf16.msra.mxu0 %v397
    %2639 = vmatprep.subr.bf16.mxu0 0
    %2640 = vmatpush1.bf16.msra.mxu0 %v398
    %2641 = vmatprep.subr.bf16.mxu0 0
    %2642 = vmatpush1.bf16.msra.mxu0 %v399
    %2643 = vmatprep.subr.bf16.mxu0 0
    %2644 = vmatpush1.bf16.msra.mxu0 %v400
    %2645 = vmatprep.subr.bf16.mxu0 0
    %2646 = vmatpush1.bf16.msra.mxu0 %v401
    %2647 = vmatprep.subr.bf16.mxu0 0
    %2648 = vmatpush1.bf16.msra.mxu0 0
    %2649 = vmatprep.subr.bf16.mxu0 0
    %2650 = vmatpush1.bf16.msra.mxu0 0
    %2651 = vmatprep.subr.bf16.mxu0 0
    %2652 = vmatpush1.bf16.msra.mxu0 0
    %2653 = vmatprep.subr.bf16.mxu0 0
    %2654 = vmatpush1.bf16.msra.mxu0 0
    %2655 = vmatprep.subr.bf16.mxu0 0
    %2656 = vmatpush1.bf16.msra.mxu0 0
    %2657 = vmatprep.subr.bf16.mxu0 0
    %2658 = vmatpush1.bf16.msra.mxu0 0
    %2659 = vmatprep.subr.bf16.mxu0 0
    %2660 = vmatpush1.bf16.msra.mxu0 0
    %2661 = vmatprep.subr.bf16.mxu0 0
    %2662 = vmatpush1.bf16.msra.mxu0 0
    %2663 = vmatprep.mubr.bf16.mxu0 0
    %2664 = vmatmul.mubr.bf16.gmra.mrb[0].mxu0 %v2517
    %v2665 = vpop.f32.mrb[0].mxu0
    %v2666 = vadd.f32 0.0, %v2665
    %v2667 = vpop.f32.mrb[0].mxu0
    %v2668 = vpop.f32.mrb[0].mxu0
    %v2669 = vadd.f32 0.0, %v2668
    %v2670 = vpop.f32.mrb[0].mxu0
    %2671 = vdwg.mxu0
    %v2672 = vpack.c.bf16 %v2669, %v2666
    %v2674 = vsel %vm733, %v2672, 0
    %2676 = vmatprep.subr.bf16.mxu0 0
    %2677 = vmatpush1.bf16.msra.mxu0 %v556
    %2678 = vmatprep.subr.bf16.mxu0 0
    %2679 = vmatpush1.bf16.msra.mxu0 %v557
    %2680 = vmatprep.subr.bf16.mxu0 0
    %2681 = vmatpush1.bf16.msra.mxu0 0
    %2682 = vmatprep.subr.bf16.mxu0 0
    %2683 = vmatpush1.bf16.msra.mxu0 0
    %2684 = vmatprep.subr.bf16.mxu0 0
    %2685 = vmatpush1.bf16.msra.mxu0 0
    %2686 = vmatprep.subr.bf16.mxu0 0
    %2687 = vmatpush1.bf16.msra.mxu0 0
    %2688 = vmatprep.subr.bf16.mxu0 0
    %2689 = vmatpush1.bf16.msra.mxu0 0
    %2690 = vmatprep.subr.bf16.mxu0 0
    %2691 = vmatpush1.bf16.msra.mxu0 0
    %2692 = vmatprep.subr.bf16.mxu0 0
    %2693 = vmatpush1.bf16.msra.mxu0 0
    %2694 = vmatprep.subr.bf16.mxu0 0
    %2695 = vmatpush1.bf16.msra.mxu0 0
    %2696 = vmatprep.subr.bf16.mxu0 0
    %2697 = vmatpush1.bf16.msra.mxu0 0
    %2698 = vmatprep.subr.bf16.mxu0 0
    %2699 = vmatpush1.bf16.msra.mxu0 0
    %2700 = vmatprep.subr.bf16.mxu0 0
    %2701 = vmatpush1.bf16.msra.mxu0 0
    %2702 = vmatprep.subr.bf16.mxu0 0
    %2703 = vmatpush1.bf16.msra.mxu0 0
    %2704 = vmatprep.subr.bf16.mxu0 0
    %2705 = vmatpush1.bf16.msra.mxu0 0
    %2706 = vmatprep.subr.bf16.mxu0 0
    %2707 = vmatpush1.bf16.msra.mxu0 0
    %2708 = vmatprep.mubr.bf16.mxu0 0
    %2709 = vmatmul.mubr.bf16.gmra.mrb[0].mxu0 %v2674
    %v2710 = vpop.f32.mrb[0].mxu0
    %v2711 = vadd.f32 0.0, %v2710
    %v2712 = vpop.f32.mrb[0].mxu0
    %v2713 = vpop.f32.mrb[0].mxu0
    %v2714 = vadd.f32 0.0, %v2713
    %v2715 = vpop.f32.mrb[0].mxu0
    %2716 = vdwg.mxu0
    %v2717 = vadd.f32 %v2629, %v2711
    %v2718 = vadd.f32 %v2630, %v2714
    %v2719 = vmax.f32 %v2717, 0.0
    %v2720 = vmax.f32 %v2718, 0.0
    %v2721 = vpack.c.bf16 %v2720, %v2719
    %s2722 = scalar_lea.vmem %s1, 640
    %v2723 = vld [vmem:[%s2722] sm:$0xf]
    %v2724 = vld [vmem:[%s2722 + $0x4] sm:$0xf]
    %v2725 = vld [vmem:[%s2722 + $0x8] sm:$0xf]
    %v2726 = vld [vmem:[%s2722 + $0xc] sm:$0xf]
    %v2727 = vld [vmem:[%s2722 + $0x10] sm:$0xf]
    %v2728 = vld [vmem:[%s2722 + $0x14] sm:$0xf]
    %v2729 = vld [vmem:[%s2722 + $0x18] sm:$0xf]
    %v2730 = vld [vmem:[%s2722 + $0x1c] sm:$0xf]
    %v2731 = vld [vmem:[%s2722 + $0x20] sm:$0xf]
    %v2732 = vld [vmem:[%s2722 + $0x24] sm:$0xf]
    %v2733 = vld [vmem:[%s2722 + $0x28] sm:$0xf]
    %v2734 = vld [vmem:[%s2722 + $0x2c] sm:$0xf]
    %v2735 = vld [vmem:[%s2722 + $0x30] sm:$0xf]
    %v2736 = vld [vmem:[%s2722 + $0x34] sm:$0xf]
    %v2737 = vld [vmem:[%s2722 + $0x38] sm:$0xf]
    %v2738 = vld [vmem:[%s2722 + $0x3c] sm:$0xf]
    %v2739 = vlaneseq
    %v2740 = vshrl.u32 %v2739, 7
    %v2741 = vsub.s32 2, %v2740
    %v2742 = vrot.slane %v32, %v2741
    %v2759 = vunpack.c.l.b16 %v2723
    %v2760 = vunpack.c.l.b16 %v2724
    %v2761 = vunpack.c.l.b16 %v2725
    %v2762 = vunpack.c.l.b16 %v2726
    %v2763 = vunpack.c.l.b16 %v2727
    %v2764 = vunpack.c.l.b16 %v2728
    %v2765 = vunpack.c.l.b16 %v2729
    %v2766 = vunpack.c.l.b16 %v2730
    %v2767 = vunpack.c.l.b16 %v2731
    %v2768 = vunpack.c.l.b16 %v2732
    %v2769 = vunpack.c.l.b16 %v2733
    %v2770 = vunpack.c.l.b16 %v2734
    %v2771 = vunpack.c.l.b16 %v2735
    %v2772 = vunpack.c.l.b16 %v2736
    %v2773 = vunpack.c.l.b16 %v2737
    %v2774 = vunpack.c.l.b16 %v2738
    %v2775 = vpack.c.b16 %v2760, %v2759
    %v2776 = vpack.c.b16 %v2762, %v2761
    %v2777 = vpack.c.b16 %v2764, %v2763
    %v2778 = vpack.c.b16 %v2766, %v2765
    %v2779 = vpack.c.b16 %v2768, %v2767
    %v2780 = vpack.c.b16 %v2770, %v2769
    %v2781 = vpack.c.b16 %v2772, %v2771
    %v2782 = vpack.c.b16 %v2774, %v2773
    %2791 = vmatprep.subr.bf16.mxu0 0
    %2792 = vmatpush1.bf16.msra.mxu0 %v2775
    %2793 = vmatprep.subr.bf16.mxu0 0
    %2794 = vmatpush1.bf16.msra.mxu0 %v2776
    %2795 = vmatprep.subr.bf16.mxu0 0
    %2796 = vmatpush1.bf16.msra.mxu0 %v2777
    %2797 = vmatprep.subr.bf16.mxu0 0
    %2798 = vmatpush1.bf16.msra.mxu0 %v2778
    %2799 = vmatprep.subr.bf16.mxu0 0
    %2800 = vmatpush1.bf16.msra.mxu0 %v2779
    %2801 = vmatprep.subr.bf16.mxu0 0
    %2802 = vmatpush1.bf16.msra.mxu0 %v2780
    %2803 = vmatprep.subr.bf16.mxu0 0
    %2804 = vmatpush1.bf16.msra.mxu0 %v2781
    %2805 = vmatprep.subr.bf16.mxu0 0
    %2806 = vmatpush1.bf16.msra.mxu0 %v2782
    %2807 = vmatprep.subr.bf16.mxu0 0
    %2808 = vmatpush1.bf16.msra.mxu0 0
    %2809 = vmatprep.subr.bf16.mxu0 0
    %2810 = vmatpush1.bf16.msra.mxu0 0
    %2811 = vmatprep.subr.bf16.mxu0 0
    %2812 = vmatpush1.bf16.msra.mxu0 0
    %2813 = vmatprep.subr.bf16.mxu0 0
    %2814 = vmatpush1.bf16.msra.mxu0 0
    %2815 = vmatprep.subr.bf16.mxu0 0
    %2816 = vmatpush1.bf16.msra.mxu0 0
    %2817 = vmatprep.subr.bf16.mxu0 0
    %2818 = vmatpush1.bf16.msra.mxu0 0
    %2819 = vmatprep.subr.bf16.mxu0 0
    %2820 = vmatpush1.bf16.msra.mxu0 0
    %2821 = vmatprep.subr.bf16.mxu0 0
    %2822 = vmatpush1.bf16.msra.mxu0 0
    %2823 = vmatprep.mubr.bf16.mxu0 0
    %2824 = vmatmul.mubr.bf16.gmra.mrb[0].mxu0 %v2721
    %v2825 = vpop.f32.mrb[0].mxu0
    %v2826 = vadd.f32 %v2742, %v2825
    %v2827 = vpop.f32.mrb[0].mxu0
    %v2828 = vpop.f32.mrb[0].mxu0
    %v2829 = vadd.f32 %v2742, %v2828
    %v2830 = vpop.f32.mrb[0].mxu0
    %2831 = vdwg.mxu0
    %v2832 = vpack.c.bf16 %v2829, %v2826
    %v2833 = vunpack.c.l.bf16 %v2832
    %v2834 = vunpack.c.h.bf16 %v2832
    %2835 = vmatprep.subr.bf16.mxu0 0
    %2836 = vmatpush1.bf16.msra.mxu0 %v402
    %2837 = vmatprep.subr.bf16.mxu0 0
    %2838 = vmatpush1.bf16.msra.mxu0 %v403
    %2839 = vmatprep.subr.bf16.mxu0 0
    %2840 = vmatpush1.bf16.msra.mxu0 %v404
    %2841 = vmatprep.subr.bf16.mxu0 0
    %2842 = vmatpush1.bf16.msra.mxu0 %v405
    %2843 = vmatprep.subr.bf16.mxu0 0
    %2844 = vmatpush1.bf16.msra.mxu0 %v406
    %2845 = vmatprep.subr.bf16.mxu0 0
    %2846 = vmatpush1.bf16.msra.mxu0 %v407
    %2847 = vmatprep.subr.bf16.mxu0 0
    %2848 = vmatpush1.bf16.msra.mxu0 %v408
    %2849 = vmatprep.subr.bf16.mxu0 0
    %2850 = vmatpush1.bf16.msra.mxu0 %v409
    %2851 = vmatprep.subr.bf16.mxu0 0
    %2852 = vmatpush1.bf16.msra.mxu0 0
    %2853 = vmatprep.subr.bf16.mxu0 0
    %2854 = vmatpush1.bf16.msra.mxu0 0
    %2855 = vmatprep.subr.bf16.mxu0 0
    %2856 = vmatpush1.bf16.msra.mxu0 0
    %2857 = vmatprep.subr.bf16.mxu0 0
    %2858 = vmatpush1.bf16.msra.mxu0 0
    %2859 = vmatprep.subr.bf16.mxu0 0
    %2860 = vmatpush1.bf16.msra.mxu0 0
    %2861 = vmatprep.subr.bf16.mxu0 0
    %2862 = vmatpush1.bf16.msra.mxu0 0
    %2863 = vmatprep.subr.bf16.mxu0 0
    %2864 = vmatpush1.bf16.msra.mxu0 0
    %2865 = vmatprep.subr.bf16.mxu0 0
    %2866 = vmatpush1.bf16.msra.mxu0 0
    %2867 = vmatprep.mubr.bf16.mxu0 0
    %2868 = vmatmul.mubr.bf16.gmra.mrb[0].mxu0 %v2721
    %v2869 = vpop.f32.mrb[0].mxu0
    %v2870 = vadd.f32 0.0, %v2869
    %v2871 = vpop.f32.mrb[0].mxu0
    %v2872 = vpop.f32.mrb[0].mxu0
    %v2873 = vadd.f32 0.0, %v2872
    %v2874 = vpop.f32.mrb[0].mxu0
    %2875 = vdwg.mxu0
    %v2876 = vpack.c.bf16 %v2873, %v2870
    %v2878 = vsel %vm733, %v2876, 0
    %2880 = vmatprep.subr.bf16.mxu0 0
    %2881 = vmatpush1.bf16.msra.mxu0 %v558
    %2882 = vmatprep.subr.bf16.mxu0 0
    %2883 = vmatpush1.bf16.msra.mxu0 %v559
    %2884 = vmatprep.subr.bf16.mxu0 0
    %2885 = vmatpush1.bf16.msra.mxu0 0
    %2886 = vmatprep.subr.bf16.mxu0 0
    %2887 = vmatpush1.bf16.msra.mxu0 0
    %2888 = vmatprep.subr.bf16.mxu0 0
    %2889 = vmatpush1.bf16.msra.mxu0 0
    %2890 = vmatprep.subr.bf16.mxu0 0
    %2891 = vmatpush1.bf16.msra.mxu0 0
    %2892 = vmatprep.subr.bf16.mxu0 0
    %2893 = vmatpush1.bf16.msra.mxu0 0
    %2894 = vmatprep.subr.bf16.mxu0 0
    %2895 = vmatpush1.bf16.msra.mxu0 0
    %2896 = vmatprep.subr.bf16.mxu0 0
    %2897 = vmatpush1.bf16.msra.mxu0 0
    %2898 = vmatprep.subr.bf16.mxu0 0
    %2899 = vmatpush1.bf16.msra.mxu0 0
    %2900 = vmatprep.subr.bf16.mxu0 0
    %2901 = vmatpush1.bf16.msra.mxu0 0
    %2902 = vmatprep.subr.bf16.mxu0 0
    %2903 = vmatpush1.bf16.msra.mxu0 0
    %2904 = vmatprep.subr.bf16.mxu0 0
    %2905 = vmatpush1.bf16.msra.mxu0 0
    %2906 = vmatprep.subr.bf16.mxu0 0
    %2907 = vmatpush1.bf16.msra.mxu0 0
    %2908 = vmatprep.subr.bf16.mxu0 0
    %2909 = vmatpush1.bf16.msra.mxu0 0
    %2910 = vmatprep.subr.bf16.mxu0 0
    %2911 = vmatpush1.bf16.msra.mxu0 0
    %2912 = vmatprep.mubr.bf16.mxu0 0
    %2913 = vmatmul.mubr.bf16.gmra.mrb[0].mxu0 %v2878
    %v2914 = vpop.f32.mrb[0].mxu0
    %v2915 = vadd.f32 0.0, %v2914
    %v2916 = vpop.f32.mrb[0].mxu0
    %v2917 = vpop.f32.mrb[0].mxu0
    %v2918 = vadd.f32 0.0, %v2917
    %v2919 = vpop.f32.mrb[0].mxu0
    %2920 = vdwg.mxu0
    %v2921 = vadd.f32 %v2833, %v2915
    %v2922 = vadd.f32 %v2834, %v2918
    %v2923 = vmax.f32 %v2921, 0.0
    %v2924 = vmax.f32 %v2922, 0.0
    %v2925 = vpack.c.bf16 %v2924, %v2923
    %s2926 = scalar_lea.vmem %s1, 704
    %v2927 = vld [vmem:[%s2926] sm:$0xf]
    %v2928 = vld [vmem:[%s2926 + $0x4] sm:$0xf]
    %v2929 = vld [vmem:[%s2926 + $0x8] sm:$0xf]
    %v2930 = vld [vmem:[%s2926 + $0xc] sm:$0xf]
    %v2931 = vld [vmem:[%s2926 + $0x10] sm:$0xf]
    %v2932 = vld [vmem:[%s2926 + $0x14] sm:$0xf]
    %v2933 = vld [vmem:[%s2926 + $0x18] sm:$0xf]
    %v2934 = vld [vmem:[%s2926 + $0x1c] sm:$0xf]
    %v2935 = vld [vmem:[%s2926 + $0x20] sm:$0xf]
    %v2936 = vld [vmem:[%s2926 + $0x24] sm:$0xf]
    %v2937 = vld [vmem:[%s2926 + $0x28] sm:$0xf]
    %v2938 = vld [vmem:[%s2926 + $0x2c] sm:$0xf]
    %v2939 = vld [vmem:[%s2926 + $0x30] sm:$0xf]
    %v2940 = vld [vmem:[%s2926 + $0x34] sm:$0xf]
    %v2941 = vld [vmem:[%s2926 + $0x38] sm:$0xf]
    %v2942 = vld [vmem:[%s2926 + $0x3c] sm:$0xf]
    %v2943 = vlaneseq
    %v2944 = vshrl.u32 %v2943, 7
    %v2945 = vsub.s32 3, %v2944
    %v2946 = vrot.slane %v32, %v2945
    %v2963 = vunpack.c.l.b16 %v2927
    %v2964 = vunpack.c.l.b16 %v2928
    %v2965 = vunpack.c.l.b16 %v2929
    %v2966 = vunpack.c.l.b16 %v2930
    %v2967 = vunpack.c.l.b16 %v2931
    %v2968 = vunpack.c.l.b16 %v2932
    %v2969 = vunpack.c.l.b16 %v2933
    %v2970 = vunpack.c.l.b16 %v2934
    %v2971 = vunpack.c.l.b16 %v2935
    %v2972 = vunpack.c.l.b16 %v2936
    %v2973 = vunpack.c.l.b16 %v2937
    %v2974 = vunpack.c.l.b16 %v2938
    %v2975 = vunpack.c.l.b16 %v2939
    %v2976 = vunpack.c.l.b16 %v2940
    %v2977 = vunpack.c.l.b16 %v2941
    %v2978 = vunpack.c.l.b16 %v2942
    %v2979 = vpack.c.b16 %v2964, %v2963
    %v2980 = vpack.c.b16 %v2966, %v2965
    %v2981 = vpack.c.b16 %v2968, %v2967
    %v2982 = vpack.c.b16 %v2970, %v2969
    %v2983 = vpack.c.b16 %v2972, %v2971
    %v2984 = vpack.c.b16 %v2974, %v2973
    %v2985 = vpack.c.b16 %v2976, %v2975
    %v2986 = vpack.c.b16 %v2978, %v2977
    %2995 = vmatprep.subr.bf16.mxu0 0
    %2996 = vmatpush1.bf16.msra.mxu0 %v2979
    %2997 = vmatprep.subr.bf16.mxu0 0
    %2998 = vmatpush1.bf16.msra.mxu0 %v2980
    %2999 = vmatprep.subr.bf16.mxu0 0
    %3000 = vmatpush1.bf16.msra.mxu0 %v2981
    %3001 = vmatprep.subr.bf16.mxu0 0
    %3002 = vmatpush1.bf16.msra.mxu0 %v2982
    %3003 = vmatprep.subr.bf16.mxu0 0
    %3004 = vmatpush1.bf16.msra.mxu0 %v2983
    %3005 = vmatprep.subr.bf16.mxu0 0
    %3006 = vmatpush1.bf16.msra.mxu0 %v2984
    %3007 = vmatprep.subr.bf16.mxu0 0
    %3008 = vmatpush1.bf16.msra.mxu0 %v2985
    %3009 = vmatprep.subr.bf16.mxu0 0
    %3010 = vmatpush1.bf16.msra.mxu0 %v2986
    %3011 = vmatprep.subr.bf16.mxu0 0
    %3012 = vmatpush1.bf16.msra.mxu0 0
    %3013 = vmatprep.subr.bf16.mxu0 0
    %3014 = vmatpush1.bf16.msra.mxu0 0
    %3015 = vmatprep.subr.bf16.mxu0 0
    %3016 = vmatpush1.bf16.msra.mxu0 0
    %3017 = vmatprep.subr.bf16.mxu0 0
    %3018 = vmatpush1.bf16.msra.mxu0 0
    %3019 = vmatprep.subr.bf16.mxu0 0
    %3020 = vmatpush1.bf16.msra.mxu0 0
    %3021 = vmatprep.subr.bf16.mxu0 0
    %3022 = vmatpush1.bf16.msra.mxu0 0
    %3023 = vmatprep.subr.bf16.mxu0 0
    %3024 = vmatpush1.bf16.msra.mxu0 0
    %3025 = vmatprep.subr.bf16.mxu0 0
    %3026 = vmatpush1.bf16.msra.mxu0 0
    %3027 = vmatprep.mubr.bf16.mxu0 0
    %3028 = vmatmul.mubr.bf16.gmra.mrb[0].mxu0 %v2925
    %v3029 = vpop.f32.mrb[0].mxu0
    %v3030 = vadd.f32 %v2946, %v3029
    %v3031 = vpop.f32.mrb[0].mxu0
    %v3032 = vpop.f32.mrb[0].mxu0
    %v3033 = vadd.f32 %v2946, %v3032
    %v3034 = vpop.f32.mrb[0].mxu0
    %3035 = vdwg.mxu0
    %v3036 = vpack.c.bf16 %v3033, %v3030
    %v3037 = vunpack.c.l.bf16 %v3036
    %v3038 = vunpack.c.h.bf16 %v3036
    %3039 = vmatprep.subr.bf16.mxu0 0
    %3040 = vmatpush1.bf16.msra.mxu0 %v410
    %3041 = vmatprep.subr.bf16.mxu0 0
    %3042 = vmatpush1.bf16.msra.mxu0 %v411
    %3043 = vmatprep.subr.bf16.mxu0 0
    %3044 = vmatpush1.bf16.msra.mxu0 %v412
    %3045 = vmatprep.subr.bf16.mxu0 0
    %3046 = vmatpush1.bf16.msra.mxu0 %v413
    %3047 = vmatprep.subr.bf16.mxu0 0
    %3048 = vmatpush1.bf16.msra.mxu0 %v414
    %3049 = vmatprep.subr.bf16.mxu0 0
    %3050 = vmatpush1.bf16.msra.mxu0 %v415
    %3051 = vmatprep.subr.bf16.mxu0 0
    %3052 = vmatpush1.bf16.msra.mxu0 %v416
    %3053 = vmatprep.subr.bf16.mxu0 0
    %3054 = vmatpush1.bf16.msra.mxu0 %v417
    %3055 = vmatprep.subr.bf16.mxu0 0
    %3056 = vmatpush1.bf16.msra.mxu0 0
    %3057 = vmatprep.subr.bf16.mxu0 0
    %3058 = vmatpush1.bf16.msra.mxu0 0
    %3059 = vmatprep.subr.bf16.mxu0 0
    %3060 = vmatpush1.bf16.msra.mxu0 0
    %3061 = vmatprep.subr.bf16.mxu0 0
    %3062 = vmatpush1.bf16.msra.mxu0 0
    %3063 = vmatprep.subr.bf16.mxu0 0
    %3064 = vmatpush1.bf16.msra.mxu0 0
    %3065 = vmatprep.subr.bf16.mxu0 0
    %3066 = vmatpush1.bf16.msra.mxu0 0
    %3067 = vmatprep.subr.bf16.mxu0 0
    %3068 = vmatpush1.bf16.msra.mxu0 0
    %3069 = vmatprep.subr.bf16.mxu0 0
    %3070 = vmatpush1.bf16.msra.mxu0 0
    %3071 = vmatprep.mubr.bf16.mxu0 0
    %3072 = vmatmul.mubr.bf16.gmra.mrb[0].mxu0 %v2925
    %v3073 = vpop.f32.mrb[0].mxu0
    %v3074 = vadd.f32 0.0, %v3073
    %v3075 = vpop.f32.mrb[0].mxu0
    %v3076 = vpop.f32.mrb[0].mxu0
    %v3077 = vadd.f32 0.0, %v3076
    %v3078 = vpop.f32.mrb[0].mxu0
    %3079 = vdwg.mxu0
    %v3080 = vpack.c.bf16 %v3077, %v3074
    %v3082 = vsel %vm733, %v3080, 0
    %3084 = vmatprep.subr.bf16.mxu0 0
    %3085 = vmatpush1.bf16.msra.mxu0 %v560
    %3086 = vmatprep.subr.bf16.mxu0 0
    %3087 = vmatpush1.bf16.msra.mxu0 %v561
    %3088 = vmatprep.subr.bf16.mxu0 0
    %3089 = vmatpush1.bf16.msra.mxu0 0
    %3090 = vmatprep.subr.bf16.mxu0 0
    %3091 = vmatpush1.bf16.msra.mxu0 0
    %3092 = vmatprep.subr.bf16.mxu0 0
    %3093 = vmatpush1.bf16.msra.mxu0 0
    %3094 = vmatprep.subr.bf16.mxu0 0
    %3095 = vmatpush1.bf16.msra.mxu0 0
    %3096 = vmatprep.subr.bf16.mxu0 0
    %3097 = vmatpush1.bf16.msra.mxu0 0
    %3098 = vmatprep.subr.bf16.mxu0 0
    %3099 = vmatpush1.bf16.msra.mxu0 0
    %3100 = vmatprep.subr.bf16.mxu0 0
    %3101 = vmatpush1.bf16.msra.mxu0 0
    %3102 = vmatprep.subr.bf16.mxu0 0
    %3103 = vmatpush1.bf16.msra.mxu0 0
    %3104 = vmatprep.subr.bf16.mxu0 0
    %3105 = vmatpush1.bf16.msra.mxu0 0
    %3106 = vmatprep.subr.bf16.mxu0 0
    %3107 = vmatpush1.bf16.msra.mxu0 0
    %3108 = vmatprep.subr.bf16.mxu0 0
    %3109 = vmatpush1.bf16.msra.mxu0 0
    %3110 = vmatprep.subr.bf16.mxu0 0
    %3111 = vmatpush1.bf16.msra.mxu0 0
    %3112 = vmatprep.subr.bf16.mxu0 0
    %3113 = vmatpush1.bf16.msra.mxu0 0
    %3114 = vmatprep.subr.bf16.mxu0 0
    %3115 = vmatpush1.bf16.msra.mxu0 0
    %3116 = vmatprep.mubr.bf16.mxu0 0
    %3117 = vmatmul.mubr.bf16.gmra.mrb[0].mxu0 %v3082
    %v3118 = vpop.f32.mrb[0].mxu0
    %v3119 = vadd.f32 0.0, %v3118
    %v3120 = vpop.f32.mrb[0].mxu0
    %v3121 = vpop.f32.mrb[0].mxu0
    %v3122 = vadd.f32 0.0, %v3121
    %v3123 = vpop.f32.mrb[0].mxu0
    %3124 = vdwg.mxu0
    %v3125 = vadd.f32 %v3037, %v3119
    %v3126 = vadd.f32 %v3038, %v3122
    %v3127 = vadd.f32 %v3125, %v2515
    %v3128 = vadd.f32 %v3126, %v2516
    %3129 = vadd.xlane.f32.xlu0 %v3127
    %v3130 = vpop.xlane.xlu0 %3129
    %3131 = vadd.xlane.f32.xlu0 %v3128
    %v3132 = vpop.xlane.xlu0 %3131
    %v3133 = vmul.f32 %v3130, %v1194
    %v3134 = vmul.f32 %v3132, %v1194
    %v3135 = vsub.f32 %v3127, %v3133
    %v3136 = vsub.f32 %v3128, %v3134
    %v3137 = vmul.f32 %v3135, %v3135
    %v3138 = vmul.f32 %v3136, %v3136
    %3139 = vadd.xlane.f32.xlu0 %v3137
    %v3140 = vpop.xlane.xlu0 %3139
    %3141 = vadd.xlane.f32.xlu0 %v3138
    %v3142 = vpop.xlane.xlu0 %3141
    %v3143 = vmul.f32 %v3140, %v1194
    %v3144 = vmul.f32 %v3142, %v1194
    %v3145 = vadd.f32 %v3143, 1e-05
    %v3146 = vadd.f32 %v3144, 1e-05
    %v3147 = vrsqrt.pop %v3145
    %v3148 = vrsqrt.pop %v3146
    %v3149 = vmul.f32 %v3135, %v3147
    %v3150 = vmul.f32 %v3136, %v3148
    %v3151 = vlaneseq
    %v3152 = vshrl.u32 %v3151, 7
    %v3153 = vsub.s32 3, %v3152
    %v3154 = vrot.slane %v574, %v3153
    %v3155 = vmul.f32 %v3149, %v3154
    %v3156 = vmul.f32 %v3150, %v3154
    %v3157 = vlaneseq
    %v3158 = vshrl.u32 %v3157, 7
    %v3159 = vsub.s32 3, %v3158
    %v3160 = vrot.slane %v575, %v3159
    %v3161 = vadd.f32 %v3155, %v3160
    %v3162 = vadd.f32 %v3156, %v3160
    %v3163 = vpack.c.bf16 %v3162, %v3161
    %s3164 = scalar_lea.vmem %s1, 768
    %v3165 = vld [vmem:[%s3164] sm:$0xf]
    %v3166 = vld [vmem:[%s3164 + $0x4] sm:$0xf]
    %v3167 = vld [vmem:[%s3164 + $0x8] sm:$0xf]
    %v3168 = vld [vmem:[%s3164 + $0xc] sm:$0xf]
    %v3169 = vld [vmem:[%s3164 + $0x10] sm:$0xf]
    %v3170 = vld [vmem:[%s3164 + $0x14] sm:$0xf]
    %v3171 = vld [vmem:[%s3164 + $0x18] sm:$0xf]
    %v3172 = vld [vmem:[%s3164 + $0x1c] sm:$0xf]
    %v3173 = vld [vmem:[%s3164 + $0x20] sm:$0xf]
    %v3174 = vld [vmem:[%s3164 + $0x24] sm:$0xf]
    %v3175 = vld [vmem:[%s3164 + $0x28] sm:$0xf]
    %v3176 = vld [vmem:[%s3164 + $0x2c] sm:$0xf]
    %v3177 = vld [vmem:[%s3164 + $0x30] sm:$0xf]
    %v3178 = vld [vmem:[%s3164 + $0x34] sm:$0xf]
    %v3179 = vld [vmem:[%s3164 + $0x38] sm:$0xf]
    %v3180 = vld [vmem:[%s3164 + $0x3c] sm:$0xf]
    %v3181 = vlaneseq
    %v3182 = vshrl.u32 %v3181, 7
    %v3183 = vsub.s32 4, %v3182
    %v3184 = vrot.slane %v32, %v3183
    %v3201 = vunpack.c.l.b16 %v3165
    %v3202 = vunpack.c.l.b16 %v3166
    %v3203 = vunpack.c.l.b16 %v3167
    %v3204 = vunpack.c.l.b16 %v3168
    %v3205 = vunpack.c.l.b16 %v3169
    %v3206 = vunpack.c.l.b16 %v3170
    %v3207 = vunpack.c.l.b16 %v3171
    %v3208 = vunpack.c.l.b16 %v3172
    %v3209 = vunpack.c.l.b16 %v3173
    %v3210 = vunpack.c.l.b16 %v3174
    %v3211 = vunpack.c.l.b16 %v3175
    %v3212 = vunpack.c.l.b16 %v3176
    %v3213 = vunpack.c.l.b16 %v3177
    %v3214 = vunpack.c.l.b16 %v3178
    %v3215 = vunpack.c.l.b16 %v3179
    %v3216 = vunpack.c.l.b16 %v3180
    %v3217 = vpack.c.b16 %v3202, %v3201
    %v3218 = vpack.c.b16 %v3204, %v3203
    %v3219 = vpack.c.b16 %v3206, %v3205
    %v3220 = vpack.c.b16 %v3208, %v3207
    %v3221 = vpack.c.b16 %v3210, %v3209
    %v3222 = vpack.c.b16 %v3212, %v3211
    %v3223 = vpack.c.b16 %v3214, %v3213
    %v3224 = vpack.c.b16 %v3216, %v3215
    %3233 = vmatprep.subr.bf16.mxu0 0
    %3234 = vmatpush1.bf16.msra.mxu0 %v3217
    %3235 = vmatprep.subr.bf16.mxu0 0
    %3236 = vmatpush1.bf16.msra.mxu0 %v3218
    %3237 = vmatprep.subr.bf16.mxu0 0
    %3238 = vmatpush1.bf16.msra.mxu0 %v3219
    %3239 = vmatprep.subr.bf16.mxu0 0
    %3240 = vmatpush1.bf16.msra.mxu0 %v3220
    %3241 = vmatprep.subr.bf16.mxu0 0
    %3242 = vmatpush1.bf16.msra.mxu0 %v3221
    %3243 = vmatprep.subr.bf16.mxu0 0
    %3244 = vmatpush1.bf16.msra.mxu0 %v3222
    %3245 = vmatprep.subr.bf16.mxu0 0
    %3246 = vmatpush1.bf16.msra.mxu0 %v3223
    %3247 = vmatprep.subr.bf16.mxu0 0
    %3248 = vmatpush1.bf16.msra.mxu0 %v3224
    %3249 = vmatprep.subr.bf16.mxu0 0
    %3250 = vmatpush1.bf16.msra.mxu0 0
    %3251 = vmatprep.subr.bf16.mxu0 0
    %3252 = vmatpush1.bf16.msra.mxu0 0
    %3253 = vmatprep.subr.bf16.mxu0 0
    %3254 = vmatpush1.bf16.msra.mxu0 0
    %3255 = vmatprep.subr.bf16.mxu0 0
    %3256 = vmatpush1.bf16.msra.mxu0 0
    %3257 = vmatprep.subr.bf16.mxu0 0
    %3258 = vmatpush1.bf16.msra.mxu0 0
    %3259 = vmatprep.subr.bf16.mxu0 0
    %3260 = vmatpush1.bf16.msra.mxu0 0
    %3261 = vmatprep.subr.bf16.mxu0 0
    %3262 = vmatpush1.bf16.msra.mxu0 0
    %3263 = vmatprep.subr.bf16.mxu0 0
    %3264 = vmatpush1.bf16.msra.mxu0 0
    %3265 = vmatprep.mubr.bf16.mxu0 0
    %3266 = vmatmul.mubr.bf16.gmra.mrb[0].mxu0 %v3163
    %v3267 = vpop.f32.mrb[0].mxu0
    %v3268 = vadd.f32 %v3184, %v3267
    %v3269 = vpop.f32.mrb[0].mxu0
    %v3270 = vpop.f32.mrb[0].mxu0
    %v3271 = vadd.f32 %v3184, %v3270
    %v3272 = vpop.f32.mrb[0].mxu0
    %3273 = vdwg.mxu0
    %v3274 = vpack.c.bf16 %v3271, %v3268
    %v3275 = vunpack.c.l.bf16 %v3274
    %v3276 = vunpack.c.h.bf16 %v3274
    %3277 = vmatprep.subr.bf16.mxu0 0
    %3278 = vmatpush1.bf16.msra.mxu0 %v418
    %3279 = vmatprep.subr.bf16.mxu0 0
    %3280 = vmatpush1.bf16.msra.mxu0 %v419
    %3281 = vmatprep.subr.bf16.mxu0 0
    %3282 = vmatpush1.bf16.msra.mxu0 %v420
    %3283 = vmatprep.subr.bf16.mxu0 0
    %3284 = vmatpush1.bf16.msra.mxu0 %v421
    %3285 = vmatprep.subr.bf16.mxu0 0
    %3286 = vmatpush1.bf16.msra.mxu0 %v422
    %3287 = vmatprep.subr.bf16.mxu0 0
    %3288 = vmatpush1.bf16.msra.mxu0 %v423
    %3289 = vmatprep.subr.bf16.mxu0 0
    %3290 = vmatpush1.bf16.msra.mxu0 %v424
    %3291 = vmatprep.subr.bf16.mxu0 0
    %3292 = vmatpush1.bf16.msra.mxu0 %v425
    %3293 = vmatprep.subr.bf16.mxu0 0
    %3294 = vmatpush1.bf16.msra.mxu0 0
    %3295 = vmatprep.subr.bf16.mxu0 0
    %3296 = vmatpush1.bf16.msra.mxu0 0
    %3297 = vmatprep.subr.bf16.mxu0 0
    %3298 = vmatpush1.bf16.msra.mxu0 0
    %3299 = vmatprep.subr.bf16.mxu0 0
    %3300 = vmatpush1.bf16.msra.mxu0 0
    %3301 = vmatprep.subr.bf16.mxu0 0
    %3302 = vmatpush1.bf16.msra.mxu0 0
    %3303 = vmatprep.subr.bf16.mxu0 0
    %3304 = vmatpush1.bf16.msra.mxu0 0
    %3305 = vmatprep.subr.bf16.mxu0 0
    %3306 = vmatpush1.bf16.msra.mxu0 0
    %3307 = vmatprep.subr.bf16.mxu0 0
    %3308 = vmatpush1.bf16.msra.mxu0 0
    %3309 = vmatprep.mubr.bf16.mxu0 0
    %3310 = vmatmul.mubr.bf16.gmra.mrb[0].mxu0 %v3163
    %v3311 = vpop.f32.mrb[0].mxu0
    %v3312 = vadd.f32 0.0, %v3311
    %v3313 = vpop.f32.mrb[0].mxu0
    %v3314 = vpop.f32.mrb[0].mxu0
    %v3315 = vadd.f32 0.0, %v3314
    %v3316 = vpop.f32.mrb[0].mxu0
    %3317 = vdwg.mxu0
    %v3318 = vpack.c.bf16 %v3315, %v3312
    %v3320 = vsel %vm733, %v3318, 0
    %3322 = vmatprep.subr.bf16.mxu0 0
    %3323 = vmatpush1.bf16.msra.mxu0 %v562
    %3324 = vmatprep.subr.bf16.mxu0 0
    %3325 = vmatpush1.bf16.msra.mxu0 %v563
    %3326 = vmatprep.subr.bf16.mxu0 0
    %3327 = vmatpush1.bf16.msra.mxu0 0
    %3328 = vmatprep.subr.bf16.mxu0 0
    %3329 = vmatpush1.bf16.msra.mxu0 0
    %3330 = vmatprep.subr.bf16.mxu0 0
    %3331 = vmatpush1.bf16.msra.mxu0 0
    %3332 = vmatprep.subr.bf16.mxu0 0
    %3333 = vmatpush1.bf16.msra.mxu0 0
    %3334 = vmatprep.subr.bf16.mxu0 0
    %3335 = vmatpush1.bf16.msra.mxu0 0
    %3336 = vmatprep.subr.bf16.mxu0 0
    %3337 = vmatpush1.bf16.msra.mxu0 0
    %3338 = vmatprep.subr.bf16.mxu0 0
    %3339 = vmatpush1.bf16.msra.mxu0 0
    %3340 = vmatprep.subr.bf16.mxu0 0
    %3341 = vmatpush1.bf16.msra.mxu0 0
    %3342 = vmatprep.subr.bf16.mxu0 0
    %3343 = vmatpush1.bf16.msra.mxu0 0
    %3344 = vmatprep.subr.bf16.mxu0 0
    %3345 = vmatpush1.bf16.msra.mxu0 0
    %3346 = vmatprep.subr.bf16.mxu0 0
    %3347 = vmatpush1.bf16.msra.mxu0 0
    %3348 = vmatprep.subr.bf16.mxu0 0
    %3349 = vmatpush1.bf16.msra.mxu0 0
    %3350 = vmatprep.subr.bf16.mxu0 0
    %3351 = vmatpush1.bf16.msra.mxu0 0
    %3352 = vmatprep.subr.bf16.mxu0 0
    %3353 = vmatpush1.bf16.msra.mxu0 0
    %3354 = vmatprep.mubr.bf16.mxu0 0
    %3355 = vmatmul.mubr.bf16.gmra.mrb[0].mxu0 %v3320
    %v3356 = vpop.f32.mrb[0].mxu0
    %v3357 = vadd.f32 0.0, %v3356
    %v3358 = vpop.f32.mrb[0].mxu0
    %v3359 = vpop.f32.mrb[0].mxu0
    %v3360 = vadd.f32 0.0, %v3359
    %v3361 = vpop.f32.mrb[0].mxu0
    %3362 = vdwg.mxu0
    %v3363 = vadd.f32 %v3275, %v3357
    %v3364 = vadd.f32 %v3276, %v3360
    %v3365 = vmax.f32 %v3363, 0.0
    %v3366 = vmax.f32 %v3364, 0.0
    %v3367 = vpack.c.bf16 %v3366, %v3365
    %s3368 = scalar_lea.vmem %s1, 832
    %v3369 = vld [vmem:[%s3368] sm:$0xf]
    %v3370 = vld [vmem:[%s3368 + $0x4] sm:$0xf]
    %v3371 = vld [vmem:[%s3368 + $0x8] sm:$0xf]
    %v3372 = vld [vmem:[%s3368 + $0xc] sm:$0xf]
    %v3373 = vld [vmem:[%s3368 + $0x10] sm:$0xf]
    %v3374 = vld [vmem:[%s3368 + $0x14] sm:$0xf]
    %v3375 = vld [vmem:[%s3368 + $0x18] sm:$0xf]
    %v3376 = vld [vmem:[%s3368 + $0x1c] sm:$0xf]
    %v3377 = vld [vmem:[%s3368 + $0x20] sm:$0xf]
    %v3378 = vld [vmem:[%s3368 + $0x24] sm:$0xf]
    %v3379 = vld [vmem:[%s3368 + $0x28] sm:$0xf]
    %v3380 = vld [vmem:[%s3368 + $0x2c] sm:$0xf]
    %v3381 = vld [vmem:[%s3368 + $0x30] sm:$0xf]
    %v3382 = vld [vmem:[%s3368 + $0x34] sm:$0xf]
    %v3383 = vld [vmem:[%s3368 + $0x38] sm:$0xf]
    %v3384 = vld [vmem:[%s3368 + $0x3c] sm:$0xf]
    %v3385 = vlaneseq
    %v3386 = vshrl.u32 %v3385, 7
    %v3387 = vsub.s32 5, %v3386
    %v3388 = vrot.slane %v32, %v3387
    %v3405 = vunpack.c.l.b16 %v3369
    %v3406 = vunpack.c.l.b16 %v3370
    %v3407 = vunpack.c.l.b16 %v3371
    %v3408 = vunpack.c.l.b16 %v3372
    %v3409 = vunpack.c.l.b16 %v3373
    %v3410 = vunpack.c.l.b16 %v3374
    %v3411 = vunpack.c.l.b16 %v3375
    %v3412 = vunpack.c.l.b16 %v3376
    %v3413 = vunpack.c.l.b16 %v3377
    %v3414 = vunpack.c.l.b16 %v3378
    %v3415 = vunpack.c.l.b16 %v3379
    %v3416 = vunpack.c.l.b16 %v3380
    %v3417 = vunpack.c.l.b16 %v3381
    %v3418 = vunpack.c.l.b16 %v3382
    %v3419 = vunpack.c.l.b16 %v3383
    %v3420 = vunpack.c.l.b16 %v3384
    %v3421 = vpack.c.b16 %v3406, %v3405
    %v3422 = vpack.c.b16 %v3408, %v3407
    %v3423 = vpack.c.b16 %v3410, %v3409
    %v3424 = vpack.c.b16 %v3412, %v3411
    %v3425 = vpack.c.b16 %v3414, %v3413
    %v3426 = vpack.c.b16 %v3416, %v3415
    %v3427 = vpack.c.b16 %v3418, %v3417
    %v3428 = vpack.c.b16 %v3420, %v3419
    %3437 = vmatprep.subr.bf16.mxu0 0
    %3438 = vmatpush1.bf16.msra.mxu0 %v3421
    %3439 = vmatprep.subr.bf16.mxu0 0
    %3440 = vmatpush1.bf16.msra.mxu0 %v3422
    %3441 = vmatprep.subr.bf16.mxu0 0
    %3442 = vmatpush1.bf16.msra.mxu0 %v3423
    %3443 = vmatprep.subr.bf16.mxu0 0
    %3444 = vmatpush1.bf16.msra.mxu0 %v3424
    %3445 = vmatprep.subr.bf16.mxu0 0
    %3446 = vmatpush1.bf16.msra.mxu0 %v3425
    %3447 = vmatprep.subr.bf16.mxu0 0
    %3448 = vmatpush1.bf16.msra.mxu0 %v3426
    %3449 = vmatprep.subr.bf16.mxu0 0
    %3450 = vmatpush1.bf16.msra.mxu0 %v3427
    %3451 = vmatprep.subr.bf16.mxu0 0
    %3452 = vmatpush1.bf16.msra.mxu0 %v3428
    %3453 = vmatprep.subr.bf16.mxu0 0
    %3454 = vmatpush1.bf16.msra.mxu0 0
    %3455 = vmatprep.subr.bf16.mxu0 0
    %3456 = vmatpush1.bf16.msra.mxu0 0
    %3457 = vmatprep.subr.bf16.mxu0 0
    %3458 = vmatpush1.bf16.msra.mxu0 0
    %3459 = vmatprep.subr.bf16.mxu0 0
    %3460 = vmatpush1.bf16.msra.mxu0 0
    %3461 = vmatprep.subr.bf16.mxu0 0
    %3462 = vmatpush1.bf16.msra.mxu0 0
    %3463 = vmatprep.subr.bf16.mxu0 0
    %3464 = vmatpush1.bf16.msra.mxu0 0
    %3465 = vmatprep.subr.bf16.mxu0 0
    %3466 = vmatpush1.bf16.msra.mxu0 0
    %3467 = vmatprep.subr.bf16.mxu0 0
    %3468 = vmatpush1.bf16.msra.mxu0 0
    %3469 = vmatprep.mubr.bf16.mxu0 0
    %3470 = vmatmul.mubr.bf16.gmra.mrb[0].mxu0 %v3367
    %v3471 = vpop.f32.mrb[0].mxu0
    %v3472 = vadd.f32 %v3388, %v3471
    %v3473 = vpop.f32.mrb[0].mxu0
    %v3474 = vpop.f32.mrb[0].mxu0
    %v3475 = vadd.f32 %v3388, %v3474
    %v3476 = vpop.f32.mrb[0].mxu0
    %3477 = vdwg.mxu0
    %v3478 = vpack.c.bf16 %v3475, %v3472
    %v3479 = vunpack.c.l.bf16 %v3478
    %v3480 = vunpack.c.h.bf16 %v3478
    %3481 = vmatprep.subr.bf16.mxu0 0
    %3482 = vmatpush1.bf16.msra.mxu0 %v426
    %3483 = vmatprep.subr.bf16.mxu0 0
    %3484 = vmatpush1.bf16.msra.mxu0 %v427
    %3485 = vmatprep.subr.bf16.mxu0 0
    %3486 = vmatpush1.bf16.msra.mxu0 %v428
    %3487 = vmatprep.subr.bf16.mxu0 0
    %3488 = vmatpush1.bf16.msra.mxu0 %v429
    %3489 = vmatprep.subr.bf16.mxu0 0
    %3490 = vmatpush1.bf16.msra.mxu0 %v430
    %3491 = vmatprep.subr.bf16.mxu0 0
    %3492 = vmatpush1.bf16.msra.mxu0 %v431
    %3493 = vmatprep.subr.bf16.mxu0 0
    %3494 = vmatpush1.bf16.msra.mxu0 %v432
    %3495 = vmatprep.subr.bf16.mxu0 0
    %3496 = vmatpush1.bf16.msra.mxu0 %v433
    %3497 = vmatprep.subr.bf16.mxu0 0
    %3498 = vmatpush1.bf16.msra.mxu0 0
    %3499 = vmatprep.subr.bf16.mxu0 0
    %3500 = vmatpush1.bf16.msra.mxu0 0
    %3501 = vmatprep.subr.bf16.mxu0 0
    %3502 = vmatpush1.bf16.msra.mxu0 0
    %3503 = vmatprep.subr.bf16.mxu0 0
    %3504 = vmatpush1.bf16.msra.mxu0 0
    %3505 = vmatprep.subr.bf16.mxu0 0
    %3506 = vmatpush1.bf16.msra.mxu0 0
    %3507 = vmatprep.subr.bf16.mxu0 0
    %3508 = vmatpush1.bf16.msra.mxu0 0
    %3509 = vmatprep.subr.bf16.mxu0 0
    %3510 = vmatpush1.bf16.msra.mxu0 0
    %3511 = vmatprep.subr.bf16.mxu0 0
    %3512 = vmatpush1.bf16.msra.mxu0 0
    %3513 = vmatprep.mubr.bf16.mxu0 0
    %3514 = vmatmul.mubr.bf16.gmra.mrb[0].mxu0 %v3367
    %v3515 = vpop.f32.mrb[0].mxu0
    %v3516 = vadd.f32 0.0, %v3515
    %v3517 = vpop.f32.mrb[0].mxu0
    %v3518 = vpop.f32.mrb[0].mxu0
    %v3519 = vadd.f32 0.0, %v3518
    %v3520 = vpop.f32.mrb[0].mxu0
    %3521 = vdwg.mxu0
    %v3522 = vpack.c.bf16 %v3519, %v3516
    %v3524 = vsel %vm733, %v3522, 0
    %3526 = vmatprep.subr.bf16.mxu0 0
    %3527 = vmatpush1.bf16.msra.mxu0 %v564
    %3528 = vmatprep.subr.bf16.mxu0 0
    %3529 = vmatpush1.bf16.msra.mxu0 %v565
    %3530 = vmatprep.subr.bf16.mxu0 0
    %3531 = vmatpush1.bf16.msra.mxu0 0
    %3532 = vmatprep.subr.bf16.mxu0 0
    %3533 = vmatpush1.bf16.msra.mxu0 0
    %3534 = vmatprep.subr.bf16.mxu0 0
    %3535 = vmatpush1.bf16.msra.mxu0 0
    %3536 = vmatprep.subr.bf16.mxu0 0
    %3537 = vmatpush1.bf16.msra.mxu0 0
    %3538 = vmatprep.subr.bf16.mxu0 0
    %3539 = vmatpush1.bf16.msra.mxu0 0
    %3540 = vmatprep.subr.bf16.mxu0 0
    %3541 = vmatpush1.bf16.msra.mxu0 0
    %3542 = vmatprep.subr.bf16.mxu0 0
    %3543 = vmatpush1.bf16.msra.mxu0 0
    %3544 = vmatprep.subr.bf16.mxu0 0
    %3545 = vmatpush1.bf16.msra.mxu0 0
    %3546 = vmatprep.subr.bf16.mxu0 0
    %3547 = vmatpush1.bf16.msra.mxu0 0
    %3548 = vmatprep.subr.bf16.mxu0 0
    %3549 = vmatpush1.bf16.msra.mxu0 0
    %3550 = vmatprep.subr.bf16.mxu0 0
    %3551 = vmatpush1.bf16.msra.mxu0 0
    %3552 = vmatprep.subr.bf16.mxu0 0
    %3553 = vmatpush1.bf16.msra.mxu0 0
    %3554 = vmatprep.subr.bf16.mxu0 0
    %3555 = vmatpush1.bf16.msra.mxu0 0
    %3556 = vmatprep.subr.bf16.mxu0 0
    %3557 = vmatpush1.bf16.msra.mxu0 0
    %3558 = vmatprep.mubr.bf16.mxu0 0
    %3559 = vmatmul.mubr.bf16.gmra.mrb[0].mxu0 %v3524
    %v3560 = vpop.f32.mrb[0].mxu0
    %v3561 = vadd.f32 0.0, %v3560
    %v3562 = vpop.f32.mrb[0].mxu0
    %v3563 = vpop.f32.mrb[0].mxu0
    %v3564 = vadd.f32 0.0, %v3563
    %v3565 = vpop.f32.mrb[0].mxu0
    %3566 = vdwg.mxu0
    %v3567 = vadd.f32 %v3479, %v3561
    %v3568 = vadd.f32 %v3480, %v3564
    %v3569 = vmax.f32 %v3567, 0.0
    %v3570 = vmax.f32 %v3568, 0.0
    %v3571 = vpack.c.bf16 %v3570, %v3569
    %s3572 = scalar_lea.vmem %s1, 896
    %v3573 = vld [vmem:[%s3572] sm:$0xf]
    %v3574 = vld [vmem:[%s3572 + $0x4] sm:$0xf]
    %v3575 = vld [vmem:[%s3572 + $0x8] sm:$0xf]
    %v3576 = vld [vmem:[%s3572 + $0xc] sm:$0xf]
    %v3577 = vld [vmem:[%s3572 + $0x10] sm:$0xf]
    %v3578 = vld [vmem:[%s3572 + $0x14] sm:$0xf]
    %v3579 = vld [vmem:[%s3572 + $0x18] sm:$0xf]
    %v3580 = vld [vmem:[%s3572 + $0x1c] sm:$0xf]
    %v3581 = vld [vmem:[%s3572 + $0x20] sm:$0xf]
    %v3582 = vld [vmem:[%s3572 + $0x24] sm:$0xf]
    %v3583 = vld [vmem:[%s3572 + $0x28] sm:$0xf]
    %v3584 = vld [vmem:[%s3572 + $0x2c] sm:$0xf]
    %v3585 = vld [vmem:[%s3572 + $0x30] sm:$0xf]
    %v3586 = vld [vmem:[%s3572 + $0x34] sm:$0xf]
    %v3587 = vld [vmem:[%s3572 + $0x38] sm:$0xf]
    %v3588 = vld [vmem:[%s3572 + $0x3c] sm:$0xf]
    %v3589 = vlaneseq
    %v3590 = vshrl.u32 %v3589, 7
    %v3591 = vsub.s32 6, %v3590
    %v3592 = vrot.slane %v32, %v3591
    %v3609 = vunpack.c.l.b16 %v3573
    %v3610 = vunpack.c.l.b16 %v3574
    %v3611 = vunpack.c.l.b16 %v3575
    %v3612 = vunpack.c.l.b16 %v3576
    %v3613 = vunpack.c.l.b16 %v3577
    %v3614 = vunpack.c.l.b16 %v3578
    %v3615 = vunpack.c.l.b16 %v3579
    %v3616 = vunpack.c.l.b16 %v3580
    %v3617 = vunpack.c.l.b16 %v3581
    %v3618 = vunpack.c.l.b16 %v3582
    %v3619 = vunpack.c.l.b16 %v3583
    %v3620 = vunpack.c.l.b16 %v3584
    %v3621 = vunpack.c.l.b16 %v3585
    %v3622 = vunpack.c.l.b16 %v3586
    %v3623 = vunpack.c.l.b16 %v3587
    %v3624 = vunpack.c.l.b16 %v3588
    %v3625 = vpack.c.b16 %v3610, %v3609
    %v3626 = vpack.c.b16 %v3612, %v3611
    %v3627 = vpack.c.b16 %v3614, %v3613
    %v3628 = vpack.c.b16 %v3616, %v3615
    %v3629 = vpack.c.b16 %v3618, %v3617
    %v3630 = vpack.c.b16 %v3620, %v3619
    %v3631 = vpack.c.b16 %v3622, %v3621
    %v3632 = vpack.c.b16 %v3624, %v3623
    %3641 = vmatprep.subr.bf16.mxu0 0
    %3642 = vmatpush1.bf16.msra.mxu0 %v3625
    %3643 = vmatprep.subr.bf16.mxu0 0
    %3644 = vmatpush1.bf16.msra.mxu0 %v3626
    %3645 = vmatprep.subr.bf16.mxu0 0
    %3646 = vmatpush1.bf16.msra.mxu0 %v3627
    %3647 = vmatprep.subr.bf16.mxu0 0
    %3648 = vmatpush1.bf16.msra.mxu0 %v3628
    %3649 = vmatprep.subr.bf16.mxu0 0
    %3650 = vmatpush1.bf16.msra.mxu0 %v3629
    %3651 = vmatprep.subr.bf16.mxu0 0
    %3652 = vmatpush1.bf16.msra.mxu0 %v3630
    %3653 = vmatprep.subr.bf16.mxu0 0
    %3654 = vmatpush1.bf16.msra.mxu0 %v3631
    %3655 = vmatprep.subr.bf16.mxu0 0
    %3656 = vmatpush1.bf16.msra.mxu0 %v3632
    %3657 = vmatprep.subr.bf16.mxu0 0
    %3658 = vmatpush1.bf16.msra.mxu0 0
    %3659 = vmatprep.subr.bf16.mxu0 0
    %3660 = vmatpush1.bf16.msra.mxu0 0
    %3661 = vmatprep.subr.bf16.mxu0 0
    %3662 = vmatpush1.bf16.msra.mxu0 0
    %3663 = vmatprep.subr.bf16.mxu0 0
    %3664 = vmatpush1.bf16.msra.mxu0 0
    %3665 = vmatprep.subr.bf16.mxu0 0
    %3666 = vmatpush1.bf16.msra.mxu0 0
    %3667 = vmatprep.subr.bf16.mxu0 0
    %3668 = vmatpush1.bf16.msra.mxu0 0
    %3669 = vmatprep.subr.bf16.mxu0 0
    %3670 = vmatpush1.bf16.msra.mxu0 0
    %3671 = vmatprep.subr.bf16.mxu0 0
    %3672 = vmatpush1.bf16.msra.mxu0 0
    %3673 = vmatprep.mubr.bf16.mxu0 0
    %3674 = vmatmul.mubr.bf16.gmra.mrb[0].mxu0 %v3571
    %v3675 = vpop.f32.mrb[0].mxu0
    %v3676 = vadd.f32 %v3592, %v3675
    %v3677 = vpop.f32.mrb[0].mxu0
    %v3678 = vpop.f32.mrb[0].mxu0
    %v3679 = vadd.f32 %v3592, %v3678
    %v3680 = vpop.f32.mrb[0].mxu0
    %3681 = vdwg.mxu0
    %v3682 = vpack.c.bf16 %v3679, %v3676
    %v3683 = vunpack.c.l.bf16 %v3682
    %v3684 = vunpack.c.h.bf16 %v3682
    %3685 = vmatprep.subr.bf16.mxu0 0
    %3686 = vmatpush1.bf16.msra.mxu0 %v434
    %3687 = vmatprep.subr.bf16.mxu0 0
    %3688 = vmatpush1.bf16.msra.mxu0 %v435
    %3689 = vmatprep.subr.bf16.mxu0 0
    %3690 = vmatpush1.bf16.msra.mxu0 %v436
    %3691 = vmatprep.subr.bf16.mxu0 0
    %3692 = vmatpush1.bf16.msra.mxu0 %v437
    %3693 = vmatprep.subr.bf16.mxu0 0
    %3694 = vmatpush1.bf16.msra.mxu0 %v438
    %3695 = vmatprep.subr.bf16.mxu0 0
    %3696 = vmatpush1.bf16.msra.mxu0 %v439
    %3697 = vmatprep.subr.bf16.mxu0 0
    %3698 = vmatpush1.bf16.msra.mxu0 %v440
    %3699 = vmatprep.subr.bf16.mxu0 0
    %3700 = vmatpush1.bf16.msra.mxu0 %v441
    %3701 = vmatprep.subr.bf16.mxu0 0
    %3702 = vmatpush1.bf16.msra.mxu0 0
    %3703 = vmatprep.subr.bf16.mxu0 0
    %3704 = vmatpush1.bf16.msra.mxu0 0
    %3705 = vmatprep.subr.bf16.mxu0 0
    %3706 = vmatpush1.bf16.msra.mxu0 0
    %3707 = vmatprep.subr.bf16.mxu0 0
    %3708 = vmatpush1.bf16.msra.mxu0 0
    %3709 = vmatprep.subr.bf16.mxu0 0
    %3710 = vmatpush1.bf16.msra.mxu0 0
    %3711 = vmatprep.subr.bf16.mxu0 0
    %3712 = vmatpush1.bf16.msra.mxu0 0
    %3713 = vmatprep.subr.bf16.mxu0 0
    %3714 = vmatpush1.bf16.msra.mxu0 0
    %3715 = vmatprep.subr.bf16.mxu0 0
    %3716 = vmatpush1.bf16.msra.mxu0 0
    %3717 = vmatprep.mubr.bf16.mxu0 0
    %3718 = vmatmul.mubr.bf16.gmra.mrb[0].mxu0 %v3571
    %v3719 = vpop.f32.mrb[0].mxu0
    %v3720 = vadd.f32 0.0, %v3719
    %v3721 = vpop.f32.mrb[0].mxu0
    %v3722 = vpop.f32.mrb[0].mxu0
    %v3723 = vadd.f32 0.0, %v3722
    %v3724 = vpop.f32.mrb[0].mxu0
    %3725 = vdwg.mxu0
    %v3726 = vpack.c.bf16 %v3723, %v3720
    %v3728 = vsel %vm733, %v3726, 0
    %3730 = vmatprep.subr.bf16.mxu0 0
    %3731 = vmatpush1.bf16.msra.mxu0 %v566
    %3732 = vmatprep.subr.bf16.mxu0 0
    %3733 = vmatpush1.bf16.msra.mxu0 %v567
    %3734 = vmatprep.subr.bf16.mxu0 0
    %3735 = vmatpush1.bf16.msra.mxu0 0
    %3736 = vmatprep.subr.bf16.mxu0 0
    %3737 = vmatpush1.bf16.msra.mxu0 0
    %3738 = vmatprep.subr.bf16.mxu0 0
    %3739 = vmatpush1.bf16.msra.mxu0 0
    %3740 = vmatprep.subr.bf16.mxu0 0
    %3741 = vmatpush1.bf16.msra.mxu0 0
    %3742 = vmatprep.subr.bf16.mxu0 0
    %3743 = vmatpush1.bf16.msra.mxu0 0
    %3744 = vmatprep.subr.bf16.mxu0 0
    %3745 = vmatpush1.bf16.msra.mxu0 0
    %3746 = vmatprep.subr.bf16.mxu0 0
    %3747 = vmatpush1.bf16.msra.mxu0 0
    %3748 = vmatprep.subr.bf16.mxu0 0
    %3749 = vmatpush1.bf16.msra.mxu0 0
    %3750 = vmatprep.subr.bf16.mxu0 0
    %3751 = vmatpush1.bf16.msra.mxu0 0
    %3752 = vmatprep.subr.bf16.mxu0 0
    %3753 = vmatpush1.bf16.msra.mxu0 0
    %3754 = vmatprep.subr.bf16.mxu0 0
    %3755 = vmatpush1.bf16.msra.mxu0 0
    %3756 = vmatprep.subr.bf16.mxu0 0
    %3757 = vmatpush1.bf16.msra.mxu0 0
    %3758 = vmatprep.subr.bf16.mxu0 0
    %3759 = vmatpush1.bf16.msra.mxu0 0
    %3760 = vmatprep.subr.bf16.mxu0 0
    %3761 = vmatpush1.bf16.msra.mxu0 0
    %3762 = vmatprep.mubr.bf16.mxu0 0
    %3763 = vmatmul.mubr.bf16.gmra.mrb[0].mxu0 %v3728
    %v3764 = vpop.f32.mrb[0].mxu0
    %v3765 = vadd.f32 0.0, %v3764
    %v3766 = vpop.f32.mrb[0].mxu0
    %v3767 = vpop.f32.mrb[0].mxu0
    %v3768 = vadd.f32 0.0, %v3767
    %v3769 = vpop.f32.mrb[0].mxu0
    %3770 = vdwg.mxu0
    %v3771 = vadd.f32 %v3683, %v3765
    %v3772 = vadd.f32 %v3684, %v3768
    %v3773 = vadd.f32 %v3771, %v3161
    %v3774 = vadd.f32 %v3772, %v3162
    %3775 = vadd.xlane.f32.xlu0 %v3773
    %v3776 = vpop.xlane.xlu0 %3775
    %3777 = vadd.xlane.f32.xlu0 %v3774
    %v3778 = vpop.xlane.xlu0 %3777
    %v3779 = vmul.f32 %v3776, %v1194
    %v3780 = vmul.f32 %v3778, %v1194
    %v3781 = vsub.f32 %v3773, %v3779
    %v3782 = vsub.f32 %v3774, %v3780
    %v3783 = vmul.f32 %v3781, %v3781
    %v3784 = vmul.f32 %v3782, %v3782
    %3785 = vadd.xlane.f32.xlu0 %v3783
    %v3786 = vpop.xlane.xlu0 %3785
    %3787 = vadd.xlane.f32.xlu0 %v3784
    %v3788 = vpop.xlane.xlu0 %3787
    %v3789 = vmul.f32 %v3786, %v1194
    %v3790 = vmul.f32 %v3788, %v1194
    %v3791 = vadd.f32 %v3789, 1e-05
    %v3792 = vadd.f32 %v3790, 1e-05
    %v3793 = vrsqrt.pop %v3791
    %v3794 = vrsqrt.pop %v3792
    %v3795 = vmul.f32 %v3781, %v3793
    %v3796 = vmul.f32 %v3782, %v3794
    %v3797 = vlaneseq
    %v3798 = vshrl.u32 %v3797, 7
    %v3799 = vsub.s32 4, %v3798
    %v3800 = vrot.slane %v574, %v3799
    %v3801 = vmul.f32 %v3795, %v3800
    %v3802 = vmul.f32 %v3796, %v3800
    %v3803 = vlaneseq
    %v3804 = vshrl.u32 %v3803, 7
    %v3805 = vsub.s32 4, %v3804
    %v3806 = vrot.slane %v575, %v3805
    %v3807 = vadd.f32 %v3801, %v3806
    %v3808 = vadd.f32 %v3802, %v3806
    %v3809 = vpack.c.bf16 %v3808, %v3807
    %s3810 = scalar_lea.vmem %s1, 960
    %v3811 = vld [vmem:[%s3810] sm:$0xf]
    %v3812 = vld [vmem:[%s3810 + $0x4] sm:$0xf]
    %v3813 = vld [vmem:[%s3810 + $0x8] sm:$0xf]
    %v3814 = vld [vmem:[%s3810 + $0xc] sm:$0xf]
    %v3815 = vld [vmem:[%s3810 + $0x10] sm:$0xf]
    %v3816 = vld [vmem:[%s3810 + $0x14] sm:$0xf]
    %v3817 = vld [vmem:[%s3810 + $0x18] sm:$0xf]
    %v3818 = vld [vmem:[%s3810 + $0x1c] sm:$0xf]
    %v3819 = vld [vmem:[%s3810 + $0x20] sm:$0xf]
    %v3820 = vld [vmem:[%s3810 + $0x24] sm:$0xf]
    %v3821 = vld [vmem:[%s3810 + $0x28] sm:$0xf]
    %v3822 = vld [vmem:[%s3810 + $0x2c] sm:$0xf]
    %v3823 = vld [vmem:[%s3810 + $0x30] sm:$0xf]
    %v3824 = vld [vmem:[%s3810 + $0x34] sm:$0xf]
    %v3825 = vld [vmem:[%s3810 + $0x38] sm:$0xf]
    %v3826 = vld [vmem:[%s3810 + $0x3c] sm:$0xf]
    %v3827 = vlaneseq
    %v3828 = vshrl.u32 %v3827, 7
    %v3829 = vsub.s32 7, %v3828
    %v3830 = vrot.slane %v32, %v3829
    %v3847 = vunpack.c.l.b16 %v3811
    %v3848 = vunpack.c.l.b16 %v3812
    %v3849 = vunpack.c.l.b16 %v3813
    %v3850 = vunpack.c.l.b16 %v3814
    %v3851 = vunpack.c.l.b16 %v3815
    %v3852 = vunpack.c.l.b16 %v3816
    %v3853 = vunpack.c.l.b16 %v3817
    %v3854 = vunpack.c.l.b16 %v3818
    %v3855 = vunpack.c.l.b16 %v3819
    %v3856 = vunpack.c.l.b16 %v3820
    %v3857 = vunpack.c.l.b16 %v3821
    %v3858 = vunpack.c.l.b16 %v3822
    %v3859 = vunpack.c.l.b16 %v3823
    %v3860 = vunpack.c.l.b16 %v3824
    %v3861 = vunpack.c.l.b16 %v3825
    %v3862 = vunpack.c.l.b16 %v3826
    %v3863 = vpack.c.b16 %v3848, %v3847
    %v3864 = vpack.c.b16 %v3850, %v3849
    %v3865 = vpack.c.b16 %v3852, %v3851
    %v3866 = vpack.c.b16 %v3854, %v3853
    %v3867 = vpack.c.b16 %v3856, %v3855
    %v3868 = vpack.c.b16 %v3858, %v3857
    %v3869 = vpack.c.b16 %v3860, %v3859
    %v3870 = vpack.c.b16 %v3862, %v3861
    %3879 = vmatprep.subr.bf16.mxu0 0
    %3880 = vmatpush1.bf16.msra.mxu0 %v3863
    %3881 = vmatprep.subr.bf16.mxu0 0
    %3882 = vmatpush1.bf16.msra.mxu0 %v3864
    %3883 = vmatprep.subr.bf16.mxu0 0
    %3884 = vmatpush1.bf16.msra.mxu0 %v3865
    %3885 = vmatprep.subr.bf16.mxu0 0
    %3886 = vmatpush1.bf16.msra.mxu0 %v3866
    %3887 = vmatprep.subr.bf16.mxu0 0
    %3888 = vmatpush1.bf16.msra.mxu0 %v3867
    %3889 = vmatprep.subr.bf16.mxu0 0
    %3890 = vmatpush1.bf16.msra.mxu0 %v3868
    %3891 = vmatprep.subr.bf16.mxu0 0
    %3892 = vmatpush1.bf16.msra.mxu0 %v3869
    %3893 = vmatprep.subr.bf16.mxu0 0
    %3894 = vmatpush1.bf16.msra.mxu0 %v3870
    %3895 = vmatprep.subr.bf16.mxu0 0
    %3896 = vmatpush1.bf16.msra.mxu0 0
    %3897 = vmatprep.subr.bf16.mxu0 0
    %3898 = vmatpush1.bf16.msra.mxu0 0
    %3899 = vmatprep.subr.bf16.mxu0 0
    %3900 = vmatpush1.bf16.msra.mxu0 0
    %3901 = vmatprep.subr.bf16.mxu0 0
    %3902 = vmatpush1.bf16.msra.mxu0 0
    %3903 = vmatprep.subr.bf16.mxu0 0
    %3904 = vmatpush1.bf16.msra.mxu0 0
    %3905 = vmatprep.subr.bf16.mxu0 0
    %3906 = vmatpush1.bf16.msra.mxu0 0
    %3907 = vmatprep.subr.bf16.mxu0 0
    %3908 = vmatpush1.bf16.msra.mxu0 0
    %3909 = vmatprep.subr.bf16.mxu0 0
    %3910 = vmatpush1.bf16.msra.mxu0 0
    %3911 = vmatprep.mubr.bf16.mxu0 0
    %3912 = vmatmul.mubr.bf16.gmra.mrb[0].mxu0 %v3809
    %v3913 = vpop.f32.mrb[0].mxu0
    %v3914 = vadd.f32 %v3830, %v3913
    %v3915 = vpop.f32.mrb[0].mxu0
    %v3916 = vpop.f32.mrb[0].mxu0
    %v3917 = vadd.f32 %v3830, %v3916
    %v3918 = vpop.f32.mrb[0].mxu0
    %3919 = vdwg.mxu0
    %v3920 = vpack.c.bf16 %v3917, %v3914
    %v3921 = vunpack.c.l.bf16 %v3920
    %v3922 = vunpack.c.h.bf16 %v3920
    %3923 = vmatprep.subr.bf16.mxu0 0
    %3924 = vmatpush1.bf16.msra.mxu0 %v442
    %3925 = vmatprep.subr.bf16.mxu0 0
    %3926 = vmatpush1.bf16.msra.mxu0 %v443
    %3927 = vmatprep.subr.bf16.mxu0 0
    %3928 = vmatpush1.bf16.msra.mxu0 %v444
    %3929 = vmatprep.subr.bf16.mxu0 0
    %3930 = vmatpush1.bf16.msra.mxu0 %v445
    %3931 = vmatprep.subr.bf16.mxu0 0
    %3932 = vmatpush1.bf16.msra.mxu0 %v446
    %3933 = vmatprep.subr.bf16.mxu0 0
    %3934 = vmatpush1.bf16.msra.mxu0 %v447
    %3935 = vmatprep.subr.bf16.mxu0 0
    %3936 = vmatpush1.bf16.msra.mxu0 %v448
    %3937 = vmatprep.subr.bf16.mxu0 0
    %3938 = vmatpush1.bf16.msra.mxu0 %v449
    %3939 = vmatprep.subr.bf16.mxu0 0
    %3940 = vmatpush1.bf16.msra.mxu0 0
    %3941 = vmatprep.subr.bf16.mxu0 0
    %3942 = vmatpush1.bf16.msra.mxu0 0
    %3943 = vmatprep.subr.bf16.mxu0 0
    %3944 = vmatpush1.bf16.msra.mxu0 0
    %3945 = vmatprep.subr.bf16.mxu0 0
    %3946 = vmatpush1.bf16.msra.mxu0 0
    %3947 = vmatprep.subr.bf16.mxu0 0
    %3948 = vmatpush1.bf16.msra.mxu0 0
    %3949 = vmatprep.subr.bf16.mxu0 0
    %3950 = vmatpush1.bf16.msra.mxu0 0
    %3951 = vmatprep.subr.bf16.mxu0 0
    %3952 = vmatpush1.bf16.msra.mxu0 0
    %3953 = vmatprep.subr.bf16.mxu0 0
    %3954 = vmatpush1.bf16.msra.mxu0 0
    %3955 = vmatprep.mubr.bf16.mxu0 0
    %3956 = vmatmul.mubr.bf16.gmra.mrb[0].mxu0 %v3809
    %v3957 = vpop.f32.mrb[0].mxu0
    %v3958 = vadd.f32 0.0, %v3957
    %v3959 = vpop.f32.mrb[0].mxu0
    %v3960 = vpop.f32.mrb[0].mxu0
    %v3961 = vadd.f32 0.0, %v3960
    %v3962 = vpop.f32.mrb[0].mxu0
    %3963 = vdwg.mxu0
    %v3964 = vpack.c.bf16 %v3961, %v3958
    %v3966 = vsel %vm733, %v3964, 0
    %3968 = vmatprep.subr.bf16.mxu0 0
    %3969 = vmatpush1.bf16.msra.mxu0 %v568
    %3970 = vmatprep.subr.bf16.mxu0 0
    %3971 = vmatpush1.bf16.msra.mxu0 %v569
    %3972 = vmatprep.subr.bf16.mxu0 0
    %3973 = vmatpush1.bf16.msra.mxu0 0
    %3974 = vmatprep.subr.bf16.mxu0 0
    %3975 = vmatpush1.bf16.msra.mxu0 0
    %3976 = vmatprep.subr.bf16.mxu0 0
    %3977 = vmatpush1.bf16.msra.mxu0 0
    %3978 = vmatprep.subr.bf16.mxu0 0
    %3979 = vmatpush1.bf16.msra.mxu0 0
    %3980 = vmatprep.subr.bf16.mxu0 0
    %3981 = vmatpush1.bf16.msra.mxu0 0
    %3982 = vmatprep.subr.bf16.mxu0 0
    %3983 = vmatpush1.bf16.msra.mxu0 0
    %3984 = vmatprep.subr.bf16.mxu0 0
    %3985 = vmatpush1.bf16.msra.mxu0 0
    %3986 = vmatprep.subr.bf16.mxu0 0
    %3987 = vmatpush1.bf16.msra.mxu0 0
    %3988 = vmatprep.subr.bf16.mxu0 0
    %3989 = vmatpush1.bf16.msra.mxu0 0
    %3990 = vmatprep.subr.bf16.mxu0 0
    %3991 = vmatpush1.bf16.msra.mxu0 0
    %3992 = vmatprep.subr.bf16.mxu0 0
    %3993 = vmatpush1.bf16.msra.mxu0 0
    %3994 = vmatprep.subr.bf16.mxu0 0
    %3995 = vmatpush1.bf16.msra.mxu0 0
    %3996 = vmatprep.subr.bf16.mxu0 0
    %3997 = vmatpush1.bf16.msra.mxu0 0
    %3998 = vmatprep.subr.bf16.mxu0 0
    %3999 = vmatpush1.bf16.msra.mxu0 0
    %4000 = vmatprep.mubr.bf16.mxu0 0
    %4001 = vmatmul.mubr.bf16.gmra.mrb[0].mxu0 %v3966
    %v4002 = vpop.f32.mrb[0].mxu0
    %v4003 = vadd.f32 0.0, %v4002
    %v4004 = vpop.f32.mrb[0].mxu0
    %v4005 = vpop.f32.mrb[0].mxu0
    %v4006 = vadd.f32 0.0, %v4005
    %v4007 = vpop.f32.mrb[0].mxu0
    %4008 = vdwg.mxu0
    %v4009 = vadd.f32 %v3921, %v4003
    %v4010 = vadd.f32 %v3922, %v4006
    %v4011 = vmax.f32 %v4009, 0.0
    %v4012 = vmax.f32 %v4010, 0.0
    %v4013 = vpack.c.bf16 %v4012, %v4011
    %s4014 = scalar_lea.vmem %s1, 1024
    %v4015 = vld [vmem:[%s4014] sm:$0xf]
    %v4016 = vld [vmem:[%s4014 + $0x4] sm:$0xf]
    %v4017 = vld [vmem:[%s4014 + $0x8] sm:$0xf]
    %v4018 = vld [vmem:[%s4014 + $0xc] sm:$0xf]
    %v4019 = vld [vmem:[%s4014 + $0x10] sm:$0xf]
    %v4020 = vld [vmem:[%s4014 + $0x14] sm:$0xf]
    %v4021 = vld [vmem:[%s4014 + $0x18] sm:$0xf]
    %v4022 = vld [vmem:[%s4014 + $0x1c] sm:$0xf]
    %v4023 = vld [vmem:[%s4014 + $0x20] sm:$0xf]
    %v4024 = vld [vmem:[%s4014 + $0x24] sm:$0xf]
    %v4025 = vld [vmem:[%s4014 + $0x28] sm:$0xf]
    %v4026 = vld [vmem:[%s4014 + $0x2c] sm:$0xf]
    %v4027 = vld [vmem:[%s4014 + $0x30] sm:$0xf]
    %v4028 = vld [vmem:[%s4014 + $0x34] sm:$0xf]
    %v4029 = vld [vmem:[%s4014 + $0x38] sm:$0xf]
    %v4030 = vld [vmem:[%s4014 + $0x3c] sm:$0xf]
    %v4031 = vlaneseq
    %v4032 = vshrl.u32 %v4031, 7
    %v4033 = vsub.s32 0, %v4032
    %v4034 = vrot.slane %v33, %v4033
    %v4051 = vunpack.c.l.b16 %v4015
    %v4052 = vunpack.c.l.b16 %v4016
    %v4053 = vunpack.c.l.b16 %v4017
    %v4054 = vunpack.c.l.b16 %v4018
    %v4055 = vunpack.c.l.b16 %v4019
    %v4056 = vunpack.c.l.b16 %v4020
    %v4057 = vunpack.c.l.b16 %v4021
    %v4058 = vunpack.c.l.b16 %v4022
    %v4059 = vunpack.c.l.b16 %v4023
    %v4060 = vunpack.c.l.b16 %v4024
    %v4061 = vunpack.c.l.b16 %v4025
    %v4062 = vunpack.c.l.b16 %v4026
    %v4063 = vunpack.c.l.b16 %v4027
    %v4064 = vunpack.c.l.b16 %v4028
    %v4065 = vunpack.c.l.b16 %v4029
    %v4066 = vunpack.c.l.b16 %v4030
    %v4067 = vpack.c.b16 %v4052, %v4051
    %v4068 = vpack.c.b16 %v4054, %v4053
    %v4069 = vpack.c.b16 %v4056, %v4055
    %v4070 = vpack.c.b16 %v4058, %v4057
    %v4071 = vpack.c.b16 %v4060, %v4059
    %v4072 = vpack.c.b16 %v4062, %v4061
    %v4073 = vpack.c.b16 %v4064, %v4063
    %v4074 = vpack.c.b16 %v4066, %v4065
    %4083 = vmatprep.subr.bf16.mxu0 0
    %4084 = vmatpush1.bf16.msra.mxu0 %v4067
    %4085 = vmatprep.subr.bf16.mxu0 0
    %4086 = vmatpush1.bf16.msra.mxu0 %v4068
    %4087 = vmatprep.subr.bf16.mxu0 0
    %4088 = vmatpush1.bf16.msra.mxu0 %v4069
    %4089 = vmatprep.subr.bf16.mxu0 0
    %4090 = vmatpush1.bf16.msra.mxu0 %v4070
    %4091 = vmatprep.subr.bf16.mxu0 0
    %4092 = vmatpush1.bf16.msra.mxu0 %v4071
    %4093 = vmatprep.subr.bf16.mxu0 0
    %4094 = vmatpush1.bf16.msra.mxu0 %v4072
    %4095 = vmatprep.subr.bf16.mxu0 0
    %4096 = vmatpush1.bf16.msra.mxu0 %v4073
    %4097 = vmatprep.subr.bf16.mxu0 0
    %4098 = vmatpush1.bf16.msra.mxu0 %v4074
    %4099 = vmatprep.subr.bf16.mxu0 0
    %4100 = vmatpush1.bf16.msra.mxu0 0
    %4101 = vmatprep.subr.bf16.mxu0 0
    %4102 = vmatpush1.bf16.msra.mxu0 0
    %4103 = vmatprep.subr.bf16.mxu0 0
    %4104 = vmatpush1.bf16.msra.mxu0 0
    %4105 = vmatprep.subr.bf16.mxu0 0
    %4106 = vmatpush1.bf16.msra.mxu0 0
    %4107 = vmatprep.subr.bf16.mxu0 0
    %4108 = vmatpush1.bf16.msra.mxu0 0
    %4109 = vmatprep.subr.bf16.mxu0 0
    %4110 = vmatpush1.bf16.msra.mxu0 0
    %4111 = vmatprep.subr.bf16.mxu0 0
    %4112 = vmatpush1.bf16.msra.mxu0 0
    %4113 = vmatprep.subr.bf16.mxu0 0
    %4114 = vmatpush1.bf16.msra.mxu0 0
    %4115 = vmatprep.mubr.bf16.mxu0 0
    %4116 = vmatmul.mubr.bf16.gmra.mrb[0].mxu0 %v4013
    %v4117 = vpop.f32.mrb[0].mxu0
    %v4118 = vadd.f32 %v4034, %v4117
    %v4119 = vpop.f32.mrb[0].mxu0
    %v4120 = vpop.f32.mrb[0].mxu0
    %v4121 = vadd.f32 %v4034, %v4120
    %v4122 = vpop.f32.mrb[0].mxu0
    %4123 = vdwg.mxu0
    %v4124 = vpack.c.bf16 %v4121, %v4118
    %v4125 = vunpack.c.l.bf16 %v4124
    %v4126 = vunpack.c.h.bf16 %v4124
    %4127 = vmatprep.subr.bf16.mxu0 0
    %4128 = vmatpush1.bf16.msra.mxu0 %v450
    %4129 = vmatprep.subr.bf16.mxu0 0
    %4130 = vmatpush1.bf16.msra.mxu0 %v451
    %4131 = vmatprep.subr.bf16.mxu0 0
    %4132 = vmatpush1.bf16.msra.mxu0 %v452
    %4133 = vmatprep.subr.bf16.mxu0 0
    %4134 = vmatpush1.bf16.msra.mxu0 %v453
    %4135 = vmatprep.subr.bf16.mxu0 0
    %4136 = vmatpush1.bf16.msra.mxu0 %v454
    %4137 = vmatprep.subr.bf16.mxu0 0
    %4138 = vmatpush1.bf16.msra.mxu0 %v455
    %4139 = vmatprep.subr.bf16.mxu0 0
    %4140 = vmatpush1.bf16.msra.mxu0 %v456
    %4141 = vmatprep.subr.bf16.mxu0 0
    %4142 = vmatpush1.bf16.msra.mxu0 %v457
    %4143 = vmatprep.subr.bf16.mxu0 0
    %4144 = vmatpush1.bf16.msra.mxu0 0
    %4145 = vmatprep.subr.bf16.mxu0 0
    %4146 = vmatpush1.bf16.msra.mxu0 0
    %4147 = vmatprep.subr.bf16.mxu0 0
    %4148 = vmatpush1.bf16.msra.mxu0 0
    %4149 = vmatprep.subr.bf16.mxu0 0
    %4150 = vmatpush1.bf16.msra.mxu0 0
    %4151 = vmatprep.subr.bf16.mxu0 0
    %4152 = vmatpush1.bf16.msra.mxu0 0
    %4153 = vmatprep.subr.bf16.mxu0 0
    %4154 = vmatpush1.bf16.msra.mxu0 0
    %4155 = vmatprep.subr.bf16.mxu0 0
    %4156 = vmatpush1.bf16.msra.mxu0 0
    %4157 = vmatprep.subr.bf16.mxu0 0
    %4158 = vmatpush1.bf16.msra.mxu0 0
    %4159 = vmatprep.mubr.bf16.mxu0 0
    %4160 = vmatmul.mubr.bf16.gmra.mrb[0].mxu0 %v4013
    %v4161 = vpop.f32.mrb[0].mxu0
    %v4162 = vadd.f32 0.0, %v4161
    %v4163 = vpop.f32.mrb[0].mxu0
    %v4164 = vpop.f32.mrb[0].mxu0
    %v4165 = vadd.f32 0.0, %v4164
    %v4166 = vpop.f32.mrb[0].mxu0
    %4167 = vdwg.mxu0
    %v4168 = vpack.c.bf16 %v4165, %v4162
    %v4170 = vsel %vm733, %v4168, 0
    %4172 = vmatprep.subr.bf16.mxu0 0
    %4173 = vmatpush1.bf16.msra.mxu0 %v570
    %4174 = vmatprep.subr.bf16.mxu0 0
    %4175 = vmatpush1.bf16.msra.mxu0 %v571
    %4176 = vmatprep.subr.bf16.mxu0 0
    %4177 = vmatpush1.bf16.msra.mxu0 0
    %4178 = vmatprep.subr.bf16.mxu0 0
    %4179 = vmatpush1.bf16.msra.mxu0 0
    %4180 = vmatprep.subr.bf16.mxu0 0
    %4181 = vmatpush1.bf16.msra.mxu0 0
    %4182 = vmatprep.subr.bf16.mxu0 0
    %4183 = vmatpush1.bf16.msra.mxu0 0
    %4184 = vmatprep.subr.bf16.mxu0 0
    %4185 = vmatpush1.bf16.msra.mxu0 0
    %4186 = vmatprep.subr.bf16.mxu0 0
    %4187 = vmatpush1.bf16.msra.mxu0 0
    %4188 = vmatprep.subr.bf16.mxu0 0
    %4189 = vmatpush1.bf16.msra.mxu0 0
    %4190 = vmatprep.subr.bf16.mxu0 0
    %4191 = vmatpush1.bf16.msra.mxu0 0
    %4192 = vmatprep.subr.bf16.mxu0 0
    %4193 = vmatpush1.bf16.msra.mxu0 0
    %4194 = vmatprep.subr.bf16.mxu0 0
    %4195 = vmatpush1.bf16.msra.mxu0 0
    %4196 = vmatprep.subr.bf16.mxu0 0
    %4197 = vmatpush1.bf16.msra.mxu0 0
    %4198 = vmatprep.subr.bf16.mxu0 0
    %4199 = vmatpush1.bf16.msra.mxu0 0
    %4200 = vmatprep.subr.bf16.mxu0 0
    %4201 = vmatpush1.bf16.msra.mxu0 0
    %4202 = vmatprep.subr.bf16.mxu0 0
    %4203 = vmatpush1.bf16.msra.mxu0 0
    %4204 = vmatprep.mubr.bf16.mxu0 0
    %4205 = vmatmul.mubr.bf16.gmra.mrb[0].mxu0 %v4170
    %v4206 = vpop.f32.mrb[0].mxu0
    %v4207 = vadd.f32 0.0, %v4206
    %v4208 = vpop.f32.mrb[0].mxu0
    %v4209 = vpop.f32.mrb[0].mxu0
    %v4210 = vadd.f32 0.0, %v4209
    %v4211 = vpop.f32.mrb[0].mxu0
    %4212 = vdwg.mxu0
    %v4213 = vadd.f32 %v4125, %v4207
    %v4214 = vadd.f32 %v4126, %v4210
    %v4215 = vmax.f32 %v4213, 0.0
    %v4216 = vmax.f32 %v4214, 0.0
    %v4217 = vpack.c.bf16 %v4216, %v4215
    %s4218 = scalar_lea.vmem %s1, 1088
    %v4219 = vld [vmem:[%s4218] sm:$0xf]
    %v4220 = vld [vmem:[%s4218 + $0x4] sm:$0xf]
    %v4221 = vld [vmem:[%s4218 + $0x8] sm:$0xf]
    %v4222 = vld [vmem:[%s4218 + $0xc] sm:$0xf]
    %v4223 = vld [vmem:[%s4218 + $0x10] sm:$0xf]
    %v4224 = vld [vmem:[%s4218 + $0x14] sm:$0xf]
    %v4225 = vld [vmem:[%s4218 + $0x18] sm:$0xf]
    %v4226 = vld [vmem:[%s4218 + $0x1c] sm:$0xf]
    %v4227 = vld [vmem:[%s4218 + $0x20] sm:$0xf]
    %v4228 = vld [vmem:[%s4218 + $0x24] sm:$0xf]
    %v4229 = vld [vmem:[%s4218 + $0x28] sm:$0xf]
    %v4230 = vld [vmem:[%s4218 + $0x2c] sm:$0xf]
    %v4231 = vld [vmem:[%s4218 + $0x30] sm:$0xf]
    %v4232 = vld [vmem:[%s4218 + $0x34] sm:$0xf]
    %v4233 = vld [vmem:[%s4218 + $0x38] sm:$0xf]
    %v4234 = vld [vmem:[%s4218 + $0x3c] sm:$0xf]
    %v4235 = vlaneseq
    %v4236 = vshrl.u32 %v4235, 7
    %v4237 = vsub.s32 1, %v4236
    %v4238 = vrot.slane %v33, %v4237
    %v4255 = vunpack.c.l.b16 %v4219
    %v4256 = vunpack.c.l.b16 %v4220
    %v4257 = vunpack.c.l.b16 %v4221
    %v4258 = vunpack.c.l.b16 %v4222
    %v4259 = vunpack.c.l.b16 %v4223
    %v4260 = vunpack.c.l.b16 %v4224
    %v4261 = vunpack.c.l.b16 %v4225
    %v4262 = vunpack.c.l.b16 %v4226
    %v4263 = vunpack.c.l.b16 %v4227
    %v4264 = vunpack.c.l.b16 %v4228
    %v4265 = vunpack.c.l.b16 %v4229
    %v4266 = vunpack.c.l.b16 %v4230
    %v4267 = vunpack.c.l.b16 %v4231
    %v4268 = vunpack.c.l.b16 %v4232
    %v4269 = vunpack.c.l.b16 %v4233
    %v4270 = vunpack.c.l.b16 %v4234
    %v4271 = vpack.c.b16 %v4256, %v4255
    %v4272 = vpack.c.b16 %v4258, %v4257
    %v4273 = vpack.c.b16 %v4260, %v4259
    %v4274 = vpack.c.b16 %v4262, %v4261
    %v4275 = vpack.c.b16 %v4264, %v4263
    %v4276 = vpack.c.b16 %v4266, %v4265
    %v4277 = vpack.c.b16 %v4268, %v4267
    %v4278 = vpack.c.b16 %v4270, %v4269
    %4287 = vmatprep.subr.bf16.mxu0 0
    %4288 = vmatpush1.bf16.msra.mxu0 %v4271
    %4289 = vmatprep.subr.bf16.mxu0 0
    %4290 = vmatpush1.bf16.msra.mxu0 %v4272
    %4291 = vmatprep.subr.bf16.mxu0 0
    %4292 = vmatpush1.bf16.msra.mxu0 %v4273
    %4293 = vmatprep.subr.bf16.mxu0 0
    %4294 = vmatpush1.bf16.msra.mxu0 %v4274
    %4295 = vmatprep.subr.bf16.mxu0 0
    %4296 = vmatpush1.bf16.msra.mxu0 %v4275
    %4297 = vmatprep.subr.bf16.mxu0 0
    %4298 = vmatpush1.bf16.msra.mxu0 %v4276
    %4299 = vmatprep.subr.bf16.mxu0 0
    %4300 = vmatpush1.bf16.msra.mxu0 %v4277
    %4301 = vmatprep.subr.bf16.mxu0 0
    %4302 = vmatpush1.bf16.msra.mxu0 %v4278
    %4303 = vmatprep.subr.bf16.mxu0 0
    %4304 = vmatpush1.bf16.msra.mxu0 0
    %4305 = vmatprep.subr.bf16.mxu0 0
    %4306 = vmatpush1.bf16.msra.mxu0 0
    %4307 = vmatprep.subr.bf16.mxu0 0
    %4308 = vmatpush1.bf16.msra.mxu0 0
    %4309 = vmatprep.subr.bf16.mxu0 0
    %4310 = vmatpush1.bf16.msra.mxu0 0
    %4311 = vmatprep.subr.bf16.mxu0 0
    %4312 = vmatpush1.bf16.msra.mxu0 0
    %4313 = vmatprep.subr.bf16.mxu0 0
    %4314 = vmatpush1.bf16.msra.mxu0 0
    %4315 = vmatprep.subr.bf16.mxu0 0
    %4316 = vmatpush1.bf16.msra.mxu0 0
    %4317 = vmatprep.subr.bf16.mxu0 0
    %4318 = vmatpush1.bf16.msra.mxu0 0
    %4319 = vmatprep.mubr.bf16.mxu0 0
    %4320 = vmatmul.mubr.bf16.gmra.mrb[0].mxu0 %v4217
    %v4321 = vpop.f32.mrb[0].mxu0
    %v4322 = vadd.f32 %v4238, %v4321
    %v4323 = vpop.f32.mrb[0].mxu0
    %v4324 = vpop.f32.mrb[0].mxu0
    %v4325 = vadd.f32 %v4238, %v4324
    %v4326 = vpop.f32.mrb[0].mxu0
    %4327 = vdwg.mxu0
    %v4328 = vpack.c.bf16 %v4325, %v4322
    %v4329 = vunpack.c.l.bf16 %v4328
    %v4330 = vunpack.c.h.bf16 %v4328
    %4331 = vmatprep.subr.bf16.mxu0 0
    %4332 = vmatpush1.bf16.msra.mxu0 %v458
    %4333 = vmatprep.subr.bf16.mxu0 0
    %4334 = vmatpush1.bf16.msra.mxu0 %v459
    %4335 = vmatprep.subr.bf16.mxu0 0
    %4336 = vmatpush1.bf16.msra.mxu0 %v460
    %4337 = vmatprep.subr.bf16.mxu0 0
    %4338 = vmatpush1.bf16.msra.mxu0 %v461
    %4339 = vmatprep.subr.bf16.mxu0 0
    %4340 = vmatpush1.bf16.msra.mxu0 %v462
    %4341 = vmatprep.subr.bf16.mxu0 0
    %4342 = vmatpush1.bf16.msra.mxu0 %v463
    %4343 = vmatprep.subr.bf16.mxu0 0
    %4344 = vmatpush1.bf16.msra.mxu0 %v464
    %4345 = vmatprep.subr.bf16.mxu0 0
    %4346 = vmatpush1.bf16.msra.mxu0 %v465
    %4347 = vmatprep.subr.bf16.mxu0 0
    %4348 = vmatpush1.bf16.msra.mxu0 0
    %4349 = vmatprep.subr.bf16.mxu0 0
    %4350 = vmatpush1.bf16.msra.mxu0 0
    %4351 = vmatprep.subr.bf16.mxu0 0
    %4352 = vmatpush1.bf16.msra.mxu0 0
    %4353 = vmatprep.subr.bf16.mxu0 0
    %4354 = vmatpush1.bf16.msra.mxu0 0
    %4355 = vmatprep.subr.bf16.mxu0 0
    %4356 = vmatpush1.bf16.msra.mxu0 0
    %4357 = vmatprep.subr.bf16.mxu0 0
    %4358 = vmatpush1.bf16.msra.mxu0 0
    %4359 = vmatprep.subr.bf16.mxu0 0
    %4360 = vmatpush1.bf16.msra.mxu0 0
    %4361 = vmatprep.subr.bf16.mxu0 0
    %4362 = vmatpush1.bf16.msra.mxu0 0
    %4363 = vmatprep.mubr.bf16.mxu0 0
    %4364 = vmatmul.mubr.bf16.gmra.mrb[0].mxu0 %v4217
    %v4365 = vpop.f32.mrb[0].mxu0
    %v4366 = vadd.f32 0.0, %v4365
    %v4367 = vpop.f32.mrb[0].mxu0
    %v4368 = vpop.f32.mrb[0].mxu0
    %v4369 = vadd.f32 0.0, %v4368
    %v4370 = vpop.f32.mrb[0].mxu0
    %4371 = vdwg.mxu0
    %v4372 = vpack.c.bf16 %v4369, %v4366
    %v4374 = vsel %vm733, %v4372, 0
    %4376 = vmatprep.subr.bf16.mxu0 0
    %4377 = vmatpush1.bf16.msra.mxu0 %v572
    %4378 = vmatprep.subr.bf16.mxu0 0
    %4379 = vmatpush1.bf16.msra.mxu0 %v573
    %4380 = vmatprep.subr.bf16.mxu0 0
    %4381 = vmatpush1.bf16.msra.mxu0 0
    %4382 = vmatprep.subr.bf16.mxu0 0
    %4383 = vmatpush1.bf16.msra.mxu0 0
    %4384 = vmatprep.subr.bf16.mxu0 0
    %4385 = vmatpush1.bf16.msra.mxu0 0
    %4386 = vmatprep.subr.bf16.mxu0 0
    %4387 = vmatpush1.bf16.msra.mxu0 0
    %4388 = vmatprep.subr.bf16.mxu0 0
    %4389 = vmatpush1.bf16.msra.mxu0 0
    %4390 = vmatprep.subr.bf16.mxu0 0
    %4391 = vmatpush1.bf16.msra.mxu0 0
    %4392 = vmatprep.subr.bf16.mxu0 0
    %4393 = vmatpush1.bf16.msra.mxu0 0
    %4394 = vmatprep.subr.bf16.mxu0 0
    %4395 = vmatpush1.bf16.msra.mxu0 0
    %4396 = vmatprep.subr.bf16.mxu0 0
    %4397 = vmatpush1.bf16.msra.mxu0 0
    %4398 = vmatprep.subr.bf16.mxu0 0
    %4399 = vmatpush1.bf16.msra.mxu0 0
    %4400 = vmatprep.subr.bf16.mxu0 0
    %4401 = vmatpush1.bf16.msra.mxu0 0
    %4402 = vmatprep.subr.bf16.mxu0 0
    %4403 = vmatpush1.bf16.msra.mxu0 0
    %4404 = vmatprep.subr.bf16.mxu0 0
    %4405 = vmatpush1.bf16.msra.mxu0 0
    %4406 = vmatprep.subr.bf16.mxu0 0
    %4407 = vmatpush1.bf16.msra.mxu0 0
    %4408 = vmatprep.mubr.bf16.mxu0 0
    %4409 = vmatmul.mubr.bf16.gmra.mrb[0].mxu0 %v4374
    %v4410 = vpop.f32.mrb[0].mxu0
    %v4411 = vadd.f32 0.0, %v4410
    %v4412 = vpop.f32.mrb[0].mxu0
    %v4413 = vpop.f32.mrb[0].mxu0
    %v4414 = vadd.f32 0.0, %v4413
    %v4415 = vpop.f32.mrb[0].mxu0
    %4416 = vdwg.mxu0
    %v4417 = vadd.f32 %v4329, %v4411
    %v4418 = vadd.f32 %v4330, %v4414
    %v4419 = vadd.f32 %v4417, %v3807
    %v4420 = vadd.f32 %v4418, %v3808
    %4421 = vst [vmem:[#allocation2] sm:$0xff] %v4419
    %4422 = vst [vmem:[#allocation2 + $0x8] sm:$0xff] %v4420
    // Predicated region
    $region30: #{tpu_custom_call.1} parent=1 // pred_check
      _
    $region31: #{tpu_custom_call.1} parent=1 // pred_check_branch
      %4424 = sbr.rel (0) target = $region33
    $region32: #{tpu_custom_call.1} parent=1 // pred_region
      %s4426 = ssub.s32 256, 256
      %4427 = vsyncadd [#allocation3], %s4426
      %s4428 = sshll.u32 [#allocation2], 4
      %s4429 = int_to_ptr.vmem [resolvable:$true] %s4428
      %4434 = dma.vmem_to_hbm [thread:$0]  %s4429, 256, %s7, [#allocation3], 128, 128, 8
    $region33: #{tpu_custom_call.1} parent=1 // pred_fallthru
      _
    // Predicated region
    $region34: #{tpu_custom_call.1} parent=1 // pred_check
      _
    $region35: #{tpu_custom_call.1} parent=1 // pred_check_branch
      %4436 = sbr.rel (0) target = $region37
    $region36: #{tpu_custom_call.1} parent=1 // pred_region
      %4437 = dma.done [#allocation3], 256
    $region37: #{tpu_custom_call.1} parent=1 // pred_fallthru
      _
    %4438 = vsyncpa [#allocation3], 1

</llo_original>
